<compile_context>
chip_gen: v7x
topology: tpu7x:2x2x1
jax: 0.10.0
libtpu: 0.0.40
codegen_flags: <defaults>
</compile_context>

<pallas_src>
from functools import partial

import jax
import jax.numpy as jnp
from jax.experimental import pallas as pl
from jax.experimental.pallas import tpu as pltpu


# ----------------------------------------------------------------------------
# synthetic model config (tiny EfficientNet-like, mode 0 GenODIN head)
# ----------------------------------------------------------------------------
STEM_COUT = 8
HEAD_COUT = 32
BLOCKS_CFG = [
    # MBConv: expand 1x1 -> BN+swish -> depthwise kxk -> BN+swish -> SE ->
    #         project 1x1 -> BN -> (skip if stride==1 and in==out)
    dict(in_f=8,  out_f=8,  expand=2, k=3, s=1, se_ratio=0.25),
    dict(in_f=8,  out_f=16, expand=2, k=3, s=2, se_ratio=0.25),
]
BN2D_EPS = 1e-3   # global_params.batch_norm_epsilon
BN1D_EPS = 1e-5   # torch default for BatchNorm1d

# one grid axis (batch); each step handles one image => distinct output blocks,
# safe to shard across v7x's two TensorCores, harmless on v5e/v6e.
_PARALLEL = pltpu.CompilerParams(dimension_semantics=("parallel",))


def _sigmoid(x):
    # 1/(1+exp(-x)): exp + approx reciprocal both go to the EUP slot.
    return pl.reciprocal(1.0 + jnp.exp(-x), approx=True)


# ----------------------------------------------------------------------------
# in-kernel building blocks (traced inside the Pallas kernels)
# ----------------------------------------------------------------------------
def _mm_bn(x_bf16, w_ref, s_ref, t_ref, swish):
    """x(bf16) @ W(bf16) on MXU with f32 acc -> folded BN -> optional swish."""
    y = jnp.dot(x_bf16, w_ref[...], preferred_element_type=jnp.float32)
    y = y * s_ref[...] + t_ref[...]
    if swish:
        y = y * _sigmoid(y)
    return y


def _dw_bn_swish(p, wdw_ref, s_ref, t_ref):
    """Depthwise conv as k*k unrolled VPU MACs over (hw, C), then BN + swish.

    p: (k*k, hw, C) bf16 patches, wdw_ref: (k*k, C) f32 per-channel taps.
    """
    kk = p.shape[0]
    wdw = wdw_ref[...]
    acc = p[0].astype(jnp.float32) * wdw[0:1, :]
    for k in range(1, kk):                       # tiny static tap unroll
        acc = acc + p[k].astype(jnp.float32) * wdw[k:k + 1, :]
    y = acc * s_ref[...] + t_ref[...]
    return y * _sigmoid(y)


def _se_project(y, wr_ref, br_ref, we_ref, be_ref, wp_ref, s2_ref, t2_ref):
    """Squeeze-excite (tile-local pool + broadcast gate) then 1x1 project + BN."""
    pooled = jnp.mean(y, axis=0, keepdims=True)                       # (1, C)
    s = jnp.dot(pooled.astype(jnp.bfloat16), wr_ref[...],
                preferred_element_type=jnp.float32) + br_ref[...]
    s = s * _sigmoid(s)                                               # swish
    s = jnp.dot(s.astype(jnp.bfloat16), we_ref[...],
                preferred_element_type=jnp.float32) + be_ref[...]
    y = y * _sigmoid(s)                                               # gate broadcast
    z = jnp.dot(y.astype(jnp.bfloat16), wp_ref[...],
                preferred_element_type=jnp.float32)
    return z * s2_ref[...] + t2_ref[...]                              # BN, no act


# ----------------------------------------------------------------------------
# Pallas kernels (3 fused segments, each with grid=(N,) over the batch)
# ----------------------------------------------------------------------------
def _stem_expand0_kernel(p_ref, ws_ref, ss_ref, ts_ref,
                         wx_ref, sx_ref, tx_ref,
                         stem_ref, out_ref):
    # stem 3x3/s2 conv (im2col matmul) + BN + swish      (one image per step)
    y = _mm_bn(p_ref[0], ws_ref, ss_ref, ts_ref, swish=True)          # (hw, 8)
    stem_ref[0] = y.astype(stem_ref.dtype)        # kept for block0 identity skip
    # block0 expand 1x1 + BN + swish
    out_ref[0] = _mm_bn(y.astype(jnp.bfloat16), wx_ref, sx_ref, tx_ref,
                        swish=True).astype(out_ref.dtype)


def _block0_expand1_kernel(p_ref, wdw_ref, s1_ref, t1_ref,
                           wr_ref, br_ref, we_ref, be_ref,
                           wp_ref, s2_ref, t2_ref, res_ref,
                           wx_ref, sx_ref, tx_ref,
                           out_ref):
    # block0: depthwise 3x3/s1 + BN + swish + SE + project + BN + identity skip
    y = _dw_bn_swish(p_ref[0], wdw_ref, s1_ref, t1_ref)               # (hw, 16)
    z = _se_project(y, wr_ref, br_ref, we_ref, be_ref,
                    wp_ref, s2_ref, t2_ref)                           # (hw, 8)
    z = z + res_ref[0].astype(jnp.float32)                            # identity skip
    # block1 expand 1x1 + BN + swish (fused tail of this segment)
    out_ref[0] = _mm_bn(z.astype(jnp.bfloat16), wx_ref, sx_ref, tx_ref,
                        swish=True).astype(out_ref.dtype)


def _block1_head_kernel(p_ref, wdw_ref, s1_ref, t1_ref,
                        wr_ref, br_ref, we_ref, be_ref,
                        wp_ref, s2_ref, t2_ref,
                        wh_ref, hs_ref, ht_ref,
                        wcat_ref, bcat_ref, scat_ref, tcat_ref,
                        out_ref, hout_ref, gout_ref, *, out_classes):
    # block1: depthwise 3x3/s2 + BN + swish + SE + project + BN (no skip, s=2)
    y = _dw_bn_swish(p_ref[0], wdw_ref, s1_ref, t1_ref)               # (hw, 32)
    z = _se_project(y, wr_ref, br_ref, we_ref, be_ref,
                    wp_ref, s2_ref, t2_ref)                           # (hw, 16)
    # conv head 1x1 + BN + swish, then global average pool (fused)
    c = _mm_bn(z.astype(jnp.bfloat16), wh_ref, hs_ref, ht_ref, swish=True)
    feat = jnp.mean(c, axis=0, keepdims=True)                         # (1, 32)
    # GenODIN head (mode 0), fused: [W_nom | W_den] in one MXU pass, BN1d folded
    hg = jnp.dot(feat.astype(jnp.bfloat16), wcat_ref[...],
                 preferred_element_type=jnp.float32) + bcat_ref[...]
    hg = hg * scat_ref[...] + tcat_ref[...]                           # (1, cls+1)
    h = hg[:, :out_classes]
    gl = hg[:, out_classes:]
    inv_sig = 1.0 + jnp.exp(-gl)                  # 1 / sigmoid(gl)
    out_ref[0] = h * inv_sig                      # h / sigmoid(gl), no divide
    hout_ref[0] = h
    gout_ref[0] = pl.reciprocal(inv_sig, approx=True)   # g = sigmoid(gl)


# ----------------------------------------------------------------------------
# XLA glue: TF-"SAME" padded patch extraction (Conv2dStaticSamePadding)
# ----------------------------------------------------------------------------
def _same_pad(size, k, s):
    out = -(-size // s)                       # ceil(size / s)
    pad = max((out - 1) * s + k - size, 0)
    return pad // 2, pad - pad // 2, out


def extract_patches(x, k, s):
    """x: (N,H,W,C) -> TF-SAME patches (N, k*k, Ho*Wo, C), plus (Ho, Wo)."""
    N, H, W, C = x.shape
    ph0, ph1, Ho = _same_pad(H, k, s)
    pw0, pw1, Wo = _same_pad(W, k, s)
    xp = jnp.pad(x, ((0, 0), (ph0, ph1), (pw0, pw1), (0, 0)))
    taps = []
    for kh in range(k):
        for kw in range(k):
            taps.append(xp[:, kh:kh + (Ho - 1) * s + 1:s,
                           kw:kw + (Wo - 1) * s + 1:s, :])
    p = jnp.stack(taps, axis=1)               # (N, k*k, Ho, Wo, C)
    return p.reshape(N, k * k, Ho * Wo, C), Ho, Wo


def _full_spec(shape):
    """Untiled (full-block) BlockSpec: same block at every grid step -> one DMA."""
    return pl.BlockSpec(shape, lambda i: (0,) * len(shape))


# ----------------------------------------------------------------------------
# parameter init (deterministic, synthetic — shapes implied by the module)
# ----------------------------------------------------------------------------
def init_params(key, out_classes=10):
    keys = iter(jax.random.split(key, 64))

    def w(shape, scale=0.1):
        return jax.random.normal(next(keys), shape, jnp.float32) * scale

    def bn(c, eps):
        # default torch init: gamma=1, beta=0, running_mean=0, running_var=1
        gamma = jnp.ones((c,), jnp.float32)
        beta = jnp.zeros((c,), jnp.float32)
        rm = jnp.zeros((c,), jnp.float32)
        rv = jnp.ones((c,), jnp.float32)
        scale = gamma / jnp.sqrt(rv + eps)
        shift = beta - rm * scale
        return scale.reshape(1, c), shift.reshape(1, c)

    p = {}
    p['stem_w'] = w((3 * 3 * 3, STEM_COUT))                 # 3x3 s2 conv (im2col)
    p['stem_bn_scale'], p['stem_bn_shift'] = bn(STEM_COUT, BN2D_EPS)

    p['blocks'] = []
    for cfg in BLOCKS_CFG:
        oup = cfg['in_f'] * cfg['expand']
        sq = max(1, int(cfg['in_f'] * cfg['se_ratio']))
        bp = {}
        if cfg['expand'] != 1:
            bp['w_expand'] = w((cfg['in_f'], oup))
            bp['bn0_scale'], bp['bn0_shift'] = bn(oup, BN2D_EPS)
        bp['w_dw'] = w((cfg['k'] * cfg['k'], oup))           # depthwise taps
        bp['bn1_scale'], bp['bn1_shift'] = bn(oup, BN2D_EPS)
        bp['w_se_red'] = w((oup, sq))
        bp['b_se_red'] = w((sq,)).reshape(1, sq)
        bp['w_se_exp'] = w((sq, oup))
        bp['b_se_exp'] = w((oup,)).reshape(1, oup)
        bp['w_proj'] = w((oup, cfg['out_f']))
        bp['bn2_scale'], bp['bn2_shift'] = bn(cfg['out_f'], BN2D_EPS)
        p['blocks'].append(bp)

    p['head_w'] = w((BLOCKS_CFG[-1]['out_f'], HEAD_COUT))    # 1x1 conv head
    p['head_bn_scale'], p['head_bn_shift'] = bn(HEAD_COUT, BN2D_EPS)

    p['w_nom'] = w((HEAD_COUT, out_classes))                 # _fc_nominator (mode 0)
    p['b_nom'] = w((out_classes,)).reshape(1, out_classes)
    p['w_den'] = w((HEAD_COUT, 1))                           # _fc_denominator
    p['b_den'] = w((1,)).reshape(1, 1)
    sc, sh = bn(1, BN1D_EPS)                                 # _denominator_batch_norm
    p['bn1d_scale'], p['bn1d_shift'] = sc, sh
    return p


# ----------------------------------------------------------------------------
# forward pass (eval mode) — 3 fused, batch-gridded pallas_calls + patch glue
# ----------------------------------------------------------------------------
def gen_odin_forward(params, x_nchw):
    bf16 = jnp.bfloat16
    x = jnp.transpose(x_nchw.astype(jnp.float32), (0, 2, 3, 1))       # NCHW -> NHWC
    N = x.shape[0]
    cfg0, cfg1 = BLOCKS_CFG
    b0, b1 = params['blocks']
    oup0 = cfg0['in_f'] * cfg0['expand']          # 16
    oup1 = cfg1['in_f'] * cfg1['expand']          # 32
    out_f0, out_f1 = cfg0['out_f'], cfg1['out_f']
    sq0 = b0['w_se_red'].shape[1]
    sq1 = b1['w_se_red'].shape[1]
    out_classes = params['w_nom'].shape[1]

    # ---- stem im2col (XLA glue; stored bf16 in HBM) --------------------------
    p, H, W = extract_patches(x, 3, 2)                                 # (N,9,hw,3)
    hw = H * W
    stem_patches = jnp.transpose(p, (0, 2, 1, 3)).reshape(
        N, hw, 9 * 3).astype(bf16)

    # ---- kernel A: stem conv+BN+swish + block0 expand+BN+swish ---------------
    stem_out, y = pl.pallas_call(
        _stem_expand0_kernel,
        grid=(N,),
        in_specs=[
            pl.BlockSpec((1, hw, 9 * 3), lambda i: (i, 0, 0)),
            _full_spec((9 * 3, STEM_COUT)),
            _full_spec((1, STEM_COUT)), _full_spec((1, STEM_COUT)),
            _full_spec((STEM_COUT, oup0)),
            _full_spec((1, oup0)), _full_spec((1, oup0)),
        ],
        out_specs=(pl.BlockSpec((1, hw, STEM_COUT), lambda i: (i, 0, 0)),
                   pl.BlockSpec((1, hw, oup0), lambda i: (i, 0, 0))),
        out_shape=(jax.ShapeDtypeStruct((N, hw, STEM_COUT), bf16),
                   jax.ShapeDtypeStruct((N, hw, oup0), bf16)),
        compiler_params=_PARALLEL,
    )(stem_patches,
      params['stem_w'].astype(bf16),
      params['stem_bn_scale'], params['stem_bn_shift'],
      b0['w_expand'].astype(bf16),
      b0['bn0_scale'], b0['bn0_shift'])

    # ---- block0 depthwise patches (stride 1; bf16) ---------------------------
    p0, H, W = extract_patches(y.reshape(N, H, W, oup0), cfg0['k'], cfg0['s'])
    hw0 = H * W

    # ---- kernel B: block0 dw+BN+swish+SE+project+BN+skip + block1 expand -----
    y1 = pl.pallas_call(
        _block0_expand1_kernel,
        grid=(N,),
        in_specs=[
            pl.BlockSpec((1, 9, hw0, oup0), lambda i: (i, 0, 0, 0)),
            _full_spec((9, oup0)),
            _full_spec((1, oup0)), _full_spec((1, oup0)),
            _full_spec((oup0, sq0)), _full_spec((1, sq0)),
            _full_spec((sq0, oup0)), _full_spec((1, oup0)),
            _full_spec((oup0, out_f0)),
            _full_spec((1, out_f0)), _full_spec((1, out_f0)),
            pl.BlockSpec((1, hw0, STEM_COUT), lambda i: (i, 0, 0)),
            _full_spec((out_f0, oup1)),
            _full_spec((1, oup1)), _full_spec((1, oup1)),
        ],
        out_specs=pl.BlockSpec((1, hw0, oup1), lambda i: (i, 0, 0)),
        out_shape=jax.ShapeDtypeStruct((N, hw0, oup1), bf16),
        compiler_params=_PARALLEL,
    )(p0, b0['w_dw'], b0['bn1_scale'], b0['bn1_shift'],
      b0['w_se_red'].astype(bf16), b0['b_se_red'],
      b0['w_se_exp'].astype(bf16), b0['b_se_exp'],
      b0['w_proj'].astype(bf16), b0['bn2_scale'], b0['bn2_shift'],
      stem_out,
      b1['w_expand'].astype(bf16), b1['bn0_scale'], b1['bn0_shift'])

    # ---- block1 depthwise patches (stride 2; bf16) ---------------------------
    p1, H, W = extract_patches(y1.reshape(N, H, W, oup1), cfg1['k'], cfg1['s'])
    hw1 = H * W

    # ---- fused GenODIN head params: [W_nom | W_den], BN1d folded -------------
    w_cat = jnp.concatenate([params['w_nom'], params['w_den']], axis=1).astype(bf16)
    b_cat = jnp.concatenate([params['b_nom'], params['b_den']], axis=1)
    s_cat = jnp.concatenate([jnp.ones((1, out_classes), jnp.float32),
                             params['bn1d_scale']], axis=1)
    t_cat = jnp.concatenate([jnp.zeros((1, out_classes), jnp.float32),
                             params['bn1d_shift']], axis=1)

    # ---- kernel C: block1 dw+SE+project + conv head + pool + GenODIN head ----
    out3, h3, g3 = pl.pallas_call(
        partial(_block1_head_kernel, out_classes=out_classes),
        grid=(N,),
        in_specs=[
            pl.BlockSpec((1, 9, hw1, oup1), lambda i: (i, 0, 0, 0)),
            _full_spec((9, oup1)),
            _full_spec((1, oup1)), _full_spec((1, oup1)),
            _full_spec((oup1, sq1)), _full_spec((1, sq1)),
            _full_spec((sq1, oup1)), _full_spec((1, oup1)),
            _full_spec((oup1, out_f1)),
            _full_spec((1, out_f1)), _full_spec((1, out_f1)),
            _full_spec((out_f1, HEAD_COUT)),
            _full_spec((1, HEAD_COUT)), _full_spec((1, HEAD_COUT)),
            _full_spec((HEAD_COUT, out_classes + 1)),
            _full_spec((1, out_classes + 1)),
            _full_spec((1, out_classes + 1)), _full_spec((1, out_classes + 1)),
        ],
        out_specs=(pl.BlockSpec((1, 1, out_classes), lambda i: (i, 0, 0)),
                   pl.BlockSpec((1, 1, out_classes), lambda i: (i, 0, 0)),
                   pl.BlockSpec((1, 1, 1), lambda i: (i, 0, 0))),
        out_shape=(jax.ShapeDtypeStruct((N, 1, out_classes), jnp.float32),
                   jax.ShapeDtypeStruct((N, 1, out_classes), jnp.float32),
                   jax.ShapeDtypeStruct((N, 1, 1), jnp.float32)),
        compiler_params=_PARALLEL,
    )(p1, b1['w_dw'], b1['bn1_scale'], b1['bn1_shift'],
      b1['w_se_red'].astype(bf16), b1['b_se_red'],
      b1['w_se_exp'].astype(bf16), b1['b_se_exp'],
      b1['w_proj'].astype(bf16), b1['bn2_scale'], b1['bn2_shift'],
      params['head_w'].astype(bf16),
      params['head_bn_scale'], params['head_bn_shift'],
      w_cat, b_cat, s_cat, t_cat)

    # _dropout(0.5) is identity in eval mode.
    return (out3.reshape(N, out_classes),
            h3.reshape(N, out_classes),
            g3.reshape(N, 1))


# ----------------------------------------------------------------------------
if __name__ == "__main__":
    key = jax.random.PRNGKey(0)
    pkey, xkey = jax.random.split(key)

    params = init_params(pkey, out_classes=10)
    # input: NCHW, batch=2, channels=3 (stem expects RGB), spatial=16x16
    x = jax.random.normal(xkey, (2, 3, 16, 16), jnp.float32)

    fwd = jax.jit(gen_odin_forward)
    out, h, g = fwd(params, x)
    jax.block_until_ready((out, h, g))

    assert out.shape == (2, 10) and h.shape == (2, 10) and g.shape == (2, 1)
    assert bool(jnp.all(jnp.isfinite(out))) and bool(jnp.all(jnp.isfinite(g)))
    print("KERNEL_OK")
</pallas_src>

<mosaic_0001>
module attributes {stable_mosaic.version = 11 : i64} {
  func.func @_stem_expand0_kernel(%arg0: i32, %arg1: memref<1x64x27xbf16, #tpu.memory_space<vmem>>, %arg2: memref<27x8xbf16, #tpu.memory_space<vmem>>, %arg3: memref<1x8xf32, #tpu.memory_space<vmem>>, %arg4: memref<1x8xf32, #tpu.memory_space<vmem>>, %arg5: memref<8x16xbf16, #tpu.memory_space<vmem>>, %arg6: memref<1x16xf32, #tpu.memory_space<vmem>>, %arg7: memref<1x16xf32, #tpu.memory_space<vmem>>, %arg8: memref<1x64x8xbf16, #tpu.memory_space<vmem>>, %arg9: memref<1x64x16xbf16, #tpu.memory_space<vmem>>) attributes {dimension_semantics = [#tpu.dimension_semantics<parallel>], iteration_bounds = array<i64: 2>, scalar_prefetch = 0 : i64, scratch_operands = 0 : i64, tpu.core_type = #tpu.core_type<tc>, window_params = [{transform_indices = @transform_0, window_bounds = array<i64: 1, 64, 27>}, {pipeline_mode = #tpu.pipeline_mode<synchronous>, transform_indices = @transform_1, window_bounds = array<i64: 27, 8>}, {pipeline_mode = #tpu.pipeline_mode<synchronous>, transform_indices = @transform_2, window_bounds = array<i64: 1, 8>}, {pipeline_mode = #tpu.pipeline_mode<synchronous>, transform_indices = @transform_3, window_bounds = array<i64: 1, 8>}, {pipeline_mode = #tpu.pipeline_mode<synchronous>, transform_indices = @transform_4, window_bounds = array<i64: 8, 16>}, {pipeline_mode = #tpu.pipeline_mode<synchronous>, transform_indices = @transform_5, window_bounds = array<i64: 1, 16>}, {pipeline_mode = #tpu.pipeline_mode<synchronous>, transform_indices = @transform_6, window_bounds = array<i64: 1, 16>}, {transform_indices = @transform_7, window_bounds = array<i64: 1, 64, 8>}, {transform_indices = @transform_8, window_bounds = array<i64: 1, 64, 16>}]} {
    %c0 = arith.constant 0 : index
    %c0_0 = arith.constant 0 : index
    %c0_1 = arith.constant 0 : index
    %0 = vector.load %arg1[%c0, %c0_0, %c0_1] : memref<1x64x27xbf16, #tpu.memory_space<vmem>>, vector<1x64x27xbf16>
    %1 = vector.shape_cast %0 : vector<1x64x27xbf16> to vector<64x27xbf16>
    %c0_2 = arith.constant 0 : index
    %c0_3 = arith.constant 0 : index
    %2 = vector.load %arg2[%c0_2, %c0_3] : memref<27x8xbf16, #tpu.memory_space<vmem>>, vector<27x8xbf16>
    %cst = arith.constant dense<0.000000e+00> : vector<64x8xf32>
    %3 = tpu.matmul %1, %2, %cst {dimension_numbers = #tpu.dot_dimension_numbers<[1], [0], [0], [1], [0, 0, 1, 1], [], []>} : vector<64x27xbf16>, vector<27x8xbf16>, vector<64x8xf32> -> vector<64x8xf32>
    %c0_4 = arith.constant 0 : index
    %c0_5 = arith.constant 0 : index
    %4 = vector.load %arg3[%c0_4, %c0_5] : memref<1x8xf32, #tpu.memory_space<vmem>>, vector<1x8xf32>
    %5 = vector.broadcast %4 : vector<1x8xf32> to vector<64x8xf32>
    %6 = arith.mulf %3, %5 : vector<64x8xf32>
    %c0_6 = arith.constant 0 : index
    %c0_7 = arith.constant 0 : index
    %7 = vector.load %arg4[%c0_6, %c0_7] : memref<1x8xf32, #tpu.memory_space<vmem>>, vector<1x8xf32>
    %8 = vector.broadcast %7 : vector<1x8xf32> to vector<64x8xf32>
    %9 = arith.addf %6, %8 : vector<64x8xf32>
    %cst_8 = arith.constant 0.000000e+00 : f32
    %10 = vector.broadcast %cst_8 : f32 to vector<64x8xf32>
    %11 = arith.subf %10, %9 : vector<64x8xf32>
    %12 = math.exp %11 : vector<64x8xf32>
    %cst_9 = arith.constant 1.000000e+00 : f32
    %13 = vector.broadcast %cst_9 : f32 to vector<64x8xf32>
    %14 = arith.addf %13, %12 : vector<64x8xf32>
    %15 = tpu.reciprocal %14 {approx = true} : vector<64x8xf32> -> vector<64x8xf32>
    %16 = arith.mulf %9, %15 : vector<64x8xf32>
    %17 = arith.truncf %16 : vector<64x8xf32> to vector<64x8xbf16>
    %c0_10 = arith.constant 0 : index
    %c0_11 = arith.constant 0 : index
    %c0_12 = arith.constant 0 : index
    %18 = vector.load %arg8[%c0_10, %c0_11, %c0_12] : memref<1x64x8xbf16, #tpu.memory_space<vmem>>, vector<1x64x8xbf16>
    %19 = vector.shape_cast %18 : vector<1x64x8xbf16> to vector<64x8xbf16>
    %20 = vector.shape_cast %17 : vector<64x8xbf16> to vector<1x64x8xbf16>
    tpu.vector_store %arg8[%c0_10, %c0_11, %c0_12], %20 {strides = array<i32>} : memref<1x64x8xbf16, #tpu.memory_space<vmem>>, vector<1x64x8xbf16>,
    %21 = arith.truncf %16 : vector<64x8xf32> to vector<64x8xbf16>
    %c0_13 = arith.constant 0 : index
    %c0_14 = arith.constant 0 : index
    %22 = vector.load %arg5[%c0_13, %c0_14] : memref<8x16xbf16, #tpu.memory_space<vmem>>, vector<8x16xbf16>
    %cst_15 = arith.constant dense<0.000000e+00> : vector<64x16xf32>
    %23 = tpu.matmul %21, %22, %cst_15 {dimension_numbers = #tpu.dot_dimension_numbers<[1], [0], [0], [1], [0, 0, 1, 1], [], []>} : vector<64x8xbf16>, vector<8x16xbf16>, vector<64x16xf32> -> vector<64x16xf32>
    %c0_16 = arith.constant 0 : index
    %c0_17 = arith.constant 0 : index
    %24 = vector.load %arg6[%c0_16, %c0_17] : memref<1x16xf32, #tpu.memory_space<vmem>>, vector<1x16xf32>
    %25 = vector.broadcast %24 : vector<1x16xf32> to vector<64x16xf32>
    %26 = arith.mulf %23, %25 : vector<64x16xf32>
    %c0_18 = arith.constant 0 : index
    %c0_19 = arith.constant 0 : index
    %27 = vector.load %arg7[%c0_18, %c0_19] : memref<1x16xf32, #tpu.memory_space<vmem>>, vector<1x16xf32>
    %28 = vector.broadcast %27 : vector<1x16xf32> to vector<64x16xf32>
    %29 = arith.addf %26, %28 : vector<64x16xf32>
    %cst_20 = arith.constant 0.000000e+00 : f32
    %30 = vector.broadcast %cst_20 : f32 to vector<64x16xf32>
    %31 = arith.subf %30, %29 : vector<64x16xf32>
    %32 = math.exp %31 : vector<64x16xf32>
    %cst_21 = arith.constant 1.000000e+00 : f32
    %33 = vector.broadcast %cst_21 : f32 to vector<64x16xf32>
    %34 = arith.addf %33, %32 : vector<64x16xf32>
    %35 = tpu.reciprocal %34 {approx = true} : vector<64x16xf32> -> vector<64x16xf32>
    %36 = arith.mulf %29, %35 : vector<64x16xf32>
    %37 = arith.truncf %36 : vector<64x16xf32> to vector<64x16xbf16>
    %c0_22 = arith.constant 0 : index
    %c0_23 = arith.constant 0 : index
    %c0_24 = arith.constant 0 : index
    %38 = vector.load %arg9[%c0_22, %c0_23, %c0_24] : memref<1x64x16xbf16, #tpu.memory_space<vmem>>, vector<1x64x16xbf16>
    %39 = vector.shape_cast %38 : vector<1x64x16xbf16> to vector<64x16xbf16>
    %40 = vector.shape_cast %37 : vector<64x16xbf16> to vector<1x64x16xbf16>
    tpu.vector_store %arg9[%c0_22, %c0_23, %c0_24], %40 {strides = array<i32>} : memref<1x64x16xbf16, #tpu.memory_space<vmem>>, vector<1x64x16xbf16>,
    return
  }
  func.func @transform_0(%arg0: i32) -> (i32, i32, i32) {
    %c0_i32 = arith.constant 0 : i32
    %c0_i32_0 = arith.constant 0 : i32
    %c0_i32_1 = arith.constant 0 : i32
    return %arg0, %c0_i32, %c0_i32_0 : i32, i32, i32
  }
  func.func @transform_1(%arg0: i32) -> (i32, i32) {
    %c0_i32 = arith.constant 0 : i32
    %c0_i32_0 = arith.constant 0 : i32
    %c0_i32_1 = arith.constant 0 : i32
    return %c0_i32, %c0_i32_0 : i32, i32
  }
  func.func @transform_2(%arg0: i32) -> (i32, i32) {
    %c0_i32 = arith.constant 0 : i32
    %c0_i32_0 = arith.constant 0 : i32
    %c0_i32_1 = arith.constant 0 : i32
    return %c0_i32, %c0_i32_0 : i32, i32
  }
  func.func @transform_3(%arg0: i32) -> (i32, i32) {
    %c0_i32 = arith.constant 0 : i32
    %c0_i32_0 = arith.constant 0 : i32
    %c0_i32_1 = arith.constant 0 : i32
    return %c0_i32, %c0_i32_0 : i32, i32
  }
  func.func @transform_4(%arg0: i32) -> (i32, i32) {
    %c0_i32 = arith.constant 0 : i32
    %c0_i32_0 = arith.constant 0 : i32
    %c0_i32_1 = arith.constant 0 : i32
    return %c0_i32, %c0_i32_0 : i32, i32
  }
  func.func @transform_5(%arg0: i32) -> (i32, i32) {
    %c0_i32 = arith.constant 0 : i32
    %c0_i32_0 = arith.constant 0 : i32
    %c0_i32_1 = arith.constant 0 : i32
    return %c0_i32, %c0_i32_0 : i32, i32
  }
  func.func @transform_6(%arg0: i32) -> (i32, i32) {
    %c0_i32 = arith.constant 0 : i32
    %c0_i32_0 = arith.constant 0 : i32
    %c0_i32_1 = arith.constant 0 : i32
    return %c0_i32, %c0_i32_0 : i32, i32
  }
  func.func @transform_7(%arg0: i32) -> (i32, i32, i32) {
    %c0_i32 = arith.constant 0 : i32
    %c0_i32_0 = arith.constant 0 : i32
    %c0_i32_1 = arith.constant 0 : i32
    return %arg0, %c0_i32, %c0_i32_0 : i32, i32, i32
  }
  func.func @transform_8(%arg0: i32) -> (i32, i32, i32) {
    %c0_i32 = arith.constant 0 : i32
    %c0_i32_0 = arith.constant 0 : i32
    %c0_i32_1 = arith.constant 0 : i32
    return %arg0, %c0_i32, %c0_i32_0 : i32, i32, i32
  }
}

module attributes {stable_mosaic.version = 11 : i64} {
  func.func @_block0_expand1_kernel(%arg0: i32, %arg1: memref<1x9x64x16xbf16, #tpu.memory_space<vmem>>, %arg2: memref<9x16xf32, #tpu.memory_space<vmem>>, %arg3: memref<1x16xf32, #tpu.memory_space<vmem>>, %arg4: memref<1x16xf32, #tpu.memory_space<vmem>>, %arg5: memref<16x2xbf16, #tpu.memory_space<vmem>>, %arg6: memref<1x2xf32, #tpu.memory_space<vmem>>, %arg7: memref<2x16xbf16, #tpu.memory_space<vmem>>, %arg8: memref<1x16xf32, #tpu.memory_space<vmem>>, %arg9: memref<16x8xbf16, #tpu.memory_space<vmem>>, %arg10: memref<1x8xf32, #tpu.memory_space<vmem>>, %arg11: memref<1x8xf32, #tpu.memory_space<vmem>>, %arg12: memref<1x64x8xbf16, #tpu.memory_space<vmem>>, %arg13: memref<8x16xbf16, #tpu.memory_space<vmem>>, %arg14: memref<1x16xf32, #tpu.memory_space<vmem>>, %arg15: memref<1x16xf32, #tpu.memory_space<vmem>>, %arg16: memref<1x64x16xbf16, #tpu.memory_space<vmem>>) attributes {dimension_semantics = [#tpu.dimension_semantics<parallel>], iteration_bounds = array<i64: 2>, scalar_prefetch = 0 : i64, scratch_operands = 0 : i64, tpu.core_type = #tpu.core_type<tc>, window_params = [{transform_indices = @transform_0, window_bounds = array<i64: 1, 9, 64, 16>}, {pipeline_mode = #tpu.pipeline_mode<synchronous>, transform_indices = @transform_1, window_bounds = array<i64: 9, 16>}, {pipeline_mode = #tpu.pipeline_mode<synchronous>, transform_indices = @transform_2, window_bounds = array<i64: 1, 16>}, {pipeline_mode = #tpu.pipeline_mode<synchronous>, transform_indices = @transform_3, window_bounds = array<i64: 1, 16>}, {pipeline_mode = #tpu.pipeline_mode<synchronous>, transform_indices = @transform_4, window_bounds = array<i64: 16, 2>}, {pipeline_mode = #tpu.pipeline_mode<synchronous>, transform_indices = @transform_5, window_bounds = array<i64: 1, 2>}, {pipeline_mode = #tpu.pipeline_mode<synchronous>, transform_indices = @transform_6, window_bounds = array<i64: 2, 16>}, {pipeline_mode = #tpu.pipeline_mode<synchronous>, transform_indices = @transform_7, window_bounds = array<i64: 1, 16>}, {pipeline_mode = #tpu.pipeline_mode<synchronous>, transform_indices = @transform_8, window_bounds = array<i64: 16, 8>}, {pipeline_mode = #tpu.pipeline_mode<synchronous>, transform_indices = @transform_9, window_bounds = array<i64: 1, 8>}, {pipeline_mode = #tpu.pipeline_mode<synchronous>, transform_indices = @transform_10, window_bounds = array<i64: 1, 8>}, {transform_indices = @transform_11, window_bounds = array<i64: 1, 64, 8>}, {pipeline_mode = #tpu.pipeline_mode<synchronous>, transform_indices = @transform_12, window_bounds = array<i64: 8, 16>}, {pipeline_mode = #tpu.pipeline_mode<synchronous>, transform_indices = @transform_13, window_bounds = array<i64: 1, 16>}, {pipeline_mode = #tpu.pipeline_mode<synchronous>, transform_indices = @transform_14, window_bounds = array<i64: 1, 16>}, {transform_indices = @transform_15, window_bounds = array<i64: 1, 64, 16>}]} {
    %c0 = arith.constant 0 : index
    %c0_0 = arith.constant 0 : index
    %c0_1 = arith.constant 0 : index
    %c0_2 = arith.constant 0 : index
    %0 = vector.load %arg1[%c0, %c0_0, %c0_1, %c0_2] : memref<1x9x64x16xbf16, #tpu.memory_space<vmem>>, vector<1x9x64x16xbf16>
    %1 = vector.shape_cast %0 : vector<1x9x64x16xbf16> to vector<9x64x16xbf16>
    %c0_3 = arith.constant 0 : index
    %c0_4 = arith.constant 0 : index
    %2 = vector.load %arg2[%c0_3, %c0_4] : memref<9x16xf32, #tpu.memory_space<vmem>>, vector<9x16xf32>
    %3 = vector.extract_strided_slice %1 {offsets = [0, 0, 0], sizes = [1, 64, 16], strides = [1, 1, 1]} : vector<9x64x16xbf16> to vector<1x64x16xbf16>
    %4 = vector.shape_cast %3 : vector<1x64x16xbf16> to vector<64x16xbf16>
    %5 = arith.extf %4 : vector<64x16xbf16> to vector<64x16xf32>
    %6 = vector.extract_strided_slice %2 {offsets = [0, 0], sizes = [1, 16], strides = [1, 1]} : vector<9x16xf32> to vector<1x16xf32>
    %7 = vector.broadcast %6 : vector<1x16xf32> to vector<64x16xf32>
    %8 = arith.mulf %5, %7 : vector<64x16xf32>
    %9 = vector.extract_strided_slice %1 {offsets = [1, 0, 0], sizes = [1, 64, 16], strides = [1, 1, 1]} : vector<9x64x16xbf16> to vector<1x64x16xbf16>
    %10 = vector.shape_cast %9 : vector<1x64x16xbf16> to vector<64x16xbf16>
    %11 = arith.extf %10 : vector<64x16xbf16> to vector<64x16xf32>
    %12 = vector.extract_strided_slice %2 {offsets = [1, 0], sizes = [1, 16], strides = [1, 1]} : vector<9x16xf32> to vector<1x16xf32>
    %13 = vector.broadcast %12 : vector<1x16xf32> to vector<64x16xf32>
    %14 = arith.mulf %11, %13 : vector<64x16xf32>
    %15 = arith.addf %8, %14 : vector<64x16xf32>
    %16 = vector.extract_strided_slice %1 {offsets = [2, 0, 0], sizes = [1, 64, 16], strides = [1, 1, 1]} : vector<9x64x16xbf16> to vector<1x64x16xbf16>
    %17 = vector.shape_cast %16 : vector<1x64x16xbf16> to vector<64x16xbf16>
    %18 = arith.extf %17 : vector<64x16xbf16> to vector<64x16xf32>
    %19 = vector.extract_strided_slice %2 {offsets = [2, 0], sizes = [1, 16], strides = [1, 1]} : vector<9x16xf32> to vector<1x16xf32>
    %20 = vector.broadcast %19 : vector<1x16xf32> to vector<64x16xf32>
    %21 = arith.mulf %18, %20 : vector<64x16xf32>
    %22 = arith.addf %15, %21 : vector<64x16xf32>
    %23 = vector.extract_strided_slice %1 {offsets = [3, 0, 0], sizes = [1, 64, 16], strides = [1, 1, 1]} : vector<9x64x16xbf16> to vector<1x64x16xbf16>
    %24 = vector.shape_cast %23 : vector<1x64x16xbf16> to vector<64x16xbf16>
    %25 = arith.extf %24 : vector<64x16xbf16> to vector<64x16xf32>
    %26 = vector.extract_strided_slice %2 {offsets = [3, 0], sizes = [1, 16], strides = [1, 1]} : vector<9x16xf32> to vector<1x16xf32>
    %27 = vector.broadcast %26 : vector<1x16xf32> to vector<64x16xf32>
    %28 = arith.mulf %25, %27 : vector<64x16xf32>
    %29 = arith.addf %22, %28 : vector<64x16xf32>
    %30 = vector.extract_strided_slice %1 {offsets = [4, 0, 0], sizes = [1, 64, 16], strides = [1, 1, 1]} : vector<9x64x16xbf16> to vector<1x64x16xbf16>
    %31 = vector.shape_cast %30 : vector<1x64x16xbf16> to vector<64x16xbf16>
    %32 = arith.extf %31 : vector<64x16xbf16> to vector<64x16xf32>
    %33 = vector.extract_strided_slice %2 {offsets = [4, 0], sizes = [1, 16], strides = [1, 1]} : vector<9x16xf32> to vector<1x16xf32>
    %34 = vector.broadcast %33 : vector<1x16xf32> to vector<64x16xf32>
    %35 = arith.mulf %32, %34 : vector<64x16xf32>
    %36 = arith.addf %29, %35 : vector<64x16xf32>
    %37 = vector.extract_strided_slice %1 {offsets = [5, 0, 0], sizes = [1, 64, 16], strides = [1, 1, 1]} : vector<9x64x16xbf16> to vector<1x64x16xbf16>
    %38 = vector.shape_cast %37 : vector<1x64x16xbf16> to vector<64x16xbf16>
    %39 = arith.extf %38 : vector<64x16xbf16> to vector<64x16xf32>
    %40 = vector.extract_strided_slice %2 {offsets = [5, 0], sizes = [1, 16], strides = [1, 1]} : vector<9x16xf32> to vector<1x16xf32>
    %41 = vector.broadcast %40 : vector<1x16xf32> to vector<64x16xf32>
    %42 = arith.mulf %39, %41 : vector<64x16xf32>
    %43 = arith.addf %36, %42 : vector<64x16xf32>
    %44 = vector.extract_strided_slice %1 {offsets = [6, 0, 0], sizes = [1, 64, 16], strides = [1, 1, 1]} : vector<9x64x16xbf16> to vector<1x64x16xbf16>
    %45 = vector.shape_cast %44 : vector<1x64x16xbf16> to vector<64x16xbf16>
    %46 = arith.extf %45 : vector<64x16xbf16> to vector<64x16xf32>
    %47 = vector.extract_strided_slice %2 {offsets = [6, 0], sizes = [1, 16], strides = [1, 1]} : vector<9x16xf32> to vector<1x16xf32>
    %48 = vector.broadcast %47 : vector<1x16xf32> to vector<64x16xf32>
    %49 = arith.mulf %46, %48 : vector<64x16xf32>
    %50 = arith.addf %43, %49 : vector<64x16xf32>
    %51 = vector.extract_strided_slice %1 {offsets = [7, 0, 0], sizes = [1, 64, 16], strides = [1, 1, 1]} : vector<9x64x16xbf16> to vector<1x64x16xbf16>
    %52 = vector.shape_cast %51 : vector<1x64x16xbf16> to vector<64x16xbf16>
    %53 = arith.extf %52 : vector<64x16xbf16> to vector<64x16xf32>
    %54 = vector.extract_strided_slice %2 {offsets = [7, 0], sizes = [1, 16], strides = [1, 1]} : vector<9x16xf32> to vector<1x16xf32>
    %55 = vector.broadcast %54 : vector<1x16xf32> to vector<64x16xf32>
    %56 = arith.mulf %53, %55 : vector<64x16xf32>
    %57 = arith.addf %50, %56 : vector<64x16xf32>
    %58 = vector.extract_strided_slice %1 {offsets = [8, 0, 0], sizes = [1, 64, 16], strides = [1, 1, 1]} : vector<9x64x16xbf16> to vector<1x64x16xbf16>
    %59 = vector.shape_cast %58 : vector<1x64x16xbf16> to vector<64x16xbf16>
    %60 = arith.extf %59 : vector<64x16xbf16> to vector<64x16xf32>
    %61 = vector.extract_strided_slice %2 {offsets = [8, 0], sizes = [1, 16], strides = [1, 1]} : vector<9x16xf32> to vector<1x16xf32>
    %62 = vector.broadcast %61 : vector<1x16xf32> to vector<64x16xf32>
    %63 = arith.mulf %60, %62 : vector<64x16xf32>
    %64 = arith.addf %57, %63 : vector<64x16xf32>
    %c0_5 = arith.constant 0 : index
    %c0_6 = arith.constant 0 : index
    %65 = vector.load %arg3[%c0_5, %c0_6] : memref<1x16xf32, #tpu.memory_space<vmem>>, vector<1x16xf32>
    %66 = vector.broadcast %65 : vector<1x16xf32> to vector<64x16xf32>
    %67 = arith.mulf %64, %66 : vector<64x16xf32>
    %c0_7 = arith.constant 0 : index
    %c0_8 = arith.constant 0 : index
    %68 = vector.load %arg4[%c0_7, %c0_8] : memref<1x16xf32, #tpu.memory_space<vmem>>, vector<1x16xf32>
    %69 = vector.broadcast %68 : vector<1x16xf32> to vector<64x16xf32>
    %70 = arith.addf %67, %69 : vector<64x16xf32>
    %cst = arith.constant 0.000000e+00 : f32
    %71 = vector.broadcast %cst : f32 to vector<64x16xf32>
    %72 = arith.subf %71, %70 : vector<64x16xf32>
    %73 = math.exp %72 : vector<64x16xf32>
    %cst_9 = arith.constant 1.000000e+00 : f32
    %74 = vector.broadcast %cst_9 : f32 to vector<64x16xf32>
    %75 = arith.addf %74, %73 : vector<64x16xf32>
    %76 = tpu.reciprocal %75 {approx = true} : vector<64x16xf32> -> vector<64x16xf32>
    %77 = arith.mulf %70, %76 : vector<64x16xf32>
    %cst_10 = arith.constant dense<0.000000e+00> : vector<16xf32>
    %78 = vector.multi_reduction <add>, %77, %cst_10 [0] : vector<64x16xf32> to vector<16xf32>
    %79 = vector.shape_cast %78 : vector<16xf32> to vector<1x16xf32>
    %cst_11 = arith.constant 6.400000e+01 : f32
    %80 = vector.broadcast %cst_11 : f32 to vector<1x16xf32>
    %81 = arith.divf %79, %80 : vector<1x16xf32>
    %82 = arith.truncf %81 : vector<1x16xf32> to vector<1x16xbf16>
    %c0_12 = arith.constant 0 : index
    %c0_13 = arith.constant 0 : index
    %83 = vector.load %arg5[%c0_12, %c0_13] : memref<16x2xbf16, #tpu.memory_space<vmem>>, vector<16x2xbf16>
    %cst_14 = arith.constant dense<0.000000e+00> : vector<1x2xf32>
    %84 = tpu.matmul %82, %83, %cst_14 {dimension_numbers = #tpu.dot_dimension_numbers<[1], [0], [0], [1], [0, 0, 1, 1], [], []>} : vector<1x16xbf16>, vector<16x2xbf16>, vector<1x2xf32> -> vector<1x2xf32>
    %c0_15 = arith.constant 0 : index
    %c0_16 = arith.constant 0 : index
    %85 = vector.load %arg6[%c0_15, %c0_16] : memref<1x2xf32, #tpu.memory_space<vmem>>, vector<1x2xf32>
    %86 = arith.addf %84, %85 : vector<1x2xf32>
    %cst_17 = arith.constant 0.000000e+00 : f32
    %87 = vector.broadcast %cst_17 : f32 to vector<1x2xf32>
    %88 = arith.subf %87, %86 : vector<1x2xf32>
    %89 = math.exp %88 : vector<1x2xf32>
    %cst_18 = arith.constant 1.000000e+00 : f32
    %90 = vector.broadcast %cst_18 : f32 to vector<1x2xf32>
    %91 = arith.addf %90, %89 : vector<1x2xf32>
    %92 = tpu.reciprocal %91 {approx = true} : vector<1x2xf32> -> vector<1x2xf32>
    %93 = arith.mulf %86, %92 : vector<1x2xf32>
    %94 = arith.truncf %93 : vector<1x2xf32> to vector<1x2xbf16>
    %c0_19 = arith.constant 0 : index
    %c0_20 = arith.constant 0 : index
    %95 = vector.load %arg7[%c0_19, %c0_20] : memref<2x16xbf16, #tpu.memory_space<vmem>>, vector<2x16xbf16>
    %cst_21 = arith.constant dense<0.000000e+00> : vector<1x16xf32>
    %96 = tpu.matmul %94, %95, %cst_21 {dimension_numbers = #tpu.dot_dimension_numbers<[1], [0], [0], [1], [0, 0, 1, 1], [], []>} : vector<1x2xbf16>, vector<2x16xbf16>, vector<1x16xf32> -> vector<1x16xf32>
    %c0_22 = arith.constant 0 : index
    %c0_23 = arith.constant 0 : index
    %97 = vector.load %arg8[%c0_22, %c0_23] : memref<1x16xf32, #tpu.memory_space<vmem>>, vector<1x16xf32>
    %98 = arith.addf %96, %97 : vector<1x16xf32>
    %cst_24 = arith.constant 0.000000e+00 : f32
    %99 = vector.broadcast %cst_24 : f32 to vector<1x16xf32>
    %100 = arith.subf %99, %98 : vector<1x16xf32>
    %101 = math.exp %100 : vector<1x16xf32>
    %cst_25 = arith.constant 1.000000e+00 : f32
    %102 = vector.broadcast %cst_25 : f32 to vector<1x16xf32>
    %103 = arith.addf %102, %101 : vector<1x16xf32>
    %104 = tpu.reciprocal %103 {approx = true} : vector<1x16xf32> -> vector<1x16xf32>
    %105 = vector.broadcast %104 : vector<1x16xf32> to vector<64x16xf32>
    %106 = arith.mulf %77, %105 : vector<64x16xf32>
    %107 = arith.truncf %106 : vector<64x16xf32> to vector<64x16xbf16>
    %c0_26 = arith.constant 0 : index
    %c0_27 = arith.constant 0 : index
    %108 = vector.load %arg9[%c0_26, %c0_27] : memref<16x8xbf16, #tpu.memory_space<vmem>>, vector<16x8xbf16>
    %cst_28 = arith.constant dense<0.000000e+00> : vector<64x8xf32>
    %109 = tpu.matmul %107, %108, %cst_28 {dimension_numbers = #tpu.dot_dimension_numbers<[1], [0], [0], [1], [0, 0, 1, 1], [], []>} : vector<64x16xbf16>, vector<16x8xbf16>, vector<64x8xf32> -> vector<64x8xf32>
    %c0_29 = arith.constant 0 : index
    %c0_30 = arith.constant 0 : index
    %110 = vector.load %arg10[%c0_29, %c0_30] : memref<1x8xf32, #tpu.memory_space<vmem>>, vector<1x8xf32>
    %111 = vector.broadcast %110 : vector<1x8xf32> to vector<64x8xf32>
    %112 = arith.mulf %109, %111 : vector<64x8xf32>
    %c0_31 = arith.constant 0 : index
    %c0_32 = arith.constant 0 : index
    %113 = vector.load %arg11[%c0_31, %c0_32] : memref<1x8xf32, #tpu.memory_space<vmem>>, vector<1x8xf32>
    %114 = vector.broadcast %113 : vector<1x8xf32> to vector<64x8xf32>
    %115 = arith.addf %112, %114 : vector<64x8xf32>
    %c0_33 = arith.constant 0 : index
    %c0_34 = arith.constant 0 : index
    %c0_35 = arith.constant 0 : index
    %116 = vector.load %arg12[%c0_33, %c0_34, %c0_35] : memref<1x64x8xbf16, #tpu.memory_space<vmem>>, vector<1x64x8xbf16>
    %117 = vector.shape_cast %116 : vector<1x64x8xbf16> to vector<64x8xbf16>
    %118 = arith.extf %117 : vector<64x8xbf16> to vector<64x8xf32>
    %119 = arith.addf %115, %118 : vector<64x8xf32>
    %120 = arith.truncf %119 : vector<64x8xf32> to vector<64x8xbf16>
    %c0_36 = arith.constant 0 : index
    %c0_37 = arith.constant 0 : index
    %121 = vector.load %arg13[%c0_36, %c0_37] : memref<8x16xbf16, #tpu.memory_space<vmem>>, vector<8x16xbf16>
    %cst_38 = arith.constant dense<0.000000e+00> : vector<64x16xf32>
    %122 = tpu.matmul %120, %121, %cst_38 {dimension_numbers = #tpu.dot_dimension_numbers<[1], [0], [0], [1], [0, 0, 1, 1], [], []>} : vector<64x8xbf16>, vector<8x16xbf16>, vector<64x16xf32> -> vector<64x16xf32>
    %c0_39 = arith.constant 0 : index
    %c0_40 = arith.constant 0 : index
    %123 = vector.load %arg14[%c0_39, %c0_40] : memref<1x16xf32, #tpu.memory_space<vmem>>, vector<1x16xf32>
    %124 = vector.broadcast %123 : vector<1x16xf32> to vector<64x16xf32>
    %125 = arith.mulf %122, %124 : vector<64x16xf32>
    %c0_41 = arith.constant 0 : index
    %c0_42 = arith.constant 0 : index
    %126 = vector.load %arg15[%c0_41, %c0_42] : memref<1x16xf32, #tpu.memory_space<vmem>>, vector<1x16xf32>
    %127 = vector.broadcast %126 : vector<1x16xf32> to vector<64x16xf32>
    %128 = arith.addf %125, %127 : vector<64x16xf32>
    %cst_43 = arith.constant 0.000000e+00 : f32
    %129 = vector.broadcast %cst_43 : f32 to vector<64x16xf32>
    %130 = arith.subf %129, %128 : vector<64x16xf32>
    %131 = math.exp %130 : vector<64x16xf32>
    %cst_44 = arith.constant 1.000000e+00 : f32
    %132 = vector.broadcast %cst_44 : f32 to vector<64x16xf32>
    %133 = arith.addf %132, %131 : vector<64x16xf32>
    %134 = tpu.reciprocal %133 {approx = true} : vector<64x16xf32> -> vector<64x16xf32>
    %135 = arith.mulf %128, %134 : vector<64x16xf32>
    %136 = arith.truncf %135 : vector<64x16xf32> to vector<64x16xbf16>
    %c0_45 = arith.constant 0 : index
    %c0_46 = arith.constant 0 : index
    %c0_47 = arith.constant 0 : index
    %137 = vector.load %arg16[%c0_45, %c0_46, %c0_47] : memref<1x64x16xbf16, #tpu.memory_space<vmem>>, vector<1x64x16xbf16>
    %138 = vector.shape_cast %137 : vector<1x64x16xbf16> to vector<64x16xbf16>
    %139 = vector.shape_cast %136 : vector<64x16xbf16> to vector<1x64x16xbf16>
    tpu.vector_store %arg16[%c0_45, %c0_46, %c0_47], %139 {strides = array<i32>} : memref<1x64x16xbf16, #tpu.memory_space<vmem>>, vector<1x64x16xbf16>,
    return
  }
  func.func @transform_0(%arg0: i32) -> (i32, i32, i32, i32) {
    %c0_i32 = arith.constant 0 : i32
    %c0_i32_0 = arith.constant 0 : i32
    %c0_i32_1 = arith.constant 0 : i32
    %c0_i32_2 = arith.constant 0 : i32
    return %arg0, %c0_i32, %c0_i32_0, %c0_i32_1 : i32, i32, i32, i32
  }
  func.func @transform_1(%arg0: i32) -> (i32, i32) {
    %c0_i32 = arith.constant 0 : i32
    %c0_i32_0 = arith.constant 0 : i32
    %c0_i32_1 = arith.constant 0 : i32
    return %c0_i32, %c0_i32_0 : i32, i32
  }
  func.func @transform_2(%arg0: i32) -> (i32, i32) {
    %c0_i32 = arith.constant 0 : i32
    %c0_i32_0 = arith.constant 0 : i32
    %c0_i32_1 = arith.constant 0 : i32
    return %c0_i32, %c0_i32_0 : i32, i32
  }
  func.func @transform_3(%arg0: i32) -> (i32, i32) {
    %c0_i32 = arith.constant 0 : i32
    %c0_i32_0 = arith.constant 0 : i32
    %c0_i32_1 = arith.constant 0 : i32
    return %c0_i32, %c0_i32_0 : i32, i32
  }
  func.func @transform_4(%arg0: i32) -> (i32, i32) {
    %c0_i32 = arith.constant 0 : i32
    %c0_i32_0 = arith.constant 0 : i32
    %c0_i32_1 = arith.constant 0 : i32
    return %c0_i32, %c0_i32_0 : i32, i32
  }
  func.func @transform_5(%arg0: i32) -> (i32, i32) {
    %c0_i32 = arith.constant 0 : i32
    %c0_i32_0 = arith.constant 0 : i32
    %c0_i32_1 = arith.constant 0 : i32
    return %c0_i32, %c0_i32_0 : i32, i32
  }
  func.func @transform_6(%arg0: i32) -> (i32, i32) {
    %c0_i32 = arith.constant 0 : i32
    %c0_i32_0 = arith.constant 0 : i32
    %c0_i32_1 = arith.constant 0 : i32
    return %c0_i32, %c0_i32_0 : i32, i32
  }
  func.func @transform_7(%arg0: i32) -> (i32, i32) {
    %c0_i32 = arith.constant 0 : i32
    %c0_i32_0 = arith.constant 0 : i32
    %c0_i32_1 = arith.constant 0 : i32
    return %c0_i32, %c0_i32_0 : i32, i32
  }
  func.func @transform_8(%arg0: i32) -> (i32, i32) {
    %c0_i32 = arith.constant 0 : i32
    %c0_i32_0 = arith.constant 0 : i32
    %c0_i32_1 = arith.constant 0 : i32
    return %c0_i32, %c0_i32_0 : i32, i32
  }
  func.func @transform_9(%arg0: i32) -> (i32, i32) {
    %c0_i32 = arith.constant 0 : i32
    %c0_i32_0 = arith.constant 0 : i32
    %c0_i32_1 = arith.constant 0 : i32
    return %c0_i32, %c0_i32_0 : i32, i32
  }
  func.func @transform_10(%arg0: i32) -> (i32, i32) {
    %c0_i32 = arith.constant 0 : i32
    %c0_i32_0 = arith.constant 0 : i32
    %c0_i32_1 = arith.constant 0 : i32
    return %c0_i32, %c0_i32_0 : i32, i32
  }
  func.func @transform_11(%arg0: i32) -> (i32, i32, i32) {
    %c0_i32 = arith.constant 0 : i32
    %c0_i32_0 = arith.constant 0 : i32
    %c0_i32_1 = arith.constant 0 : i32
    return %arg0, %c0_i32, %c0_i32_0 : i32, i32, i32
  }
  func.func @transform_12(%arg0: i32) -> (i32, i32) {
    %c0_i32 = arith.constant 0 : i32
    %c0_i32_0 = arith.constant 0 : i32
    %c0_i32_1 = arith.constant 0 : i32
    return %c0_i32, %c0_i32_0 : i32, i32
  }
  func.func @transform_13(%arg0: i32) -> (i32, i32) {
    %c0_i32 = arith.constant 0 : i32
    %c0_i32_0 = arith.constant 0 : i32
    %c0_i32_1 = arith.constant 0 : i32
    return %c0_i32, %c0_i32_0 : i32, i32
  }
  func.func @transform_14(%arg0: i32) -> (i32, i32) {
    %c0_i32 = arith.constant 0 : i32
    %c0_i32_0 = arith.constant 0 : i32
    %c0_i32_1 = arith.constant 0 : i32
    return %c0_i32, %c0_i32_0 : i32, i32
  }
  func.func @transform_15(%arg0: i32) -> (i32, i32, i32) {
    %c0_i32 = arith.constant 0 : i32
    %c0_i32_0 = arith.constant 0 : i32
    %c0_i32_1 = arith.constant 0 : i32
    return %arg0, %c0_i32, %c0_i32_0 : i32, i32, i32
  }
}

module attributes {stable_mosaic.version = 11 : i64} {
  func.func @_block1_head_kernel(%arg0: i32, %arg1: memref<1x9x16x16xbf16, #tpu.memory_space<vmem>>, %arg2: memref<9x16xf32, #tpu.memory_space<vmem>>, %arg3: memref<1x16xf32, #tpu.memory_space<vmem>>, %arg4: memref<1x16xf32, #tpu.memory_space<vmem>>, %arg5: memref<16x2xbf16, #tpu.memory_space<vmem>>, %arg6: memref<1x2xf32, #tpu.memory_space<vmem>>, %arg7: memref<2x16xbf16, #tpu.memory_space<vmem>>, %arg8: memref<1x16xf32, #tpu.memory_space<vmem>>, %arg9: memref<16x16xbf16, #tpu.memory_space<vmem>>, %arg10: memref<1x16xf32, #tpu.memory_space<vmem>>, %arg11: memref<1x16xf32, #tpu.memory_space<vmem>>, %arg12: memref<16x32xbf16, #tpu.memory_space<vmem>>, %arg13: memref<1x32xf32, #tpu.memory_space<vmem>>, %arg14: memref<1x32xf32, #tpu.memory_space<vmem>>, %arg15: memref<32x11xbf16, #tpu.memory_space<vmem>>, %arg16: memref<1x11xf32, #tpu.memory_space<vmem>>, %arg17: memref<1x11xf32, #tpu.memory_space<vmem>>, %arg18: memref<1x11xf32, #tpu.memory_space<vmem>>, %arg19: memref<1x1x10xf32, #tpu.memory_space<vmem>>, %arg20: memref<1x1x10xf32, #tpu.memory_space<vmem>>, %arg21: memref<1x1x1xf32, #tpu.memory_space<vmem>>) attributes {dimension_semantics = [#tpu.dimension_semantics<parallel>], iteration_bounds = array<i64: 2>, scalar_prefetch = 0 : i64, scratch_operands = 0 : i64, tpu.core_type = #tpu.core_type<tc>, window_params = [{transform_indices = @transform_0, window_bounds = array<i64: 1, 9, 16, 16>}, {pipeline_mode = #tpu.pipeline_mode<synchronous>, transform_indices = @transform_1, window_bounds = array<i64: 9, 16>}, {pipeline_mode = #tpu.pipeline_mode<synchronous>, transform_indices = @transform_2, window_bounds = array<i64: 1, 16>}, {pipeline_mode = #tpu.pipeline_mode<synchronous>, transform_indices = @transform_3, window_bounds = array<i64: 1, 16>}, {pipeline_mode = #tpu.pipeline_mode<synchronous>, transform_indices = @transform_4, window_bounds = array<i64: 16, 2>}, {pipeline_mode = #tpu.pipeline_mode<synchronous>, transform_indices = @transform_5, window_bounds = array<i64: 1, 2>}, {pipeline_mode = #tpu.pipeline_mode<synchronous>, transform_indices = @transform_6, window_bounds = array<i64: 2, 16>}, {pipeline_mode = #tpu.pipeline_mode<synchronous>, transform_indices = @transform_7, window_bounds = array<i64: 1, 16>}, {pipeline_mode = #tpu.pipeline_mode<synchronous>, transform_indices = @transform_8, window_bounds = array<i64: 16, 16>}, {pipeline_mode = #tpu.pipeline_mode<synchronous>, transform_indices = @transform_9, window_bounds = array<i64: 1, 16>}, {pipeline_mode = #tpu.pipeline_mode<synchronous>, transform_indices = @transform_10, window_bounds = array<i64: 1, 16>}, {pipeline_mode = #tpu.pipeline_mode<synchronous>, transform_indices = @transform_11, window_bounds = array<i64: 16, 32>}, {pipeline_mode = #tpu.pipeline_mode<synchronous>, transform_indices = @transform_12, window_bounds = array<i64: 1, 32>}, {pipeline_mode = #tpu.pipeline_mode<synchronous>, transform_indices = @transform_13, window_bounds = array<i64: 1, 32>}, {pipeline_mode = #tpu.pipeline_mode<synchronous>, transform_indices = @transform_14, window_bounds = array<i64: 32, 11>}, {pipeline_mode = #tpu.pipeline_mode<synchronous>, transform_indices = @transform_15, window_bounds = array<i64: 1, 11>}, {pipeline_mode = #tpu.pipeline_mode<synchronous>, transform_indices = @transform_16, window_bounds = array<i64: 1, 11>}, {pipeline_mode = #tpu.pipeline_mode<synchronous>, transform_indices = @transform_17, window_bounds = array<i64: 1, 11>}, {transform_indices = @transform_18, window_bounds = array<i64: 1, 1, 10>}, {transform_indices = @transform_19, window_bounds = array<i64: 1, 1, 10>}, {transform_indices = @transform_20, window_bounds = array<i64: 1, 1, 1>}]} {
    %c0 = arith.constant 0 : index
    %c0_0 = arith.constant 0 : index
    %c0_1 = arith.constant 0 : index
    %c0_2 = arith.constant 0 : index
    %0 = vector.load %arg1[%c0, %c0_0, %c0_1, %c0_2] : memref<1x9x16x16xbf16, #tpu.memory_space<vmem>>, vector<1x9x16x16xbf16>
    %1 = vector.shape_cast %0 : vector<1x9x16x16xbf16> to vector<9x16x16xbf16>
    %c0_3 = arith.constant 0 : index
    %c0_4 = arith.constant 0 : index
    %2 = vector.load %arg2[%c0_3, %c0_4] : memref<9x16xf32, #tpu.memory_space<vmem>>, vector<9x16xf32>
    %3 = vector.extract_strided_slice %1 {offsets = [0, 0, 0], sizes = [1, 16, 16], strides = [1, 1, 1]} : vector<9x16x16xbf16> to vector<1x16x16xbf16>
    %4 = vector.shape_cast %3 : vector<1x16x16xbf16> to vector<16x16xbf16>
    %5 = arith.extf %4 : vector<16x16xbf16> to vector<16x16xf32>
    %6 = vector.extract_strided_slice %2 {offsets = [0, 0], sizes = [1, 16], strides = [1, 1]} : vector<9x16xf32> to vector<1x16xf32>
    %7 = vector.broadcast %6 : vector<1x16xf32> to vector<16x16xf32>
    %8 = arith.mulf %5, %7 : vector<16x16xf32>
    %9 = vector.extract_strided_slice %1 {offsets = [1, 0, 0], sizes = [1, 16, 16], strides = [1, 1, 1]} : vector<9x16x16xbf16> to vector<1x16x16xbf16>
    %10 = vector.shape_cast %9 : vector<1x16x16xbf16> to vector<16x16xbf16>
    %11 = arith.extf %10 : vector<16x16xbf16> to vector<16x16xf32>
    %12 = vector.extract_strided_slice %2 {offsets = [1, 0], sizes = [1, 16], strides = [1, 1]} : vector<9x16xf32> to vector<1x16xf32>
    %13 = vector.broadcast %12 : vector<1x16xf32> to vector<16x16xf32>
    %14 = arith.mulf %11, %13 : vector<16x16xf32>
    %15 = arith.addf %8, %14 : vector<16x16xf32>
    %16 = vector.extract_strided_slice %1 {offsets = [2, 0, 0], sizes = [1, 16, 16], strides = [1, 1, 1]} : vector<9x16x16xbf16> to vector<1x16x16xbf16>
    %17 = vector.shape_cast %16 : vector<1x16x16xbf16> to vector<16x16xbf16>
    %18 = arith.extf %17 : vector<16x16xbf16> to vector<16x16xf32>
    %19 = vector.extract_strided_slice %2 {offsets = [2, 0], sizes = [1, 16], strides = [1, 1]} : vector<9x16xf32> to vector<1x16xf32>
    %20 = vector.broadcast %19 : vector<1x16xf32> to vector<16x16xf32>
    %21 = arith.mulf %18, %20 : vector<16x16xf32>
    %22 = arith.addf %15, %21 : vector<16x16xf32>
    %23 = vector.extract_strided_slice %1 {offsets = [3, 0, 0], sizes = [1, 16, 16], strides = [1, 1, 1]} : vector<9x16x16xbf16> to vector<1x16x16xbf16>
    %24 = vector.shape_cast %23 : vector<1x16x16xbf16> to vector<16x16xbf16>
    %25 = arith.extf %24 : vector<16x16xbf16> to vector<16x16xf32>
    %26 = vector.extract_strided_slice %2 {offsets = [3, 0], sizes = [1, 16], strides = [1, 1]} : vector<9x16xf32> to vector<1x16xf32>
    %27 = vector.broadcast %26 : vector<1x16xf32> to vector<16x16xf32>
    %28 = arith.mulf %25, %27 : vector<16x16xf32>
    %29 = arith.addf %22, %28 : vector<16x16xf32>
    %30 = vector.extract_strided_slice %1 {offsets = [4, 0, 0], sizes = [1, 16, 16], strides = [1, 1, 1]} : vector<9x16x16xbf16> to vector<1x16x16xbf16>
    %31 = vector.shape_cast %30 : vector<1x16x16xbf16> to vector<16x16xbf16>
    %32 = arith.extf %31 : vector<16x16xbf16> to vector<16x16xf32>
    %33 = vector.extract_strided_slice %2 {offsets = [4, 0], sizes = [1, 16], strides = [1, 1]} : vector<9x16xf32> to vector<1x16xf32>
    %34 = vector.broadcast %33 : vector<1x16xf32> to vector<16x16xf32>
    %35 = arith.mulf %32, %34 : vector<16x16xf32>
    %36 = arith.addf %29, %35 : vector<16x16xf32>
    %37 = vector.extract_strided_slice %1 {offsets = [5, 0, 0], sizes = [1, 16, 16], strides = [1, 1, 1]} : vector<9x16x16xbf16> to vector<1x16x16xbf16>
    %38 = vector.shape_cast %37 : vector<1x16x16xbf16> to vector<16x16xbf16>
    %39 = arith.extf %38 : vector<16x16xbf16> to vector<16x16xf32>
    %40 = vector.extract_strided_slice %2 {offsets = [5, 0], sizes = [1, 16], strides = [1, 1]} : vector<9x16xf32> to vector<1x16xf32>
    %41 = vector.broadcast %40 : vector<1x16xf32> to vector<16x16xf32>
    %42 = arith.mulf %39, %41 : vector<16x16xf32>
    %43 = arith.addf %36, %42 : vector<16x16xf32>
    %44 = vector.extract_strided_slice %1 {offsets = [6, 0, 0], sizes = [1, 16, 16], strides = [1, 1, 1]} : vector<9x16x16xbf16> to vector<1x16x16xbf16>
    %45 = vector.shape_cast %44 : vector<1x16x16xbf16> to vector<16x16xbf16>
    %46 = arith.extf %45 : vector<16x16xbf16> to vector<16x16xf32>
    %47 = vector.extract_strided_slice %2 {offsets = [6, 0], sizes = [1, 16], strides = [1, 1]} : vector<9x16xf32> to vector<1x16xf32>
    %48 = vector.broadcast %47 : vector<1x16xf32> to vector<16x16xf32>
    %49 = arith.mulf %46, %48 : vector<16x16xf32>
    %50 = arith.addf %43, %49 : vector<16x16xf32>
    %51 = vector.extract_strided_slice %1 {offsets = [7, 0, 0], sizes = [1, 16, 16], strides = [1, 1, 1]} : vector<9x16x16xbf16> to vector<1x16x16xbf16>
    %52 = vector.shape_cast %51 : vector<1x16x16xbf16> to vector<16x16xbf16>
    %53 = arith.extf %52 : vector<16x16xbf16> to vector<16x16xf32>
    %54 = vector.extract_strided_slice %2 {offsets = [7, 0], sizes = [1, 16], strides = [1, 1]} : vector<9x16xf32> to vector<1x16xf32>
    %55 = vector.broadcast %54 : vector<1x16xf32> to vector<16x16xf32>
    %56 = arith.mulf %53, %55 : vector<16x16xf32>
    %57 = arith.addf %50, %56 : vector<16x16xf32>
    %58 = vector.extract_strided_slice %1 {offsets = [8, 0, 0], sizes = [1, 16, 16], strides = [1, 1, 1]} : vector<9x16x16xbf16> to vector<1x16x16xbf16>
    %59 = vector.shape_cast %58 : vector<1x16x16xbf16> to vector<16x16xbf16>
    %60 = arith.extf %59 : vector<16x16xbf16> to vector<16x16xf32>
    %61 = vector.extract_strided_slice %2 {offsets = [8, 0], sizes = [1, 16], strides = [1, 1]} : vector<9x16xf32> to vector<1x16xf32>
    %62 = vector.broadcast %61 : vector<1x16xf32> to vector<16x16xf32>
    %63 = arith.mulf %60, %62 : vector<16x16xf32>
    %64 = arith.addf %57, %63 : vector<16x16xf32>
    %c0_5 = arith.constant 0 : index
    %c0_6 = arith.constant 0 : index
    %65 = vector.load %arg3[%c0_5, %c0_6] : memref<1x16xf32, #tpu.memory_space<vmem>>, vector<1x16xf32>
    %66 = vector.broadcast %65 : vector<1x16xf32> to vector<16x16xf32>
    %67 = arith.mulf %64, %66 : vector<16x16xf32>
    %c0_7 = arith.constant 0 : index
    %c0_8 = arith.constant 0 : index
    %68 = vector.load %arg4[%c0_7, %c0_8] : memref<1x16xf32, #tpu.memory_space<vmem>>, vector<1x16xf32>
    %69 = vector.broadcast %68 : vector<1x16xf32> to vector<16x16xf32>
    %70 = arith.addf %67, %69 : vector<16x16xf32>
    %cst = arith.constant 0.000000e+00 : f32
    %71 = vector.broadcast %cst : f32 to vector<16x16xf32>
    %72 = arith.subf %71, %70 : vector<16x16xf32>
    %73 = math.exp %72 : vector<16x16xf32>
    %cst_9 = arith.constant 1.000000e+00 : f32
    %74 = vector.broadcast %cst_9 : f32 to vector<16x16xf32>
    %75 = arith.addf %74, %73 : vector<16x16xf32>
    %76 = tpu.reciprocal %75 {approx = true} : vector<16x16xf32> -> vector<16x16xf32>
    %77 = arith.mulf %70, %76 : vector<16x16xf32>
    %cst_10 = arith.constant dense<0.000000e+00> : vector<16xf32>
    %78 = vector.multi_reduction <add>, %77, %cst_10 [0] : vector<16x16xf32> to vector<16xf32>
    %79 = vector.shape_cast %78 : vector<16xf32> to vector<1x16xf32>
    %cst_11 = arith.constant 1.600000e+01 : f32
    %80 = vector.broadcast %cst_11 : f32 to vector<1x16xf32>
    %81 = arith.divf %79, %80 : vector<1x16xf32>
    %82 = arith.truncf %81 : vector<1x16xf32> to vector<1x16xbf16>
    %c0_12 = arith.constant 0 : index
    %c0_13 = arith.constant 0 : index
    %83 = vector.load %arg5[%c0_12, %c0_13] : memref<16x2xbf16, #tpu.memory_space<vmem>>, vector<16x2xbf16>
    %cst_14 = arith.constant dense<0.000000e+00> : vector<1x2xf32>
    %84 = tpu.matmul %82, %83, %cst_14 {dimension_numbers = #tpu.dot_dimension_numbers<[1], [0], [0], [1], [0, 0, 1, 1], [], []>} : vector<1x16xbf16>, vector<16x2xbf16>, vector<1x2xf32> -> vector<1x2xf32>
    %c0_15 = arith.constant 0 : index
    %c0_16 = arith.constant 0 : index
    %85 = vector.load %arg6[%c0_15, %c0_16] : memref<1x2xf32, #tpu.memory_space<vmem>>, vector<1x2xf32>
    %86 = arith.addf %84, %85 : vector<1x2xf32>
    %cst_17 = arith.constant 0.000000e+00 : f32
    %87 = vector.broadcast %cst_17 : f32 to vector<1x2xf32>
    %88 = arith.subf %87, %86 : vector<1x2xf32>
    %89 = math.exp %88 : vector<1x2xf32>
    %cst_18 = arith.constant 1.000000e+00 : f32
    %90 = vector.broadcast %cst_18 : f32 to vector<1x2xf32>
    %91 = arith.addf %90, %89 : vector<1x2xf32>
    %92 = tpu.reciprocal %91 {approx = true} : vector<1x2xf32> -> vector<1x2xf32>
    %93 = arith.mulf %86, %92 : vector<1x2xf32>
    %94 = arith.truncf %93 : vector<1x2xf32> to vector<1x2xbf16>
    %c0_19 = arith.constant 0 : index
    %c0_20 = arith.constant 0 : index
    %95 = vector.load %arg7[%c0_19, %c0_20] : memref<2x16xbf16, #tpu.memory_space<vmem>>, vector<2x16xbf16>
    %cst_21 = arith.constant dense<0.000000e+00> : vector<1x16xf32>
    %96 = tpu.matmul %94, %95, %cst_21 {dimension_numbers = #tpu.dot_dimension_numbers<[1], [0], [0], [1], [0, 0, 1, 1], [], []>} : vector<1x2xbf16>, vector<2x16xbf16>, vector<1x16xf32> -> vector<1x16xf32>
    %c0_22 = arith.constant 0 : index
    %c0_23 = arith.constant 0 : index
    %97 = vector.load %arg8[%c0_22, %c0_23] : memref<1x16xf32, #tpu.memory_space<vmem>>, vector<1x16xf32>
    %98 = arith.addf %96, %97 : vector<1x16xf32>
    %cst_24 = arith.constant 0.000000e+00 : f32
    %99 = vector.broadcast %cst_24 : f32 to vector<1x16xf32>
    %100 = arith.subf %99, %98 : vector<1x16xf32>
    %101 = math.exp %100 : vector<1x16xf32>
    %cst_25 = arith.constant 1.000000e+00 : f32
    %102 = vector.broadcast %cst_25 : f32 to vector<1x16xf32>
    %103 = arith.addf %102, %101 : vector<1x16xf32>
    %104 = tpu.reciprocal %103 {approx = true} : vector<1x16xf32> -> vector<1x16xf32>
    %105 = vector.broadcast %104 : vector<1x16xf32> to vector<16x16xf32>
    %106 = arith.mulf %77, %105 : vector<16x16xf32>
    %107 = arith.truncf %106 : vector<16x16xf32> to vector<16x16xbf16>
    %c0_26 = arith.constant 0 : index
    %c0_27 = arith.constant 0 : index
    %108 = vector.load %arg9[%c0_26, %c0_27] : memref<16x16xbf16, #tpu.memory_space<vmem>>, vector<16x16xbf16>
    %cst_28 = arith.constant dense<0.000000e+00> : vector<16x16xf32>
    %109 = tpu.matmul %107, %108, %cst_28 {dimension_numbers = #tpu.dot_dimension_numbers<[1], [0], [0], [1], [0, 0, 1, 1], [], []>} : vector<16x16xbf16>, vector<16x16xbf16>, vector<16x16xf32> -> vector<16x16xf32>
    %c0_29 = arith.constant 0 : index
    %c0_30 = arith.constant 0 : index
    %110 = vector.load %arg10[%c0_29, %c0_30] : memref<1x16xf32, #tpu.memory_space<vmem>>, vector<1x16xf32>
    %111 = vector.broadcast %110 : vector<1x16xf32> to vector<16x16xf32>
    %112 = arith.mulf %109, %111 : vector<16x16xf32>
    %c0_31 = arith.constant 0 : index
    %c0_32 = arith.constant 0 : index
    %113 = vector.load %arg11[%c0_31, %c0_32] : memref<1x16xf32, #tpu.memory_space<vmem>>, vector<1x16xf32>
    %114 = vector.broadcast %113 : vector<1x16xf32> to vector<16x16xf32>
    %115 = arith.addf %112, %114 : vector<16x16xf32>
    %116 = arith.truncf %115 : vector<16x16xf32> to vector<16x16xbf16>
    %c0_33 = arith.constant 0 : index
    %c0_34 = arith.constant 0 : index
    %117 = vector.load %arg12[%c0_33, %c0_34] : memref<16x32xbf16, #tpu.memory_space<vmem>>, vector<16x32xbf16>
    %cst_35 = arith.constant dense<0.000000e+00> : vector<16x32xf32>
    %118 = tpu.matmul %116, %117, %cst_35 {dimension_numbers = #tpu.dot_dimension_numbers<[1], [0], [0], [1], [0, 0, 1, 1], [], []>} : vector<16x16xbf16>, vector<16x32xbf16>, vector<16x32xf32> -> vector<16x32xf32>
    %c0_36 = arith.constant 0 : index
    %c0_37 = arith.constant 0 : index
    %119 = vector.load %arg13[%c0_36, %c0_37] : memref<1x32xf32, #tpu.memory_space<vmem>>, vector<1x32xf32>
    %120 = vector.broadcast %119 : vector<1x32xf32> to vector<16x32xf32>
    %121 = arith.mulf %118, %120 : vector<16x32xf32>
    %c0_38 = arith.constant 0 : index
    %c0_39 = arith.constant 0 : index
    %122 = vector.load %arg14[%c0_38, %c0_39] : memref<1x32xf32, #tpu.memory_space<vmem>>, vector<1x32xf32>
    %123 = vector.broadcast %122 : vector<1x32xf32> to vector<16x32xf32>
    %124 = arith.addf %121, %123 : vector<16x32xf32>
    %cst_40 = arith.constant 0.000000e+00 : f32
    %125 = vector.broadcast %cst_40 : f32 to vector<16x32xf32>
    %126 = arith.subf %125, %124 : vector<16x32xf32>
    %127 = math.exp %126 : vector<16x32xf32>
    %cst_41 = arith.constant 1.000000e+00 : f32
    %128 = vector.broadcast %cst_41 : f32 to vector<16x32xf32>
    %129 = arith.addf %128, %127 : vector<16x32xf32>
    %130 = tpu.reciprocal %129 {approx = true} : vector<16x32xf32> -> vector<16x32xf32>
    %131 = arith.mulf %124, %130 : vector<16x32xf32>
    %cst_42 = arith.constant dense<0.000000e+00> : vector<32xf32>
    %132 = vector.multi_reduction <add>, %131, %cst_42 [0] : vector<16x32xf32> to vector<32xf32>
    %133 = vector.shape_cast %132 : vector<32xf32> to vector<1x32xf32>
    %cst_43 = arith.constant 1.600000e+01 : f32
    %134 = vector.broadcast %cst_43 : f32 to vector<1x32xf32>
    %135 = arith.divf %133, %134 : vector<1x32xf32>
    %136 = arith.truncf %135 : vector<1x32xf32> to vector<1x32xbf16>
    %c0_44 = arith.constant 0 : index
    %c0_45 = arith.constant 0 : index
    %137 = vector.load %arg15[%c0_44, %c0_45] : memref<32x11xbf16, #tpu.memory_space<vmem>>, vector<32x11xbf16>
    %cst_46 = arith.constant dense<0.000000e+00> : vector<1x11xf32>
    %138 = tpu.matmul %136, %137, %cst_46 {dimension_numbers = #tpu.dot_dimension_numbers<[1], [0], [0], [1], [0, 0, 1, 1], [], []>} : vector<1x32xbf16>, vector<32x11xbf16>, vector<1x11xf32> -> vector<1x11xf32>
    %c0_47 = arith.constant 0 : index
    %c0_48 = arith.constant 0 : index
    %139 = vector.load %arg16[%c0_47, %c0_48] : memref<1x11xf32, #tpu.memory_space<vmem>>, vector<1x11xf32>
    %140 = arith.addf %138, %139 : vector<1x11xf32>
    %c0_49 = arith.constant 0 : index
    %c0_50 = arith.constant 0 : index
    %141 = vector.load %arg17[%c0_49, %c0_50] : memref<1x11xf32, #tpu.memory_space<vmem>>, vector<1x11xf32>
    %142 = arith.mulf %140, %141 : vector<1x11xf32>
    %c0_51 = arith.constant 0 : index
    %c0_52 = arith.constant 0 : index
    %143 = vector.load %arg18[%c0_51, %c0_52] : memref<1x11xf32, #tpu.memory_space<vmem>>, vector<1x11xf32>
    %144 = arith.addf %142, %143 : vector<1x11xf32>
    %145 = vector.extract_strided_slice %144 {offsets = [0, 0], sizes = [1, 10], strides = [1, 1]} : vector<1x11xf32> to vector<1x10xf32>
    %146 = vector.extract_strided_slice %144 {offsets = [0, 10], sizes = [1, 1], strides = [1, 1]} : vector<1x11xf32> to vector<1x1xf32>
    %cst_53 = arith.constant 0.000000e+00 : f32
    %147 = vector.broadcast %cst_53 : f32 to vector<1x1xf32>
    %148 = arith.subf %147, %146 : vector<1x1xf32>
    %149 = math.exp %148 : vector<1x1xf32>
    %cst_54 = arith.constant 1.000000e+00 : f32
    %150 = vector.broadcast %cst_54 : f32 to vector<1x1xf32>
    %151 = arith.addf %150, %149 : vector<1x1xf32>
    %152 = vector.broadcast %151 : vector<1x1xf32> to vector<1x10xf32>
    %153 = arith.mulf %145, %152 : vector<1x10xf32>
    %c0_55 = arith.constant 0 : index
    %c0_56 = arith.constant 0 : index
    %c0_57 = arith.constant 0 : index
    %154 = vector.load %arg19[%c0_55, %c0_56, %c0_57] : memref<1x1x10xf32, #tpu.memory_space<vmem>>, vector<1x1x10xf32>
    %155 = vector.shape_cast %154 : vector<1x1x10xf32> to vector<1x10xf32>
    %156 = vector.shape_cast %153 : vector<1x10xf32> to vector<1x1x10xf32>
    tpu.vector_store %arg19[%c0_55, %c0_56, %c0_57], %156 {strides = array<i32>} : memref<1x1x10xf32, #tpu.memory_space<vmem>>, vector<1x1x10xf32>,
    %c0_58 = arith.constant 0 : index
    %c0_59 = arith.constant 0 : index
    %c0_60 = arith.constant 0 : index
    %157 = vector.load %arg20[%c0_58, %c0_59, %c0_60] : memref<1x1x10xf32, #tpu.memory_space<vmem>>, vector<1x1x10xf32>
    %158 = vector.shape_cast %157 : vector<1x1x10xf32> to vector<1x10xf32>
    %159 = vector.shape_cast %145 : vector<1x10xf32> to vector<1x1x10xf32>
    tpu.vector_store %arg20[%c0_58, %c0_59, %c0_60], %159 {strides = array<i32>} : memref<1x1x10xf32, #tpu.memory_space<vmem>>, vector<1x1x10xf32>,
    %160 = tpu.reciprocal %151 {approx = true} : vector<1x1xf32> -> vector<1x1xf32>
    %c0_61 = arith.constant 0 : index
    %c0_62 = arith.constant 0 : index
    %c0_63 = arith.constant 0 : index
    %161 = vector.load %arg21[%c0_61, %c0_62, %c0_63] : memref<1x1x1xf32, #tpu.memory_space<vmem>>, vector<1x1x1xf32>
    %162 = vector.shape_cast %161 : vector<1x1x1xf32> to vector<1x1xf32>
    %163 = vector.shape_cast %160 : vector<1x1xf32> to vector<1x1x1xf32>
    tpu.vector_store %arg21[%c0_61, %c0_62, %c0_63], %163 {strides = array<i32>} : memref<1x1x1xf32, #tpu.memory_space<vmem>>, vector<1x1x1xf32>,
    return
  }
  func.func @transform_0(%arg0: i32) -> (i32, i32, i32, i32) {
    %c0_i32 = arith.constant 0 : i32
    %c0_i32_0 = arith.constant 0 : i32
    %c0_i32_1 = arith.constant 0 : i32
    %c0_i32_2 = arith.constant 0 : i32
    return %arg0, %c0_i32, %c0_i32_0, %c0_i32_1 : i32, i32, i32, i32
  }
  func.func @transform_1(%arg0: i32) -> (i32, i32) {
    %c0_i32 = arith.constant 0 : i32
    %c0_i32_0 = arith.constant 0 : i32
    %c0_i32_1 = arith.constant 0 : i32
    return %c0_i32, %c0_i32_0 : i32, i32
  }
  func.func @transform_2(%arg0: i32) -> (i32, i32) {
    %c0_i32 = arith.constant 0 : i32
    %c0_i32_0 = arith.constant 0 : i32
    %c0_i32_1 = arith.constant 0 : i32
    return %c0_i32, %c0_i32_0 : i32, i32
  }
  func.func @transform_3(%arg0: i32) -> (i32, i32) {
    %c0_i32 = arith.constant 0 : i32
    %c0_i32_0 = arith.constant 0 : i32
    %c0_i32_1 = arith.constant 0 : i32
    return %c0_i32, %c0_i32_0 : i32, i32
  }
  func.func @transform_4(%arg0: i32) -> (i32, i32) {
    %c0_i32 = arith.constant 0 : i32
    %c0_i32_0 = arith.constant 0 : i32
    %c0_i32_1 = arith.constant 0 : i32
    return %c0_i32, %c0_i32_0 : i32, i32
  }
  func.func @transform_5(%arg0: i32) -> (i32, i32) {
    %c0_i32 = arith.constant 0 : i32
    %c0_i32_0 = arith.constant 0 : i32
    %c0_i32_1 = arith.constant 0 : i32
    return %c0_i32, %c0_i32_0 : i32, i32
  }
  func.func @transform_6(%arg0: i32) -> (i32, i32) {
    %c0_i32 = arith.constant 0 : i32
    %c0_i32_0 = arith.constant 0 : i32
    %c0_i32_1 = arith.constant 0 : i32
    return %c0_i32, %c0_i32_0 : i32, i32
  }
  func.func @transform_7(%arg0: i32) -> (i32, i32) {
    %c0_i32 = arith.constant 0 : i32
    %c0_i32_0 = arith.constant 0 : i32
    %c0_i32_1 = arith.constant 0 : i32
    return %c0_i32, %c0_i32_0 : i32, i32
  }
  func.func @transform_8(%arg0: i32) -> (i32, i32) {
    %c0_i32 = arith.constant 0 : i32
    %c0_i32_0 = arith.constant 0 : i32
    %c0_i32_1 = arith.constant 0 : i32
    return %c0_i32, %c0_i32_0 : i32, i32
  }
  func.func @transform_9(%arg0: i32) -> (i32, i32) {
    %c0_i32 = arith.constant 0 : i32
    %c0_i32_0 = arith.constant 0 : i32
    %c0_i32_1 = arith.constant 0 : i32
    return %c0_i32, %c0_i32_0 : i32, i32
  }
  func.func @transform_10(%arg0: i32) -> (i32, i32) {
    %c0_i32 = arith.constant 0 : i32
    %c0_i32_0 = arith.constant 0 : i32
    %c0_i32_1 = arith.constant 0 : i32
    return %c0_i32, %c0_i32_0 : i32, i32
  }
  func.func @transform_11(%arg0: i32) -> (i32, i32) {
    %c0_i32 = arith.constant 0 : i32
    %c0_i32_0 = arith.constant 0 : i32
    %c0_i32_1 = arith.constant 0 : i32
    return %c0_i32, %c0_i32_0 : i32, i32
  }
  func.func @transform_12(%arg0: i32) -> (i32, i32) {
    %c0_i32 = arith.constant 0 : i32
    %c0_i32_0 = arith.constant 0 : i32
    %c0_i32_1 = arith.constant 0 : i32
    return %c0_i32, %c0_i32_0 : i32, i32
  }
  func.func @transform_13(%arg0: i32) -> (i32, i32) {
    %c0_i32 = arith.constant 0 : i32
    %c0_i32_0 = arith.constant 0 : i32
    %c0_i32_1 = arith.constant 0 : i32
    return %c0_i32, %c0_i32_0 : i32, i32
  }
  func.func @transform_14(%arg0: i32) -> (i32, i32) {
    %c0_i32 = arith.constant 0 : i32
    %c0_i32_0 = arith.constant 0 : i32
    %c0_i32_1 = arith.constant 0 : i32
    return %c0_i32, %c0_i32_0 : i32, i32
  }
  func.func @transform_15(%arg0: i32) -> (i32, i32) {
    %c0_i32 = arith.constant 0 : i32
    %c0_i32_0 = arith.constant 0 : i32
    %c0_i32_1 = arith.constant 0 : i32
    return %c0_i32, %c0_i32_0 : i32, i32
  }
  func.func @transform_16(%arg0: i32) -> (i32, i32) {
    %c0_i32 = arith.constant 0 : i32
    %c0_i32_0 = arith.constant 0 : i32
    %c0_i32_1 = arith.constant 0 : i32
    return %c0_i32, %c0_i32_0 : i32, i32
  }
  func.func @transform_17(%arg0: i32) -> (i32, i32) {
    %c0_i32 = arith.constant 0 : i32
    %c0_i32_0 = arith.constant 0 : i32
    %c0_i32_1 = arith.constant 0 : i32
    return %c0_i32, %c0_i32_0 : i32, i32
  }
  func.func @transform_18(%arg0: i32) -> (i32, i32, i32) {
    %c0_i32 = arith.constant 0 : i32
    %c0_i32_0 = arith.constant 0 : i32
    %c0_i32_1 = arith.constant 0 : i32
    return %arg0, %c0_i32, %c0_i32_0 : i32, i32, i32
  }
  func.func @transform_19(%arg0: i32) -> (i32, i32, i32) {
    %c0_i32 = arith.constant 0 : i32
    %c0_i32_0 = arith.constant 0 : i32
    %c0_i32_1 = arith.constant 0 : i32
    return %arg0, %c0_i32, %c0_i32_0 : i32, i32, i32
  }
  func.func @transform_20(%arg0: i32) -> (i32, i32, i32) {
    %c0_i32 = arith.constant 0 : i32
    %c0_i32_0 = arith.constant 0 : i32
    %c0_i32_1 = arith.constant 0 : i32
    return %arg0, %c0_i32, %c0_i32_0 : i32, i32, i32
  }
}

</mosaic_0001>

<llo_original>
// kernel: gen_odin_forward.3
$region0: #{gen_odin_forward.3}
  #allocation0 [shape = 'u32[]', space=smem, size = 0x4, offset = 0x4, fixed_abs, tag = 'smem constant byte address 0x4 - core index']
  #allocation1 [shape = 'u32[144,128]{1,0:T(1,128)}', space=vmem, size = 0x12000, scoped, tag = 'internal scratch']
  %s0 = inlined_call_operand.vmem [shape: bf16[2,64,27], index: 0, kind: input, shape index: {}]
  %s1 = inlined_call_operand.vmem [shape: bf16[27,8], index: 1, kind: input, shape index: {}]
  %s2 = inlined_call_operand.vmem [shape: f32[1,8], index: 2, kind: input, shape index: {}]
  %s3 = inlined_call_operand.vmem [shape: f32[1,8], index: 3, kind: input, shape index: {}]
  %s4 = inlined_call_operand.vmem [shape: bf16[8,16], index: 4, kind: input, shape index: {}]
  %s5 = inlined_call_operand.vmem [shape: f32[1,16], index: 5, kind: input, shape index: {}]
  %s6 = inlined_call_operand.vmem [shape: f32[1,16], index: 6, kind: input, shape index: {}]
  %s7 = inlined_call_operand.vmem [shape: bf16[2,64,8], index: 7, kind: output, shape index: {0}]
  %s8 = inlined_call_operand.vmem [shape: bf16[2,64,16], index: 8, kind: output, shape index: {1}]
  %9 = xla_tuple %s7, %s8
  %s10 = sld [smem:[#allocation0]]
  $region69: #{gen_odin_forward.3} parent=0
    _
  %s12 = ssub.s32 1, %s10
  %s13 = scalar_select 0, %s12, %s10
  loop: start=0, step=1, limit=4
  $region2: #{gen_odin_forward.3} parent=0 // loop_pre_header
    _
  $region3: #{gen_odin_forward.3} parent=0 // loop_header
    %s15 = sphi 0, %s19
    %p16 = scmp.ge.s32.totalorder %s15, 4
    %s25 = sphi 0, %s27
    %s28 = sphi 0, %s25
    %s29 = sphi 0, %s28
    %s45 = sphi 0, %s29
    %s49 = sphi 0, %s49
    %s51 = sphi 0, %s49
    %s52 = sphi 0, %s51
    %s66 = sphi 0, %s52
    %s70 = sphi 0, %s70
    %s72 = sphi 0, %s70
    %s73 = sphi 0, %s72
    %s87 = sphi 0, %s73
    %s91 = sphi 0, %s91
    %s93 = sphi 0, %s91
    %s94 = sphi 0, %s93
    %s108 = sphi 0, %s94
    %s112 = sphi 0, %s112
    %s114 = sphi 0, %s112
    %s115 = sphi 0, %s114
    %s129 = sphi 0, %s115
    %s133 = sphi 0, %s133
    %s135 = sphi 0, %s133
    %s136 = sphi 0, %s135
    %s150 = sphi 0, %s136
    %s154 = sphi 0, %s154
    %s156 = sphi 0, %s154
    %s157 = sphi 0, %s156
    %s171 = sphi 0, %s157
    %s177 = sphi 0, %s179
    %s180 = sphi 0, %s177
    %s181 = sphi 0, %s180
    %s197 = sphi 0, %s181
    %s203 = sphi 0, %s205
    %s206 = sphi 0, %s203
    %s207 = sphi 0, %s206
    %s223 = sphi 0, %s207
  $region4: #{gen_odin_forward.3} parent=0 // loop_header_branch
    %18 = sbr.rel (%p16) target = $region8
  $region5: #{gen_odin_forward.3} parent=0 // loop_body
    %s20 = ssub.s32 %s15, 1
    %s21 = ssub.s32 %s15, 2
    %s22 = sadd.s32 %s15, 1
    %s23 = ssub.s32 %s15, %s22
    %p24 = scmp.eq.s32.totalorder %s23, 0
    %s26 = sadd.s32 %s25, 1
    %s27 = scalar_select %p24, %s25, %s26
    %p30 = pneg %p24
    %p31 = scmp.eq.s32.totalorder %s15, 1
    %p32 = por %p30, %p31
    %p33 = scmp.ne.s32.totalorder %s25, %s28
    %p34 = scmp.eq.s32.totalorder %s15, 0
    %p35 = por %p33, %p34
    %p36 = scmp.ne.s32.totalorder %s25, %s28
    %p37 = scmp.eq.s32.totalorder %s20, 1
    %p38 = por %p36, %p37
    %p39 = scmp.ne.s32.totalorder %s28, %s29
    %p40 = scmp.eq.s32.totalorder %s20, 0
    %p41 = por %p39, %p40
    %p42 = scmp.ne.s32.totalorder %s28, %s29
    %p43 = scmp.eq.s32.totalorder %s21, 1
    %p44 = por %p42, %p43
    %p46 = scmp.ne.s32.totalorder %s29, %s45
    %p47 = scmp.eq.s32.totalorder %s21, 0
    %p48 = por %p46, %p47
    %s50 = sadd.s32 %s49, 1
    %p53 = scmp.eq.s32.totalorder %s15, 1
    %p54 = scmp.ne.s32.totalorder %s49, %s51
    %p55 = scmp.eq.s32.totalorder %s15, 0
    %p56 = por %p54, %p55
    %p57 = scmp.ne.s32.totalorder %s49, %s51
    %p58 = scmp.eq.s32.totalorder %s20, 1
    %p59 = por %p57, %p58
    %p60 = scmp.ne.s32.totalorder %s51, %s52
    %p61 = scmp.eq.s32.totalorder %s20, 0
    %p62 = por %p60, %p61
    %p63 = scmp.ne.s32.totalorder %s51, %s52
    %p64 = scmp.eq.s32.totalorder %s21, 1
    %p65 = por %p63, %p64
    %p67 = scmp.ne.s32.totalorder %s52, %s66
    %p68 = scmp.eq.s32.totalorder %s21, 0
    %p69 = por %p67, %p68
    %s71 = sadd.s32 %s70, 1
    %p74 = scmp.eq.s32.totalorder %s15, 1
    %p75 = scmp.ne.s32.totalorder %s70, %s72
    %p76 = scmp.eq.s32.totalorder %s15, 0
    %p77 = por %p75, %p76
    %p78 = scmp.ne.s32.totalorder %s70, %s72
    %p79 = scmp.eq.s32.totalorder %s20, 1
    %p80 = por %p78, %p79
    %p81 = scmp.ne.s32.totalorder %s72, %s73
    %p82 = scmp.eq.s32.totalorder %s20, 0
    %p83 = por %p81, %p82
    %p84 = scmp.ne.s32.totalorder %s72, %s73
    %p85 = scmp.eq.s32.totalorder %s21, 1
    %p86 = por %p84, %p85
    %p88 = scmp.ne.s32.totalorder %s73, %s87
    %p89 = scmp.eq.s32.totalorder %s21, 0
    %p90 = por %p88, %p89
    %s92 = sadd.s32 %s91, 1
    %p95 = scmp.eq.s32.totalorder %s15, 1
    %p96 = scmp.ne.s32.totalorder %s91, %s93
    %p97 = scmp.eq.s32.totalorder %s15, 0
    %p98 = por %p96, %p97
    %p99 = scmp.ne.s32.totalorder %s91, %s93
    %p100 = scmp.eq.s32.totalorder %s20, 1
    %p101 = por %p99, %p100
    %p102 = scmp.ne.s32.totalorder %s93, %s94
    %p103 = scmp.eq.s32.totalorder %s20, 0
    %p104 = por %p102, %p103
    %p105 = scmp.ne.s32.totalorder %s93, %s94
    %p106 = scmp.eq.s32.totalorder %s21, 1
    %p107 = por %p105, %p106
    %p109 = scmp.ne.s32.totalorder %s94, %s108
    %p110 = scmp.eq.s32.totalorder %s21, 0
    %p111 = por %p109, %p110
    %s113 = sadd.s32 %s112, 1
    %p116 = scmp.eq.s32.totalorder %s15, 1
    %p117 = scmp.ne.s32.totalorder %s112, %s114
    %p118 = scmp.eq.s32.totalorder %s15, 0
    %p119 = por %p117, %p118
    %p120 = scmp.ne.s32.totalorder %s112, %s114
    %p121 = scmp.eq.s32.totalorder %s20, 1
    %p122 = por %p120, %p121
    %p123 = scmp.ne.s32.totalorder %s114, %s115
    %p124 = scmp.eq.s32.totalorder %s20, 0
    %p125 = por %p123, %p124
    %p126 = scmp.ne.s32.totalorder %s114, %s115
    %p127 = scmp.eq.s32.totalorder %s21, 1
    %p128 = por %p126, %p127
    %p130 = scmp.ne.s32.totalorder %s115, %s129
    %p131 = scmp.eq.s32.totalorder %s21, 0
    %p132 = por %p130, %p131
    %s134 = sadd.s32 %s133, 1
    %p137 = scmp.eq.s32.totalorder %s15, 1
    %p138 = scmp.ne.s32.totalorder %s133, %s135
    %p139 = scmp.eq.s32.totalorder %s15, 0
    %p140 = por %p138, %p139
    %p141 = scmp.ne.s32.totalorder %s133, %s135
    %p142 = scmp.eq.s32.totalorder %s20, 1
    %p143 = por %p141, %p142
    %p144 = scmp.ne.s32.totalorder %s135, %s136
    %p145 = scmp.eq.s32.totalorder %s20, 0
    %p146 = por %p144, %p145
    %p147 = scmp.ne.s32.totalorder %s135, %s136
    %p148 = scmp.eq.s32.totalorder %s21, 1
    %p149 = por %p147, %p148
    %p151 = scmp.ne.s32.totalorder %s136, %s150
    %p152 = scmp.eq.s32.totalorder %s21, 0
    %p153 = por %p151, %p152
    %s155 = sadd.s32 %s154, 1
    %p158 = scmp.eq.s32.totalorder %s15, 1
    %p159 = scmp.ne.s32.totalorder %s154, %s156
    %p160 = scmp.eq.s32.totalorder %s15, 0
    %p161 = por %p159, %p160
    %p162 = scmp.ne.s32.totalorder %s154, %s156
    %p163 = scmp.eq.s32.totalorder %s20, 1
    %p164 = por %p162, %p163
    %p165 = scmp.ne.s32.totalorder %s156, %s157
    %p166 = scmp.eq.s32.totalorder %s20, 0
    %p167 = por %p165, %p166
    %p168 = scmp.ne.s32.totalorder %s156, %s157
    %p169 = scmp.eq.s32.totalorder %s21, 1
    %p170 = por %p168, %p169
    %p172 = scmp.ne.s32.totalorder %s157, %s171
    %p173 = scmp.eq.s32.totalorder %s21, 0
    %p174 = por %p172, %p173
    %s175 = ssub.s32 %s15, %s22
    %p176 = scmp.eq.s32.totalorder %s175, 0
    %s178 = sadd.s32 %s177, 1
    %s179 = scalar_select %p176, %s177, %s178
    %p182 = pneg %p176
    %p183 = scmp.eq.s32.totalorder %s15, 1
    %p184 = por %p182, %p183
    %p185 = scmp.ne.s32.totalorder %s177, %s180
    %p186 = scmp.eq.s32.totalorder %s15, 0
    %p187 = por %p185, %p186
    %p188 = scmp.ne.s32.totalorder %s177, %s180
    %p189 = scmp.eq.s32.totalorder %s20, 1
    %p190 = por %p188, %p189
    %p191 = scmp.ne.s32.totalorder %s180, %s181
    %p192 = scmp.eq.s32.totalorder %s20, 0
    %p193 = por %p191, %p192
    %p194 = scmp.ne.s32.totalorder %s180, %s181
    %p195 = scmp.eq.s32.totalorder %s21, 1
    %p196 = por %p194, %p195
    %p198 = scmp.ne.s32.totalorder %s181, %s197
    %p199 = scmp.eq.s32.totalorder %s21, 0
    %p200 = por %p198, %p199
    %s201 = ssub.s32 %s15, %s22
    %p202 = scmp.eq.s32.totalorder %s201, 0
    %s204 = sadd.s32 %s203, 1
    %s205 = scalar_select %p202, %s203, %s204
    %p208 = pneg %p202
    %p209 = scmp.eq.s32.totalorder %s15, 1
    %p210 = por %p208, %p209
    %p211 = scmp.ne.s32.totalorder %s203, %s206
    %p212 = scmp.eq.s32.totalorder %s15, 0
    %p213 = por %p211, %p212
    %p214 = scmp.ne.s32.totalorder %s203, %s206
    %p215 = scmp.eq.s32.totalorder %s20, 1
    %p216 = por %p214, %p215
    %p217 = scmp.ne.s32.totalorder %s206, %s207
    %p218 = scmp.eq.s32.totalorder %s20, 0
    %p219 = por %p217, %p218
    %p220 = scmp.ne.s32.totalorder %s206, %s207
    %p221 = scmp.eq.s32.totalorder %s21, 1
    %p222 = por %p220, %p221
    %p224 = scmp.ne.s32.totalorder %s207, %s223
    %p225 = scmp.eq.s32.totalorder %s21, 0
    %p226 = por %p224, %p225
    %p227 = scmp.le.s32.totalorder 1, %s15
    %p228 = scmp.lt.s32.totalorder %s15, 3
    %p229 = pnand %p227, %p228
    %p230 = pneg %p229
    // Predicated region
    $region9: #{gen_odin_forward.3} parent=5 // pred_check
      _
    $region10: #{gen_odin_forward.3} parent=5 // pred_check_branch
      %232 = sbr.rel (%p229) target = $region12
    $region11: #{gen_odin_forward.3} parent=5 // pred_region
      %s233 = ssub.s32 %s15, 1
      // Predicated region
      $region13: #{gen_odin_forward.3} parent=11 // pred_check
        %p234 = pneg %p62
      $region14: #{gen_odin_forward.3} parent=11 // pred_check_branch
        %236 = sbr.rel (%p234) target = $region16
      $region15: #{gen_odin_forward.3} parent=11 // pred_region
        _
      $region16: #{gen_odin_forward.3} parent=11 // pred_fallthru
        _
      // Predicated region
      $region17: #{gen_odin_forward.3} parent=11 // pred_check
        %p237 = pneg %p83
      $region18: #{gen_odin_forward.3} parent=11 // pred_check_branch
        %239 = sbr.rel (%p237) target = $region20
      $region19: #{gen_odin_forward.3} parent=11 // pred_region
        _
      $region20: #{gen_odin_forward.3} parent=11 // pred_fallthru
        _
      // Predicated region
      $region21: #{gen_odin_forward.3} parent=11 // pred_check
        %p240 = pneg %p104
      $region22: #{gen_odin_forward.3} parent=11 // pred_check_branch
        %242 = sbr.rel (%p240) target = $region24
      $region23: #{gen_odin_forward.3} parent=11 // pred_region
        _
      $region24: #{gen_odin_forward.3} parent=11 // pred_fallthru
        _
      // Predicated region
      $region25: #{gen_odin_forward.3} parent=11 // pred_check
        %p243 = pneg %p125
      $region26: #{gen_odin_forward.3} parent=11 // pred_check_branch
        %245 = sbr.rel (%p243) target = $region28
      $region27: #{gen_odin_forward.3} parent=11 // pred_region
        _
      $region28: #{gen_odin_forward.3} parent=11 // pred_fallthru
        _
      // Predicated region
      $region29: #{gen_odin_forward.3} parent=11 // pred_check
        %p246 = pneg %p146
      $region30: #{gen_odin_forward.3} parent=11 // pred_check_branch
        %248 = sbr.rel (%p246) target = $region32
      $region31: #{gen_odin_forward.3} parent=11 // pred_region
        _
      $region32: #{gen_odin_forward.3} parent=11 // pred_fallthru
        _
      // Predicated region
      $region33: #{gen_odin_forward.3} parent=11 // pred_check
        %p249 = pneg %p167
      $region34: #{gen_odin_forward.3} parent=11 // pred_check_branch
        %251 = sbr.rel (%p249) target = $region36
      $region35: #{gen_odin_forward.3} parent=11 // pred_region
        _
      $region36: #{gen_odin_forward.3} parent=11 // pred_fallthru
        _
    $region12: #{gen_odin_forward.3} parent=5 // pred_fallthru
      _
    %p252 = scmp.lt.s32.totalorder %s15, 2
    // Predicated region
    $region37: #{gen_odin_forward.3} parent=5 // pred_check
      %p253 = pneg %p252
    $region38: #{gen_odin_forward.3} parent=5 // pred_check_branch
      %255 = sbr.rel (%p253) target = $region40
    $region39: #{gen_odin_forward.3} parent=5 // pred_region
      // Predicated region
      $region41: #{gen_odin_forward.3} parent=39 // pred_check
        %p256 = pneg %p35
      $region42: #{gen_odin_forward.3} parent=39 // pred_check_branch
        %258 = sbr.rel (%p256) target = $region44
      $region43: #{gen_odin_forward.3} parent=39 // pred_region
        %p259 = scmp.lt.s32.totalorder %s15, 1
        %s260 = scalar_select %p259, %s15, 1
        %s261 = smul.addr %s260, 8
        %s262 = smul.addr %s261, 4
        %s263 = scalar_lea.vmem %s0, %s262
      $region44: #{gen_odin_forward.3} parent=39 // pred_fallthru
        _
    $region40: #{gen_odin_forward.3} parent=5 // pred_fallthru
      _
    %p264 = scmp.le.s32.totalorder 1, %s15
    %p265 = scmp.lt.s32.totalorder %s15, 3
    %p266 = pnand %p264, %p265
    %p267 = pneg %p266
    // Predicated region
    $region45: #{gen_odin_forward.3} parent=5 // pred_check
      _
    $region46: #{gen_odin_forward.3} parent=5 // pred_check_branch
      %269 = sbr.rel (%p266) target = $region48
    $region47: #{gen_odin_forward.3} parent=5 // pred_region
      %s270 = ssub.s32 %s15, 1
      %p271 = scmp.lt.s32.totalorder %s20, 1
      %s272 = scalar_select %p271, %s20, 1
      %s273 = smul.addr %s272, 8
      %s274 = smul.addr %s273, 4
      %s275 = scalar_lea.vmem %s0, %s274
      %p276 = pneg %p41
      %p277 = pneg %p38
      %p278 = pneg %p62
      %p279 = pneg %p59
      %p280 = pneg %p83
      %p281 = pneg %p80
      %p282 = pneg %p104
      %p283 = pneg %p101
      %p284 = pneg %p125
      %p285 = pneg %p122
      %p286 = pneg %p146
      %p287 = pneg %p143
      %p288 = pneg %p167
      %p289 = pneg %p164
      %p290 = pneg %p193
      %p291 = pneg %p190
      %p292 = scmp.lt.s32.totalorder %s20, 1
      %s293 = scalar_select %p292, %s20, 1
      %s294 = smul.addr %s293, 8
      %s295 = smul.addr %s294, 4
      %s296 = scalar_lea.vmem %s7, %s295
      %p297 = pneg %p219
      %p298 = pneg %p216
      %p299 = scmp.lt.s32.totalorder %s20, 1
      %s300 = scalar_select %p299, %s20, 1
      %s301 = smul.addr %s300, 8
      %s302 = smul.addr %s301, 4
      %s303 = scalar_lea.vmem %s8, %s302
      %p304 = scmp.lt.s32.totalorder %s20, 1
      %s305 = scalar_select %p304, %s20, 1
      %s306 = smul.addr %s305, 8
      %s307 = smul.addr %s306, 4
      %s308 = scalar_lea.vmem %s0, %s307
      %p309 = scmp.lt.s32.totalorder %s20, 1
      %s310 = scalar_select %p309, %s20, 1
      %s311 = smul.addr %s310, 8
      %s312 = smul.addr %s311, 4
      %s313 = scalar_lea.vmem %s7, %s312
      %p314 = scmp.lt.s32.totalorder %s20, 1
      %s315 = scalar_select %p314, %s20, 1
      %s316 = smul.addr %s315, 8
      %s317 = smul.addr %s316, 4
      %s318 = scalar_lea.vmem %s8, %s317
      %v320 = vld [vmem:[%s308] sm:$0xf]
      %v321 = vld [vmem:[%s308 + $0x4] sm:$0xf]
      %v322 = vld [vmem:[%s308 + $0x8] sm:$0xf]
      %v323 = vld [vmem:[%s308 + $0xc] sm:$0xf]
      %v324 = vld [vmem:[%s308 + $0x10] sm:$0xf]
      %v325 = vld [vmem:[%s308 + $0x14] sm:$0xf]
      %v326 = vld [vmem:[%s308 + $0x18] sm:$0xf]
      %v327 = vld [vmem:[%s308 + $0x1c] sm:$0xf]
      %v328 = vld [vmem:[%s1] sm:$0xf]
      %v329 = vld [vmem:[%s1 + $0x4] sm:$0xf]
      %v330 = vld [vmem:[%s1 + $0x8] sm:$0xf]
      %v331 = vld [vmem:[%s1 + $0xc] sm:$0x3]
      %v340 = vunpack.c.l.b16 %v320
      %v341 = vunpack.c.l.b16 %v321
      %v342 = vunpack.c.l.b16 %v322
      %v343 = vunpack.c.l.b16 %v323
      %v344 = vunpack.c.l.b16 %v324
      %v345 = vunpack.c.l.b16 %v325
      %v346 = vunpack.c.l.b16 %v326
      %v347 = vunpack.c.l.b16 %v327
      %v348 = vpack.c.b16 %v341, %v340
      %v349 = vpack.c.b16 %v343, %v342
      %v350 = vpack.c.b16 %v345, %v344
      %v351 = vpack.c.b16 %v347, %v346
      %v356 = vunpack.c.l.b16 %v328
      %v357 = vunpack.c.l.b16 %v329
      %v358 = vunpack.c.l.b16 %v330
      %v359 = vunpack.c.l.b16 %v331
      %v360 = vpack.c.b16 %v357, %v356
      %v361 = vpack.c.b16 %v359, %v358
      %vm363 = vcmask 220160
      %v365 = vsel %vm363, %v348, 0
      %v368 = vsel %vm363, %v349, 0
      %v371 = vsel %vm363, %v350, 0
      %v374 = vsel %vm363, %v351, 0
      %vm376 = vcmask 1044480
      %vm377 = vcmask 1045504
      %v378 = vsel %vm376, 4294967295, 65535
      %v379 = vsel %vm377, %v378, 0
      %v381 = vand.u32 %v361, %v379
      %383 = vmatprep.subr.bf16.mxu0 0
      %384 = vmatpush1.bf16.msra.mxu0 %v360
      %385 = vmatprep.subr.bf16.mxu0 0
      %386 = vmatpush1.bf16.msra.mxu0 %v381
      %387 = vmatprep.subr.bf16.mxu0 0
      %388 = vmatpush1.bf16.msra.mxu0 0
      %389 = vmatprep.subr.bf16.mxu0 0
      %390 = vmatpush1.bf16.msra.mxu0 0
      %391 = vmatprep.subr.bf16.mxu0 0
      %392 = vmatpush1.bf16.msra.mxu0 0
      %393 = vmatprep.subr.bf16.mxu0 0
      %394 = vmatpush1.bf16.msra.mxu0 0
      %395 = vmatprep.subr.bf16.mxu0 0
      %396 = vmatpush1.bf16.msra.mxu0 0
      %397 = vmatprep.subr.bf16.mxu0 0
      %398 = vmatpush1.bf16.msra.mxu0 0
      %399 = vmatprep.subr.bf16.mxu0 0
      %400 = vmatpush1.bf16.msra.mxu0 0
      %401 = vmatprep.subr.bf16.mxu0 0
      %402 = vmatpush1.bf16.msra.mxu0 0
      %403 = vmatprep.subr.bf16.mxu0 0
      %404 = vmatpush1.bf16.msra.mxu0 0
      %405 = vmatprep.subr.bf16.mxu0 0
      %406 = vmatpush1.bf16.msra.mxu0 0
      %407 = vmatprep.subr.bf16.mxu0 0
      %408 = vmatpush1.bf16.msra.mxu0 0
      %409 = vmatprep.subr.bf16.mxu0 0
      %410 = vmatpush1.bf16.msra.mxu0 0
      %411 = vmatprep.subr.bf16.mxu0 0
      %412 = vmatpush1.bf16.msra.mxu0 0
      %413 = vmatprep.subr.bf16.mxu0 0
      %414 = vmatpush1.bf16.msra.mxu0 0
      %415 = vmatprep.mubr.bf16.mxu0 0
      %416 = vmatmul.mubr.bf16.gmra.mrb[0].mxu0 %v365
      %v417 = vpop.f32.mrb[0].mxu0
      %v418 = vadd.f32 0.0, %v417
      %v419 = vpop.f32.mrb[0].mxu0
      %v420 = vpop.f32.mrb[0].mxu0
      %v421 = vadd.f32 0.0, %v420
      %v422 = vpop.f32.mrb[0].mxu0
      %423 = vmatprep.mubr.bf16.mxu0 0
      %424 = vmatmul.mubr.bf16.gmra.mrb[0].mxu0 %v368
      %v425 = vpop.f32.mrb[0].mxu0
      %v426 = vadd.f32 0.0, %v425
      %v427 = vpop.f32.mrb[0].mxu0
      %v428 = vpop.f32.mrb[0].mxu0
      %v429 = vadd.f32 0.0, %v428
      %v430 = vpop.f32.mrb[0].mxu0
      %431 = vmatprep.mubr.bf16.mxu0 0
      %432 = vmatmul.mubr.bf16.gmra.mrb[0].mxu0 %v371
      %v433 = vpop.f32.mrb[0].mxu0
      %v434 = vadd.f32 0.0, %v433
      %v435 = vpop.f32.mrb[0].mxu0
      %v436 = vpop.f32.mrb[0].mxu0
      %v437 = vadd.f32 0.0, %v436
      %v438 = vpop.f32.mrb[0].mxu0
      %439 = vmatprep.mubr.bf16.mxu0 0
      %440 = vmatmul.mubr.bf16.gmra.mrb[0].mxu0 %v374
      %v441 = vpop.f32.mrb[0].mxu0
      %v442 = vadd.f32 0.0, %v441
      %v443 = vpop.f32.mrb[0].mxu0
      %v444 = vpop.f32.mrb[0].mxu0
      %v445 = vadd.f32 0.0, %v444
      %v446 = vpop.f32.mrb[0].mxu0
      %447 = vdwg.mxu0
      %v448 = vld [vmem:[%s2] sm:$0x1]
      %v450 = vlaneseq
      %v451 = vshrl.u32 %v450, 7
      %v452 = vsub.s32 0, %v451
      %v453 = vrot.slane %v448, %v452
      %v455 = vmul.f32 %v418, %v453
      %v456 = vmul.f32 %v421, %v453
      %v457 = vmul.f32 %v426, %v453
      %v458 = vmul.f32 %v429, %v453
      %v459 = vmul.f32 %v434, %v453
      %v460 = vmul.f32 %v437, %v453
      %v461 = vmul.f32 %v442, %v453
      %v462 = vmul.f32 %v445, %v453
      %v463 = vld [vmem:[%s3] sm:$0x1]
      %v465 = vlaneseq
      %v466 = vshrl.u32 %v465, 7
      %v467 = vsub.s32 0, %v466
      %v468 = vrot.slane %v463, %v467
      %v470 = vadd.f32 %v455, %v468
      %v471 = vadd.f32 %v456, %v468
      %v472 = vadd.f32 %v457, %v468
      %v473 = vadd.f32 %v458, %v468
      %v474 = vadd.f32 %v459, %v468
      %v475 = vadd.f32 %v460, %v468
      %v476 = vadd.f32 %v461, %v468
      %v477 = vadd.f32 %v462, %v468
      %v478 = vsub.f32 0.0, %v470
      %v479 = vsub.f32 0.0, %v471
      %v480 = vsub.f32 0.0, %v472
      %v481 = vsub.f32 0.0, %v473
      %v482 = vsub.f32 0.0, %v474
      %v483 = vsub.f32 0.0, %v475
      %v484 = vsub.f32 0.0, %v476
      %v485 = vsub.f32 0.0, %v477
      %v486 = vmul.f32 %v478, 1.442695
      %v487 = vpow.pop %v486
      %v488 = vmul.f32 %v479, 1.442695
      %v489 = vpow.pop %v488
      %v490 = vmul.f32 %v480, 1.442695
      %v491 = vpow.pop %v490
      %v492 = vmul.f32 %v481, 1.442695
      %v493 = vpow.pop %v492
      %v494 = vmul.f32 %v482, 1.442695
      %v495 = vpow.pop %v494
      %v496 = vmul.f32 %v483, 1.442695
      %v497 = vpow.pop %v496
      %v498 = vmul.f32 %v484, 1.442695
      %v499 = vpow.pop %v498
      %v500 = vmul.f32 %v485, 1.442695
      %v501 = vpow.pop %v500
      %v502 = vadd.f32 %v487, 1.0
      %v503 = vadd.f32 %v489, 1.0
      %v504 = vadd.f32 %v491, 1.0
      %v505 = vadd.f32 %v493, 1.0
      %v506 = vadd.f32 %v495, 1.0
      %v507 = vadd.f32 %v497, 1.0
      %v508 = vadd.f32 %v499, 1.0
      %v509 = vadd.f32 %v501, 1.0
      %v510 = vrcp.pop %v502
      %v511 = vrcp.pop %v503
      %v512 = vrcp.pop %v504
      %v513 = vrcp.pop %v505
      %v514 = vrcp.pop %v506
      %v515 = vrcp.pop %v507
      %v516 = vrcp.pop %v508
      %v517 = vrcp.pop %v509
      %v518 = vmul.f32 %v470, %v510
      %v519 = vmul.f32 %v471, %v511
      %v520 = vmul.f32 %v472, %v512
      %v521 = vmul.f32 %v473, %v513
      %v522 = vmul.f32 %v474, %v514
      %v523 = vmul.f32 %v475, %v515
      %v524 = vmul.f32 %v476, %v516
      %v525 = vmul.f32 %v477, %v517
      %v526 = vpack.c.bf16 %v519, %v518
      %v527 = vpack.c.bf16 %v521, %v520
      %v528 = vpack.c.bf16 %v523, %v522
      %v529 = vpack.c.bf16 %v525, %v524
      %v534 = vunpack.c.l.b16 %v526
      %v535 = vunpack.c.h.b16 %v526
      %v536 = vunpack.c.l.b16 %v527
      %v537 = vunpack.c.h.b16 %v527
      %v538 = vunpack.c.l.b16 %v528
      %v539 = vunpack.c.h.b16 %v528
      %v540 = vunpack.c.l.b16 %v529
      %v541 = vunpack.c.h.b16 %v529
      %v542 = vpack.c.b16 %v534, %v534
      %v543 = vpack.c.b16 %v535, %v535
      %v544 = vpack.c.b16 %v536, %v536
      %v545 = vpack.c.b16 %v537, %v537
      %v546 = vpack.c.b16 %v538, %v538
      %v547 = vpack.c.b16 %v539, %v539
      %v548 = vpack.c.b16 %v540, %v540
      %v549 = vpack.c.b16 %v541, %v541
      %vm558 = vcmask 60416
      %559 = vst.msk [vmem:[%s313] sm:$0xf] %vm558, %v542
      %560 = vst.msk [vmem:[%s313 + $0x4] sm:$0xf] %vm558, %v543
      %561 = vst.msk [vmem:[%s313 + $0x8] sm:$0xf] %vm558, %v544
      %562 = vst.msk [vmem:[%s313 + $0xc] sm:$0xf] %vm558, %v545
      %563 = vst.msk [vmem:[%s313 + $0x10] sm:$0xf] %vm558, %v546
      %564 = vst.msk [vmem:[%s313 + $0x14] sm:$0xf] %vm558, %v547
      %565 = vst.msk [vmem:[%s313 + $0x18] sm:$0xf] %vm558, %v548
      %566 = vst.msk [vmem:[%s313 + $0x1c] sm:$0xf] %vm558, %v549
      %v567 = vld [vmem:[%s4] sm:$0xf]
      %vm568 = vcmask 64512
      %v570 = vsel %vm568, %v526, 0
      %v573 = vsel %vm568, %v527, 0
      %v576 = vsel %vm568, %v528, 0
      %v579 = vsel %vm568, %v529, 0
      %vm581 = vcmask 1043456
      %v583 = vsel %vm581, %v567, 0
      %585 = vmatprep.subr.bf16.mxu0 0
      %586 = vmatpush1.bf16.msra.mxu0 %v583
      %587 = vmatprep.subr.bf16.mxu0 0
      %588 = vmatpush1.bf16.msra.mxu0 0
      %589 = vmatprep.subr.bf16.mxu0 0
      %590 = vmatpush1.bf16.msra.mxu0 0
      %591 = vmatprep.subr.bf16.mxu0 0
      %592 = vmatpush1.bf16.msra.mxu0 0
      %593 = vmatprep.subr.bf16.mxu0 0
      %594 = vmatpush1.bf16.msra.mxu0 0
      %595 = vmatprep.subr.bf16.mxu0 0
      %596 = vmatpush1.bf16.msra.mxu0 0
      %597 = vmatprep.subr.bf16.mxu0 0
      %598 = vmatpush1.bf16.msra.mxu0 0
      %599 = vmatprep.subr.bf16.mxu0 0
      %600 = vmatpush1.bf16.msra.mxu0 0
      %601 = vmatprep.subr.bf16.mxu0 0
      %602 = vmatpush1.bf16.msra.mxu0 0
      %603 = vmatprep.subr.bf16.mxu0 0
      %604 = vmatpush1.bf16.msra.mxu0 0
      %605 = vmatprep.subr.bf16.mxu0 0
      %606 = vmatpush1.bf16.msra.mxu0 0
      %607 = vmatprep.subr.bf16.mxu0 0
      %608 = vmatpush1.bf16.msra.mxu0 0
      %609 = vmatprep.subr.bf16.mxu0 0
      %610 = vmatpush1.bf16.msra.mxu0 0
      %611 = vmatprep.subr.bf16.mxu0 0
      %612 = vmatpush1.bf16.msra.mxu0 0
      %613 = vmatprep.subr.bf16.mxu0 0
      %614 = vmatpush1.bf16.msra.mxu0 0
      %615 = vmatprep.subr.bf16.mxu0 0
      %616 = vmatpush1.bf16.msra.mxu0 0
      %617 = vmatprep.mubr.bf16.mxu0 0
      %618 = vmatmul.mubr.bf16.gmra.mrb[0].mxu0 %v570
      %v619 = vpop.f32.mrb[0].mxu0
      %v620 = vadd.f32 0.0, %v619
      %v621 = vpop.f32.mrb[0].mxu0
      %v622 = vpop.f32.mrb[0].mxu0
      %v623 = vadd.f32 0.0, %v622
      %v624 = vpop.f32.mrb[0].mxu0
      %625 = vmatprep.mubr.bf16.mxu0 0
      %626 = vmatmul.mubr.bf16.gmra.mrb[0].mxu0 %v573
      %v627 = vpop.f32.mrb[0].mxu0
      %v628 = vadd.f32 0.0, %v627
      %v629 = vpop.f32.mrb[0].mxu0
      %v630 = vpop.f32.mrb[0].mxu0
      %v631 = vadd.f32 0.0, %v630
      %v632 = vpop.f32.mrb[0].mxu0
      %633 = vmatprep.mubr.bf16.mxu0 0
      %634 = vmatmul.mubr.bf16.gmra.mrb[0].mxu0 %v576
      %v635 = vpop.f32.mrb[0].mxu0
      %v636 = vadd.f32 0.0, %v635
      %v637 = vpop.f32.mrb[0].mxu0
      %v638 = vpop.f32.mrb[0].mxu0
      %v639 = vadd.f32 0.0, %v638
      %v640 = vpop.f32.mrb[0].mxu0
      %641 = vmatprep.mubr.bf16.mxu0 0
      %642 = vmatmul.mubr.bf16.gmra.mrb[0].mxu0 %v579
      %v643 = vpop.f32.mrb[0].mxu0
      %v644 = vadd.f32 0.0, %v643
      %v645 = vpop.f32.mrb[0].mxu0
      %v646 = vpop.f32.mrb[0].mxu0
      %v647 = vadd.f32 0.0, %v646
      %v648 = vpop.f32.mrb[0].mxu0
      %649 = vdwg.mxu0
      %v650 = vld [vmem:[%s5] sm:$0x1]
      %v652 = vlaneseq
      %v653 = vshrl.u32 %v652, 7
      %v654 = vsub.s32 0, %v653
      %v655 = vrot.slane %v650, %v654
      %v657 = vmul.f32 %v620, %v655
      %v658 = vmul.f32 %v623, %v655
      %v659 = vmul.f32 %v628, %v655
      %v660 = vmul.f32 %v631, %v655
      %v661 = vmul.f32 %v636, %v655
      %v662 = vmul.f32 %v639, %v655
      %v663 = vmul.f32 %v644, %v655
      %v664 = vmul.f32 %v647, %v655
      %v665 = vld [vmem:[%s6] sm:$0x1]
      %v667 = vlaneseq
      %v668 = vshrl.u32 %v667, 7
      %v669 = vsub.s32 0, %v668
      %v670 = vrot.slane %v665, %v669
      %v672 = vadd.f32 %v657, %v670
      %v673 = vadd.f32 %v658, %v670
      %v674 = vadd.f32 %v659, %v670
      %v675 = vadd.f32 %v660, %v670
      %v676 = vadd.f32 %v661, %v670
      %v677 = vadd.f32 %v662, %v670
      %v678 = vadd.f32 %v663, %v670
      %v679 = vadd.f32 %v664, %v670
      %v680 = vsub.f32 0.0, %v672
      %v681 = vsub.f32 0.0, %v673
      %v682 = vsub.f32 0.0, %v674
      %v683 = vsub.f32 0.0, %v675
      %v684 = vsub.f32 0.0, %v676
      %v685 = vsub.f32 0.0, %v677
      %v686 = vsub.f32 0.0, %v678
      %v687 = vsub.f32 0.0, %v679
      %v688 = vmul.f32 %v680, 1.442695
      %v689 = vpow.pop %v688
      %v690 = vmul.f32 %v681, 1.442695
      %v691 = vpow.pop %v690
      %v692 = vmul.f32 %v682, 1.442695
      %v693 = vpow.pop %v692
      %v694 = vmul.f32 %v683, 1.442695
      %v695 = vpow.pop %v694
      %v696 = vmul.f32 %v684, 1.442695
      %v697 = vpow.pop %v696
      %v698 = vmul.f32 %v685, 1.442695
      %v699 = vpow.pop %v698
      %v700 = vmul.f32 %v686, 1.442695
      %v701 = vpow.pop %v700
      %v702 = vmul.f32 %v687, 1.442695
      %v703 = vpow.pop %v702
      %v704 = vadd.f32 %v689, 1.0
      %v705 = vadd.f32 %v691, 1.0
      %v706 = vadd.f32 %v693, 1.0
      %v707 = vadd.f32 %v695, 1.0
      %v708 = vadd.f32 %v697, 1.0
      %v709 = vadd.f32 %v699, 1.0
      %v710 = vadd.f32 %v701, 1.0
      %v711 = vadd.f32 %v703, 1.0
      %v712 = vrcp.pop %v704
      %v713 = vrcp.pop %v705
      %v714 = vrcp.pop %v706
      %v715 = vrcp.pop %v707
      %v716 = vrcp.pop %v708
      %v717 = vrcp.pop %v709
      %v718 = vrcp.pop %v710
      %v719 = vrcp.pop %v711
      %v720 = vmul.f32 %v672, %v712
      %v721 = vmul.f32 %v673, %v713
      %v722 = vmul.f32 %v674, %v714
      %v723 = vmul.f32 %v675, %v715
      %v724 = vmul.f32 %v676, %v716
      %v725 = vmul.f32 %v677, %v717
      %v726 = vmul.f32 %v678, %v718
      %v727 = vmul.f32 %v679, %v719
      %v728 = vpack.c.bf16 %v721, %v720
      %v729 = vpack.c.bf16 %v723, %v722
      %v730 = vpack.c.bf16 %v725, %v724
      %v731 = vpack.c.bf16 %v727, %v726
      %v736 = vunpack.c.l.b16 %v728
      %v737 = vunpack.c.h.b16 %v728
      %v738 = vunpack.c.l.b16 %v729
      %v739 = vunpack.c.h.b16 %v729
      %v740 = vunpack.c.l.b16 %v730
      %v741 = vunpack.c.h.b16 %v730
      %v742 = vunpack.c.l.b16 %v731
      %v743 = vunpack.c.h.b16 %v731
      %v744 = vpack.c.b16 %v736, %v736
      %v745 = vpack.c.b16 %v737, %v737
      %v746 = vpack.c.b16 %v738, %v738
      %v747 = vpack.c.b16 %v739, %v739
      %v748 = vpack.c.b16 %v740, %v740
      %v749 = vpack.c.b16 %v741, %v741
      %v750 = vpack.c.b16 %v742, %v742
      %v751 = vpack.c.b16 %v743, %v743
      %vm760 = vcmask 125952
      %761 = vst.msk [vmem:[%s318] sm:$0xf] %vm760, %v744
      %762 = vst.msk [vmem:[%s318 + $0x4] sm:$0xf] %vm760, %v745
      %763 = vst.msk [vmem:[%s318 + $0x8] sm:$0xf] %vm760, %v746
      %764 = vst.msk [vmem:[%s318 + $0xc] sm:$0xf] %vm760, %v747
      %765 = vst.msk [vmem:[%s318 + $0x10] sm:$0xf] %vm760, %v748
      %766 = vst.msk [vmem:[%s318 + $0x14] sm:$0xf] %vm760, %v749
      %767 = vst.msk [vmem:[%s318 + $0x18] sm:$0xf] %vm760, %v750
      %768 = vst.msk [vmem:[%s318 + $0x1c] sm:$0xf] %vm760, %v751
      %p769 = scmp.lt.s32.totalorder %s20, 1
      %s770 = scalar_select %p769, %s20, 1
      %s771 = smul.addr %s770, 8
      %s772 = smul.addr %s771, 4
      %s773 = scalar_lea.vmem %s7, %s772
      %p774 = scmp.lt.s32.totalorder %s20, 1
      %s775 = scalar_select %p774, %s20, 1
      %s776 = smul.addr %s775, 8
      %s777 = smul.addr %s776, 4
      %s778 = scalar_lea.vmem %s8, %s777
      // Predicated region
      $region49: #{gen_odin_forward.3} parent=47 // pred_check
        %p779 = pneg %p190
      $region50: #{gen_odin_forward.3} parent=47 // pred_check_branch
        %781 = sbr.rel (%p779) target = $region52
      $region51: #{gen_odin_forward.3} parent=47 // pred_region
        _
      $region52: #{gen_odin_forward.3} parent=47 // pred_fallthru
        _
      // Predicated region
      $region53: #{gen_odin_forward.3} parent=47 // pred_check
        %p782 = pneg %p216
      $region54: #{gen_odin_forward.3} parent=47 // pred_check_branch
        %784 = sbr.rel (%p782) target = $region56
      $region55: #{gen_odin_forward.3} parent=47 // pred_region
        _
      $region56: #{gen_odin_forward.3} parent=47 // pred_fallthru
        _
    $region48: #{gen_odin_forward.3} parent=5 // pred_fallthru
      _
    %p785 = scmp.le.s32.totalorder 2, %s15
    // Predicated region
    $region57: #{gen_odin_forward.3} parent=5 // pred_check
      %p786 = pneg %p785
    $region58: #{gen_odin_forward.3} parent=5 // pred_check_branch
      %788 = sbr.rel (%p786) target = $region60
    $region59: #{gen_odin_forward.3} parent=5 // pred_region
      %s789 = ssub.s32 %s15, 2
      // Predicated region
      $region61: #{gen_odin_forward.3} parent=59 // pred_check
        %p790 = pneg %p196
      $region62: #{gen_odin_forward.3} parent=59 // pred_check_branch
        %792 = sbr.rel (%p790) target = $region64
      $region63: #{gen_odin_forward.3} parent=59 // pred_region
        %p793 = scmp.lt.s32.totalorder %s21, 1
        %s794 = scalar_select %p793, %s21, 1
        %s795 = smul.addr %s794, 8
        %s796 = smul.addr %s795, 4
        %s797 = scalar_lea.vmem %s7, %s796
      $region64: #{gen_odin_forward.3} parent=59 // pred_fallthru
        _
      // Predicated region
      $region65: #{gen_odin_forward.3} parent=59 // pred_check
        %p798 = pneg %p222
      $region66: #{gen_odin_forward.3} parent=59 // pred_check_branch
        %800 = sbr.rel (%p798) target = $region68
      $region67: #{gen_odin_forward.3} parent=59 // pred_region
        %p801 = scmp.lt.s32.totalorder %s21, 1
        %s802 = scalar_select %p801, %s21, 1
        %s803 = smul.addr %s802, 8
        %s804 = smul.addr %s803, 4
        %s805 = scalar_lea.vmem %s8, %s804
      $region68: #{gen_odin_forward.3} parent=59 // pred_fallthru
        _
    $region60: #{gen_odin_forward.3} parent=5 // pred_fallthru
      _
  $region6: #{gen_odin_forward.3} parent=0 // loop_footer
    %s19 = sadd.s32 1, %s15
  $region7: #{gen_odin_forward.3} parent=0 // loop_footer_branch
    %14 = sbr.rel target = $region3
  $region8: #{gen_odin_forward.3} parent=0 // loop_exit
    _

// kernel: gen_odin_forward.4
$region0: #{gen_odin_forward.4}
  #allocation0 [shape = 'u32[]', space=smem, size = 0x4, offset = 0x4, fixed_abs, tag = 'smem constant byte address 0x4 - core index']
  #allocation1 [shape = 'u32[144,128]{1,0:T(1,128)}', space=vmem, size = 0x12000, scoped, tag = 'internal scratch']
  %s0 = inlined_call_operand.vmem [shape: bf16[2,9,64,16], index: 0, kind: input, shape index: {}]
  %s1 = inlined_call_operand.vmem [shape: f32[9,16], index: 1, kind: input, shape index: {}]
  %s2 = inlined_call_operand.vmem [shape: f32[1,16], index: 2, kind: input, shape index: {}]
  %s3 = inlined_call_operand.vmem [shape: f32[1,16], index: 3, kind: input, shape index: {}]
  %s4 = inlined_call_operand.vmem [shape: bf16[16,2], index: 4, kind: input, shape index: {}]
  %s5 = inlined_call_operand.vmem [shape: f32[1,2], index: 5, kind: input, shape index: {}]
  %s6 = inlined_call_operand.vmem [shape: bf16[2,16], index: 6, kind: input, shape index: {}]
  %s7 = inlined_call_operand.vmem [shape: f32[1,16], index: 7, kind: input, shape index: {}]
  %s8 = inlined_call_operand.vmem [shape: bf16[16,8], index: 8, kind: input, shape index: {}]
  %s9 = inlined_call_operand.vmem [shape: f32[1,8], index: 9, kind: input, shape index: {}]
  %s10 = inlined_call_operand.vmem [shape: f32[1,8], index: 10, kind: input, shape index: {}]
  %s11 = inlined_call_operand.vmem [shape: bf16[2,64,8], index: 11, kind: input, shape index: {}]
  %s12 = inlined_call_operand.vmem [shape: bf16[8,16], index: 12, kind: input, shape index: {}]
  %s13 = inlined_call_operand.vmem [shape: f32[1,16], index: 13, kind: input, shape index: {}]
  %s14 = inlined_call_operand.vmem [shape: f32[1,16], index: 14, kind: input, shape index: {}]
  %s15 = inlined_call_operand.vmem [shape: bf16[2,64,16], index: 15, kind: output, shape index: {}]
  %s16 = sld [smem:[#allocation0]]
  $region93: #{gen_odin_forward.4} parent=0
    _
  %s18 = ssub.s32 1, %s16
  %s19 = scalar_select 0, %s18, %s16
  loop: start=0, step=1, limit=4
  $region2: #{gen_odin_forward.4} parent=0 // loop_pre_header
    _
  $region3: #{gen_odin_forward.4} parent=0 // loop_header
    %s21 = sphi 0, %s25
    %p22 = scmp.ge.s32.totalorder %s21, 4
    %s31 = sphi 0, %s33
    %s34 = sphi 0, %s31
    %s35 = sphi 0, %s34
    %s51 = sphi 0, %s35
    %s55 = sphi 0, %s55
    %s57 = sphi 0, %s55
    %s58 = sphi 0, %s57
    %s72 = sphi 0, %s58
    %s76 = sphi 0, %s76
    %s78 = sphi 0, %s76
    %s79 = sphi 0, %s78
    %s93 = sphi 0, %s79
    %s97 = sphi 0, %s97
    %s99 = sphi 0, %s97
    %s100 = sphi 0, %s99
    %s114 = sphi 0, %s100
    %s118 = sphi 0, %s118
    %s120 = sphi 0, %s118
    %s121 = sphi 0, %s120
    %s135 = sphi 0, %s121
    %s139 = sphi 0, %s139
    %s141 = sphi 0, %s139
    %s142 = sphi 0, %s141
    %s156 = sphi 0, %s142
    %s160 = sphi 0, %s160
    %s162 = sphi 0, %s160
    %s163 = sphi 0, %s162
    %s177 = sphi 0, %s163
    %s181 = sphi 0, %s181
    %s183 = sphi 0, %s181
    %s184 = sphi 0, %s183
    %s198 = sphi 0, %s184
    %s202 = sphi 0, %s202
    %s204 = sphi 0, %s202
    %s205 = sphi 0, %s204
    %s219 = sphi 0, %s205
    %s223 = sphi 0, %s223
    %s225 = sphi 0, %s223
    %s226 = sphi 0, %s225
    %s240 = sphi 0, %s226
    %s244 = sphi 0, %s244
    %s246 = sphi 0, %s244
    %s247 = sphi 0, %s246
    %s261 = sphi 0, %s247
    %s267 = sphi 0, %s269
    %s270 = sphi 0, %s267
    %s271 = sphi 0, %s270
    %s287 = sphi 0, %s271
    %s291 = sphi 0, %s291
    %s293 = sphi 0, %s291
    %s294 = sphi 0, %s293
    %s308 = sphi 0, %s294
    %s312 = sphi 0, %s312
    %s314 = sphi 0, %s312
    %s315 = sphi 0, %s314
    %s329 = sphi 0, %s315
    %s333 = sphi 0, %s333
    %s335 = sphi 0, %s333
    %s336 = sphi 0, %s335
    %s350 = sphi 0, %s336
    %s356 = sphi 0, %s358
    %s359 = sphi 0, %s356
    %s360 = sphi 0, %s359
    %s376 = sphi 0, %s360
  $region4: #{gen_odin_forward.4} parent=0 // loop_header_branch
    %24 = sbr.rel (%p22) target = $region8
  $region5: #{gen_odin_forward.4} parent=0 // loop_body
    %s26 = ssub.s32 %s21, 1
    %s27 = ssub.s32 %s21, 2
    %s28 = sadd.s32 %s21, 1
    %s29 = ssub.s32 %s21, %s28
    %p30 = scmp.eq.s32.totalorder %s29, 0
    %s32 = sadd.s32 %s31, 1
    %s33 = scalar_select %p30, %s31, %s32
    %p36 = pneg %p30
    %p37 = scmp.eq.s32.totalorder %s21, 1
    %p38 = por %p36, %p37
    %p39 = scmp.ne.s32.totalorder %s31, %s34
    %p40 = scmp.eq.s32.totalorder %s21, 0
    %p41 = por %p39, %p40
    %p42 = scmp.ne.s32.totalorder %s31, %s34
    %p43 = scmp.eq.s32.totalorder %s26, 1
    %p44 = por %p42, %p43
    %p45 = scmp.ne.s32.totalorder %s34, %s35
    %p46 = scmp.eq.s32.totalorder %s26, 0
    %p47 = por %p45, %p46
    %p48 = scmp.ne.s32.totalorder %s34, %s35
    %p49 = scmp.eq.s32.totalorder %s27, 1
    %p50 = por %p48, %p49
    %p52 = scmp.ne.s32.totalorder %s35, %s51
    %p53 = scmp.eq.s32.totalorder %s27, 0
    %p54 = por %p52, %p53
    %s56 = sadd.s32 %s55, 1
    %p59 = scmp.eq.s32.totalorder %s21, 1
    %p60 = scmp.ne.s32.totalorder %s55, %s57
    %p61 = scmp.eq.s32.totalorder %s21, 0
    %p62 = por %p60, %p61
    %p63 = scmp.ne.s32.totalorder %s55, %s57
    %p64 = scmp.eq.s32.totalorder %s26, 1
    %p65 = por %p63, %p64
    %p66 = scmp.ne.s32.totalorder %s57, %s58
    %p67 = scmp.eq.s32.totalorder %s26, 0
    %p68 = por %p66, %p67
    %p69 = scmp.ne.s32.totalorder %s57, %s58
    %p70 = scmp.eq.s32.totalorder %s27, 1
    %p71 = por %p69, %p70
    %p73 = scmp.ne.s32.totalorder %s58, %s72
    %p74 = scmp.eq.s32.totalorder %s27, 0
    %p75 = por %p73, %p74
    %s77 = sadd.s32 %s76, 1
    %p80 = scmp.eq.s32.totalorder %s21, 1
    %p81 = scmp.ne.s32.totalorder %s76, %s78
    %p82 = scmp.eq.s32.totalorder %s21, 0
    %p83 = por %p81, %p82
    %p84 = scmp.ne.s32.totalorder %s76, %s78
    %p85 = scmp.eq.s32.totalorder %s26, 1
    %p86 = por %p84, %p85
    %p87 = scmp.ne.s32.totalorder %s78, %s79
    %p88 = scmp.eq.s32.totalorder %s26, 0
    %p89 = por %p87, %p88
    %p90 = scmp.ne.s32.totalorder %s78, %s79
    %p91 = scmp.eq.s32.totalorder %s27, 1
    %p92 = por %p90, %p91
    %p94 = scmp.ne.s32.totalorder %s79, %s93
    %p95 = scmp.eq.s32.totalorder %s27, 0
    %p96 = por %p94, %p95
    %s98 = sadd.s32 %s97, 1
    %p101 = scmp.eq.s32.totalorder %s21, 1
    %p102 = scmp.ne.s32.totalorder %s97, %s99
    %p103 = scmp.eq.s32.totalorder %s21, 0
    %p104 = por %p102, %p103
    %p105 = scmp.ne.s32.totalorder %s97, %s99
    %p106 = scmp.eq.s32.totalorder %s26, 1
    %p107 = por %p105, %p106
    %p108 = scmp.ne.s32.totalorder %s99, %s100
    %p109 = scmp.eq.s32.totalorder %s26, 0
    %p110 = por %p108, %p109
    %p111 = scmp.ne.s32.totalorder %s99, %s100
    %p112 = scmp.eq.s32.totalorder %s27, 1
    %p113 = por %p111, %p112
    %p115 = scmp.ne.s32.totalorder %s100, %s114
    %p116 = scmp.eq.s32.totalorder %s27, 0
    %p117 = por %p115, %p116
    %s119 = sadd.s32 %s118, 1
    %p122 = scmp.eq.s32.totalorder %s21, 1
    %p123 = scmp.ne.s32.totalorder %s118, %s120
    %p124 = scmp.eq.s32.totalorder %s21, 0
    %p125 = por %p123, %p124
    %p126 = scmp.ne.s32.totalorder %s118, %s120
    %p127 = scmp.eq.s32.totalorder %s26, 1
    %p128 = por %p126, %p127
    %p129 = scmp.ne.s32.totalorder %s120, %s121
    %p130 = scmp.eq.s32.totalorder %s26, 0
    %p131 = por %p129, %p130
    %p132 = scmp.ne.s32.totalorder %s120, %s121
    %p133 = scmp.eq.s32.totalorder %s27, 1
    %p134 = por %p132, %p133
    %p136 = scmp.ne.s32.totalorder %s121, %s135
    %p137 = scmp.eq.s32.totalorder %s27, 0
    %p138 = por %p136, %p137
    %s140 = sadd.s32 %s139, 1
    %p143 = scmp.eq.s32.totalorder %s21, 1
    %p144 = scmp.ne.s32.totalorder %s139, %s141
    %p145 = scmp.eq.s32.totalorder %s21, 0
    %p146 = por %p144, %p145
    %p147 = scmp.ne.s32.totalorder %s139, %s141
    %p148 = scmp.eq.s32.totalorder %s26, 1
    %p149 = por %p147, %p148
    %p150 = scmp.ne.s32.totalorder %s141, %s142
    %p151 = scmp.eq.s32.totalorder %s26, 0
    %p152 = por %p150, %p151
    %p153 = scmp.ne.s32.totalorder %s141, %s142
    %p154 = scmp.eq.s32.totalorder %s27, 1
    %p155 = por %p153, %p154
    %p157 = scmp.ne.s32.totalorder %s142, %s156
    %p158 = scmp.eq.s32.totalorder %s27, 0
    %p159 = por %p157, %p158
    %s161 = sadd.s32 %s160, 1
    %p164 = scmp.eq.s32.totalorder %s21, 1
    %p165 = scmp.ne.s32.totalorder %s160, %s162
    %p166 = scmp.eq.s32.totalorder %s21, 0
    %p167 = por %p165, %p166
    %p168 = scmp.ne.s32.totalorder %s160, %s162
    %p169 = scmp.eq.s32.totalorder %s26, 1
    %p170 = por %p168, %p169
    %p171 = scmp.ne.s32.totalorder %s162, %s163
    %p172 = scmp.eq.s32.totalorder %s26, 0
    %p173 = por %p171, %p172
    %p174 = scmp.ne.s32.totalorder %s162, %s163
    %p175 = scmp.eq.s32.totalorder %s27, 1
    %p176 = por %p174, %p175
    %p178 = scmp.ne.s32.totalorder %s163, %s177
    %p179 = scmp.eq.s32.totalorder %s27, 0
    %p180 = por %p178, %p179
    %s182 = sadd.s32 %s181, 1
    %p185 = scmp.eq.s32.totalorder %s21, 1
    %p186 = scmp.ne.s32.totalorder %s181, %s183
    %p187 = scmp.eq.s32.totalorder %s21, 0
    %p188 = por %p186, %p187
    %p189 = scmp.ne.s32.totalorder %s181, %s183
    %p190 = scmp.eq.s32.totalorder %s26, 1
    %p191 = por %p189, %p190
    %p192 = scmp.ne.s32.totalorder %s183, %s184
    %p193 = scmp.eq.s32.totalorder %s26, 0
    %p194 = por %p192, %p193
    %p195 = scmp.ne.s32.totalorder %s183, %s184
    %p196 = scmp.eq.s32.totalorder %s27, 1
    %p197 = por %p195, %p196
    %p199 = scmp.ne.s32.totalorder %s184, %s198
    %p200 = scmp.eq.s32.totalorder %s27, 0
    %p201 = por %p199, %p200
    %s203 = sadd.s32 %s202, 1
    %p206 = scmp.eq.s32.totalorder %s21, 1
    %p207 = scmp.ne.s32.totalorder %s202, %s204
    %p208 = scmp.eq.s32.totalorder %s21, 0
    %p209 = por %p207, %p208
    %p210 = scmp.ne.s32.totalorder %s202, %s204
    %p211 = scmp.eq.s32.totalorder %s26, 1
    %p212 = por %p210, %p211
    %p213 = scmp.ne.s32.totalorder %s204, %s205
    %p214 = scmp.eq.s32.totalorder %s26, 0
    %p215 = por %p213, %p214
    %p216 = scmp.ne.s32.totalorder %s204, %s205
    %p217 = scmp.eq.s32.totalorder %s27, 1
    %p218 = por %p216, %p217
    %p220 = scmp.ne.s32.totalorder %s205, %s219
    %p221 = scmp.eq.s32.totalorder %s27, 0
    %p222 = por %p220, %p221
    %s224 = sadd.s32 %s223, 1
    %p227 = scmp.eq.s32.totalorder %s21, 1
    %p228 = scmp.ne.s32.totalorder %s223, %s225
    %p229 = scmp.eq.s32.totalorder %s21, 0
    %p230 = por %p228, %p229
    %p231 = scmp.ne.s32.totalorder %s223, %s225
    %p232 = scmp.eq.s32.totalorder %s26, 1
    %p233 = por %p231, %p232
    %p234 = scmp.ne.s32.totalorder %s225, %s226
    %p235 = scmp.eq.s32.totalorder %s26, 0
    %p236 = por %p234, %p235
    %p237 = scmp.ne.s32.totalorder %s225, %s226
    %p238 = scmp.eq.s32.totalorder %s27, 1
    %p239 = por %p237, %p238
    %p241 = scmp.ne.s32.totalorder %s226, %s240
    %p242 = scmp.eq.s32.totalorder %s27, 0
    %p243 = por %p241, %p242
    %s245 = sadd.s32 %s244, 1
    %p248 = scmp.eq.s32.totalorder %s21, 1
    %p249 = scmp.ne.s32.totalorder %s244, %s246
    %p250 = scmp.eq.s32.totalorder %s21, 0
    %p251 = por %p249, %p250
    %p252 = scmp.ne.s32.totalorder %s244, %s246
    %p253 = scmp.eq.s32.totalorder %s26, 1
    %p254 = por %p252, %p253
    %p255 = scmp.ne.s32.totalorder %s246, %s247
    %p256 = scmp.eq.s32.totalorder %s26, 0
    %p257 = por %p255, %p256
    %p258 = scmp.ne.s32.totalorder %s246, %s247
    %p259 = scmp.eq.s32.totalorder %s27, 1
    %p260 = por %p258, %p259
    %p262 = scmp.ne.s32.totalorder %s247, %s261
    %p263 = scmp.eq.s32.totalorder %s27, 0
    %p264 = por %p262, %p263
    %s265 = ssub.s32 %s21, %s28
    %p266 = scmp.eq.s32.totalorder %s265, 0
    %s268 = sadd.s32 %s267, 1
    %s269 = scalar_select %p266, %s267, %s268
    %p272 = pneg %p266
    %p273 = scmp.eq.s32.totalorder %s21, 1
    %p274 = por %p272, %p273
    %p275 = scmp.ne.s32.totalorder %s267, %s270
    %p276 = scmp.eq.s32.totalorder %s21, 0
    %p277 = por %p275, %p276
    %p278 = scmp.ne.s32.totalorder %s267, %s270
    %p279 = scmp.eq.s32.totalorder %s26, 1
    %p280 = por %p278, %p279
    %p281 = scmp.ne.s32.totalorder %s270, %s271
    %p282 = scmp.eq.s32.totalorder %s26, 0
    %p283 = por %p281, %p282
    %p284 = scmp.ne.s32.totalorder %s270, %s271
    %p285 = scmp.eq.s32.totalorder %s27, 1
    %p286 = por %p284, %p285
    %p288 = scmp.ne.s32.totalorder %s271, %s287
    %p289 = scmp.eq.s32.totalorder %s27, 0
    %p290 = por %p288, %p289
    %s292 = sadd.s32 %s291, 1
    %p295 = scmp.eq.s32.totalorder %s21, 1
    %p296 = scmp.ne.s32.totalorder %s291, %s293
    %p297 = scmp.eq.s32.totalorder %s21, 0
    %p298 = por %p296, %p297
    %p299 = scmp.ne.s32.totalorder %s291, %s293
    %p300 = scmp.eq.s32.totalorder %s26, 1
    %p301 = por %p299, %p300
    %p302 = scmp.ne.s32.totalorder %s293, %s294
    %p303 = scmp.eq.s32.totalorder %s26, 0
    %p304 = por %p302, %p303
    %p305 = scmp.ne.s32.totalorder %s293, %s294
    %p306 = scmp.eq.s32.totalorder %s27, 1
    %p307 = por %p305, %p306
    %p309 = scmp.ne.s32.totalorder %s294, %s308
    %p310 = scmp.eq.s32.totalorder %s27, 0
    %p311 = por %p309, %p310
    %s313 = sadd.s32 %s312, 1
    %p316 = scmp.eq.s32.totalorder %s21, 1
    %p317 = scmp.ne.s32.totalorder %s312, %s314
    %p318 = scmp.eq.s32.totalorder %s21, 0
    %p319 = por %p317, %p318
    %p320 = scmp.ne.s32.totalorder %s312, %s314
    %p321 = scmp.eq.s32.totalorder %s26, 1
    %p322 = por %p320, %p321
    %p323 = scmp.ne.s32.totalorder %s314, %s315
    %p324 = scmp.eq.s32.totalorder %s26, 0
    %p325 = por %p323, %p324
    %p326 = scmp.ne.s32.totalorder %s314, %s315
    %p327 = scmp.eq.s32.totalorder %s27, 1
    %p328 = por %p326, %p327
    %p330 = scmp.ne.s32.totalorder %s315, %s329
    %p331 = scmp.eq.s32.totalorder %s27, 0
    %p332 = por %p330, %p331
    %s334 = sadd.s32 %s333, 1
    %p337 = scmp.eq.s32.totalorder %s21, 1
    %p338 = scmp.ne.s32.totalorder %s333, %s335
    %p339 = scmp.eq.s32.totalorder %s21, 0
    %p340 = por %p338, %p339
    %p341 = scmp.ne.s32.totalorder %s333, %s335
    %p342 = scmp.eq.s32.totalorder %s26, 1
    %p343 = por %p341, %p342
    %p344 = scmp.ne.s32.totalorder %s335, %s336
    %p345 = scmp.eq.s32.totalorder %s26, 0
    %p346 = por %p344, %p345
    %p347 = scmp.ne.s32.totalorder %s335, %s336
    %p348 = scmp.eq.s32.totalorder %s27, 1
    %p349 = por %p347, %p348
    %p351 = scmp.ne.s32.totalorder %s336, %s350
    %p352 = scmp.eq.s32.totalorder %s27, 0
    %p353 = por %p351, %p352
    %s354 = ssub.s32 %s21, %s28
    %p355 = scmp.eq.s32.totalorder %s354, 0
    %s357 = sadd.s32 %s356, 1
    %s358 = scalar_select %p355, %s356, %s357
    %p361 = pneg %p355
    %p362 = scmp.eq.s32.totalorder %s21, 1
    %p363 = por %p361, %p362
    %p364 = scmp.ne.s32.totalorder %s356, %s359
    %p365 = scmp.eq.s32.totalorder %s21, 0
    %p366 = por %p364, %p365
    %p367 = scmp.ne.s32.totalorder %s356, %s359
    %p368 = scmp.eq.s32.totalorder %s26, 1
    %p369 = por %p367, %p368
    %p370 = scmp.ne.s32.totalorder %s359, %s360
    %p371 = scmp.eq.s32.totalorder %s26, 0
    %p372 = por %p370, %p371
    %p373 = scmp.ne.s32.totalorder %s359, %s360
    %p374 = scmp.eq.s32.totalorder %s27, 1
    %p375 = por %p373, %p374
    %p377 = scmp.ne.s32.totalorder %s360, %s376
    %p378 = scmp.eq.s32.totalorder %s27, 0
    %p379 = por %p377, %p378
    %p380 = scmp.le.s32.totalorder 1, %s21
    %p381 = scmp.lt.s32.totalorder %s21, 3
    %p382 = pnand %p380, %p381
    %p383 = pneg %p382
    // Predicated region
    $region9: #{gen_odin_forward.4} parent=5 // pred_check
      _
    $region10: #{gen_odin_forward.4} parent=5 // pred_check_branch
      %385 = sbr.rel (%p382) target = $region12
    $region11: #{gen_odin_forward.4} parent=5 // pred_region
      %s386 = ssub.s32 %s21, 1
      // Predicated region
      $region13: #{gen_odin_forward.4} parent=11 // pred_check
        %p387 = pneg %p68
      $region14: #{gen_odin_forward.4} parent=11 // pred_check_branch
        %389 = sbr.rel (%p387) target = $region16
      $region15: #{gen_odin_forward.4} parent=11 // pred_region
        _
      $region16: #{gen_odin_forward.4} parent=11 // pred_fallthru
        _
      // Predicated region
      $region17: #{gen_odin_forward.4} parent=11 // pred_check
        %p390 = pneg %p89
      $region18: #{gen_odin_forward.4} parent=11 // pred_check_branch
        %392 = sbr.rel (%p390) target = $region20
      $region19: #{gen_odin_forward.4} parent=11 // pred_region
        _
      $region20: #{gen_odin_forward.4} parent=11 // pred_fallthru
        _
      // Predicated region
      $region21: #{gen_odin_forward.4} parent=11 // pred_check
        %p393 = pneg %p110
      $region22: #{gen_odin_forward.4} parent=11 // pred_check_branch
        %395 = sbr.rel (%p393) target = $region24
      $region23: #{gen_odin_forward.4} parent=11 // pred_region
        _
      $region24: #{gen_odin_forward.4} parent=11 // pred_fallthru
        _
      // Predicated region
      $region25: #{gen_odin_forward.4} parent=11 // pred_check
        %p396 = pneg %p131
      $region26: #{gen_odin_forward.4} parent=11 // pred_check_branch
        %398 = sbr.rel (%p396) target = $region28
      $region27: #{gen_odin_forward.4} parent=11 // pred_region
        _
      $region28: #{gen_odin_forward.4} parent=11 // pred_fallthru
        _
      // Predicated region
      $region29: #{gen_odin_forward.4} parent=11 // pred_check
        %p399 = pneg %p152
      $region30: #{gen_odin_forward.4} parent=11 // pred_check_branch
        %401 = sbr.rel (%p399) target = $region32
      $region31: #{gen_odin_forward.4} parent=11 // pred_region
        _
      $region32: #{gen_odin_forward.4} parent=11 // pred_fallthru
        _
      // Predicated region
      $region33: #{gen_odin_forward.4} parent=11 // pred_check
        %p402 = pneg %p173
      $region34: #{gen_odin_forward.4} parent=11 // pred_check_branch
        %404 = sbr.rel (%p402) target = $region36
      $region35: #{gen_odin_forward.4} parent=11 // pred_region
        _
      $region36: #{gen_odin_forward.4} parent=11 // pred_fallthru
        _
      // Predicated region
      $region37: #{gen_odin_forward.4} parent=11 // pred_check
        %p405 = pneg %p194
      $region38: #{gen_odin_forward.4} parent=11 // pred_check_branch
        %407 = sbr.rel (%p405) target = $region40
      $region39: #{gen_odin_forward.4} parent=11 // pred_region
        _
      $region40: #{gen_odin_forward.4} parent=11 // pred_fallthru
        _
      // Predicated region
      $region41: #{gen_odin_forward.4} parent=11 // pred_check
        %p408 = pneg %p215
      $region42: #{gen_odin_forward.4} parent=11 // pred_check_branch
        %410 = sbr.rel (%p408) target = $region44
      $region43: #{gen_odin_forward.4} parent=11 // pred_region
        _
      $region44: #{gen_odin_forward.4} parent=11 // pred_fallthru
        _
      // Predicated region
      $region45: #{gen_odin_forward.4} parent=11 // pred_check
        %p411 = pneg %p236
      $region46: #{gen_odin_forward.4} parent=11 // pred_check_branch
        %413 = sbr.rel (%p411) target = $region48
      $region47: #{gen_odin_forward.4} parent=11 // pred_region
        _
      $region48: #{gen_odin_forward.4} parent=11 // pred_fallthru
        _
      // Predicated region
      $region49: #{gen_odin_forward.4} parent=11 // pred_check
        %p414 = pneg %p257
      $region50: #{gen_odin_forward.4} parent=11 // pred_check_branch
        %416 = sbr.rel (%p414) target = $region52
      $region51: #{gen_odin_forward.4} parent=11 // pred_region
        _
      $region52: #{gen_odin_forward.4} parent=11 // pred_fallthru
        _
      // Predicated region
      $region53: #{gen_odin_forward.4} parent=11 // pred_check
        %p417 = pneg %p304
      $region54: #{gen_odin_forward.4} parent=11 // pred_check_branch
        %419 = sbr.rel (%p417) target = $region56
      $region55: #{gen_odin_forward.4} parent=11 // pred_region
        _
      $region56: #{gen_odin_forward.4} parent=11 // pred_fallthru
        _
      // Predicated region
      $region57: #{gen_odin_forward.4} parent=11 // pred_check
        %p420 = pneg %p325
      $region58: #{gen_odin_forward.4} parent=11 // pred_check_branch
        %422 = sbr.rel (%p420) target = $region60
      $region59: #{gen_odin_forward.4} parent=11 // pred_region
        _
      $region60: #{gen_odin_forward.4} parent=11 // pred_fallthru
        _
      // Predicated region
      $region61: #{gen_odin_forward.4} parent=11 // pred_check
        %p423 = pneg %p346
      $region62: #{gen_odin_forward.4} parent=11 // pred_check_branch
        %425 = sbr.rel (%p423) target = $region64
      $region63: #{gen_odin_forward.4} parent=11 // pred_region
        _
      $region64: #{gen_odin_forward.4} parent=11 // pred_fallthru
        _
    $region12: #{gen_odin_forward.4} parent=5 // pred_fallthru
      _
    %p426 = scmp.lt.s32.totalorder %s21, 2
    // Predicated region
    $region65: #{gen_odin_forward.4} parent=5 // pred_check
      %p427 = pneg %p426
    $region66: #{gen_odin_forward.4} parent=5 // pred_check_branch
      %429 = sbr.rel (%p427) target = $region68
    $region67: #{gen_odin_forward.4} parent=5 // pred_region
      // Predicated region
      $region69: #{gen_odin_forward.4} parent=67 // pred_check
        %p430 = pneg %p41
      $region70: #{gen_odin_forward.4} parent=67 // pred_check_branch
        %432 = sbr.rel (%p430) target = $region72
      $region71: #{gen_odin_forward.4} parent=67 // pred_region
        %p433 = scmp.lt.s32.totalorder %s21, 1
        %s434 = scalar_select %p433, %s21, 1
        %s435 = smul.addr %s434, 72
        %s436 = smul.addr %s435, 4
        %s437 = scalar_lea.vmem %s0, %s436
      $region72: #{gen_odin_forward.4} parent=67 // pred_fallthru
        _
      // Predicated region
      $region73: #{gen_odin_forward.4} parent=67 // pred_check
        %p438 = pneg %p277
      $region74: #{gen_odin_forward.4} parent=67 // pred_check_branch
        %440 = sbr.rel (%p438) target = $region76
      $region75: #{gen_odin_forward.4} parent=67 // pred_region
        %p441 = scmp.lt.s32.totalorder %s21, 1
        %s442 = scalar_select %p441, %s21, 1
        %s443 = smul.addr %s442, 8
        %s444 = smul.addr %s443, 4
        %s445 = scalar_lea.vmem %s11, %s444
      $region76: #{gen_odin_forward.4} parent=67 // pred_fallthru
        _
    $region68: #{gen_odin_forward.4} parent=5 // pred_fallthru
      _
    %p446 = scmp.le.s32.totalorder 1, %s21
    %p447 = scmp.lt.s32.totalorder %s21, 3
    %p448 = pnand %p446, %p447
    %p449 = pneg %p448
    // Predicated region
    $region77: #{gen_odin_forward.4} parent=5 // pred_check
      _
    $region78: #{gen_odin_forward.4} parent=5 // pred_check_branch
      %451 = sbr.rel (%p448) target = $region80
    $region79: #{gen_odin_forward.4} parent=5 // pred_region
      %s452 = ssub.s32 %s21, 1
      %p453 = scmp.lt.s32.totalorder %s26, 1
      %s454 = scalar_select %p453, %s26, 1
      %s455 = smul.addr %s454, 72
      %s456 = smul.addr %s455, 4
      %s457 = scalar_lea.vmem %s0, %s456
      %p458 = pneg %p47
      %p459 = pneg %p44
      %p460 = pneg %p68
      %p461 = pneg %p65
      %p462 = pneg %p89
      %p463 = pneg %p86
      %p464 = pneg %p110
      %p465 = pneg %p107
      %p466 = pneg %p131
      %p467 = pneg %p128
      %p468 = pneg %p152
      %p469 = pneg %p149
      %p470 = pneg %p173
      %p471 = pneg %p170
      %p472 = pneg %p194
      %p473 = pneg %p191
      %p474 = pneg %p215
      %p475 = pneg %p212
      %p476 = pneg %p236
      %p477 = pneg %p233
      %p478 = pneg %p257
      %p479 = pneg %p254
      %p480 = scmp.lt.s32.totalorder %s26, 1
      %s481 = scalar_select %p480, %s26, 1
      %s482 = smul.addr %s481, 8
      %s483 = smul.addr %s482, 4
      %s484 = scalar_lea.vmem %s11, %s483
      %p485 = pneg %p283
      %p486 = pneg %p280
      %p487 = pneg %p304
      %p488 = pneg %p301
      %p489 = pneg %p325
      %p490 = pneg %p322
      %p491 = pneg %p346
      %p492 = pneg %p343
      %p493 = pneg %p372
      %p494 = pneg %p369
      %p495 = scmp.lt.s32.totalorder %s26, 1
      %s496 = scalar_select %p495, %s26, 1
      %s497 = smul.addr %s496, 8
      %s498 = smul.addr %s497, 4
      %s499 = scalar_lea.vmem %s15, %s498
      %p500 = scmp.lt.s32.totalorder %s26, 1
      %s501 = scalar_select %p500, %s26, 1
      %s502 = smul.addr %s501, 72
      %s503 = smul.addr %s502, 4
      %s504 = scalar_lea.vmem %s0, %s503
      %p505 = scmp.lt.s32.totalorder %s26, 1
      %s506 = scalar_select %p505, %s26, 1
      %s507 = smul.addr %s506, 8
      %s508 = smul.addr %s507, 4
      %s509 = scalar_lea.vmem %s11, %s508
      %p510 = scmp.lt.s32.totalorder %s26, 1
      %s511 = scalar_select %p510, %s26, 1
      %s512 = smul.addr %s511, 8
      %s513 = smul.addr %s512, 4
      %s514 = scalar_lea.vmem %s15, %s513
      %v516 = vld [vmem:[%s504] sm:$0xf]
      %v517 = vld [vmem:[%s504 + $0x4] sm:$0xf]
      %v518 = vld [vmem:[%s504 + $0x8] sm:$0xf]
      %v519 = vld [vmem:[%s504 + $0xc] sm:$0xf]
      %v520 = vld [vmem:[%s504 + $0x10] sm:$0xf]
      %v521 = vld [vmem:[%s504 + $0x14] sm:$0xf]
      %v522 = vld [vmem:[%s504 + $0x18] sm:$0xf]
      %v523 = vld [vmem:[%s504 + $0x1c] sm:$0xf]
      %v524 = vld [vmem:[%s504 + $0x20] sm:$0xf]
      %v525 = vld [vmem:[%s504 + $0x24] sm:$0xf]
      %v526 = vld [vmem:[%s504 + $0x28] sm:$0xf]
      %v527 = vld [vmem:[%s504 + $0x2c] sm:$0xf]
      %v528 = vld [vmem:[%s504 + $0x30] sm:$0xf]
      %v529 = vld [vmem:[%s504 + $0x34] sm:$0xf]
      %v530 = vld [vmem:[%s504 + $0x38] sm:$0xf]
      %v531 = vld [vmem:[%s504 + $0x3c] sm:$0xf]
      %v532 = vld [vmem:[%s504 + $0x40] sm:$0xf]
      %v533 = vld [vmem:[%s504 + $0x44] sm:$0xf]
      %v534 = vld [vmem:[%s504 + $0x48] sm:$0xf]
      %v535 = vld [vmem:[%s504 + $0x4c] sm:$0xf]
      %v536 = vld [vmem:[%s504 + $0x50] sm:$0xf]
      %v537 = vld [vmem:[%s504 + $0x54] sm:$0xf]
      %v538 = vld [vmem:[%s504 + $0x58] sm:$0xf]
      %v539 = vld [vmem:[%s504 + $0x5c] sm:$0xf]
      %v540 = vld [vmem:[%s504 + $0x60] sm:$0xf]
      %v541 = vld [vmem:[%s504 + $0x64] sm:$0xf]
      %v542 = vld [vmem:[%s504 + $0x68] sm:$0xf]
      %v543 = vld [vmem:[%s504 + $0x6c] sm:$0xf]
      %v544 = vld [vmem:[%s504 + $0x70] sm:$0xf]
      %v545 = vld [vmem:[%s504 + $0x74] sm:$0xf]
      %v546 = vld [vmem:[%s504 + $0x78] sm:$0xf]
      %v547 = vld [vmem:[%s504 + $0x7c] sm:$0xf]
      %v548 = vld [vmem:[%s504 + $0x80] sm:$0xf]
      %v549 = vld [vmem:[%s504 + $0x84] sm:$0xf]
      %v550 = vld [vmem:[%s504 + $0x88] sm:$0xf]
      %v551 = vld [vmem:[%s504 + $0x8c] sm:$0xf]
      %v552 = vld [vmem:[%s504 + $0x90] sm:$0xf]
      %v553 = vld [vmem:[%s504 + $0x94] sm:$0xf]
      %v554 = vld [vmem:[%s504 + $0x98] sm:$0xf]
      %v555 = vld [vmem:[%s504 + $0x9c] sm:$0xf]
      %v556 = vld [vmem:[%s504 + $0xa0] sm:$0xf]
      %v557 = vld [vmem:[%s504 + $0xa4] sm:$0xf]
      %v558 = vld [vmem:[%s504 + $0xa8] sm:$0xf]
      %v559 = vld [vmem:[%s504 + $0xac] sm:$0xf]
      %v560 = vld [vmem:[%s504 + $0xb0] sm:$0xf]
      %v561 = vld [vmem:[%s504 + $0xb4] sm:$0xf]
      %v562 = vld [vmem:[%s504 + $0xb8] sm:$0xf]
      %v563 = vld [vmem:[%s504 + $0xbc] sm:$0xf]
      %v564 = vld [vmem:[%s504 + $0xc0] sm:$0xf]
      %v565 = vld [vmem:[%s504 + $0xc4] sm:$0xf]
      %v566 = vld [vmem:[%s504 + $0xc8] sm:$0xf]
      %v567 = vld [vmem:[%s504 + $0xcc] sm:$0xf]
      %v568 = vld [vmem:[%s504 + $0xd0] sm:$0xf]
      %v569 = vld [vmem:[%s504 + $0xd4] sm:$0xf]
      %v570 = vld [vmem:[%s504 + $0xd8] sm:$0xf]
      %v571 = vld [vmem:[%s504 + $0xdc] sm:$0xf]
      %v572 = vld [vmem:[%s504 + $0xe0] sm:$0xf]
      %v573 = vld [vmem:[%s504 + $0xe4] sm:$0xf]
      %v574 = vld [vmem:[%s504 + $0xe8] sm:$0xf]
      %v575 = vld [vmem:[%s504 + $0xec] sm:$0xf]
      %v576 = vld [vmem:[%s504 + $0xf0] sm:$0xf]
      %v577 = vld [vmem:[%s504 + $0xf4] sm:$0xf]
      %v578 = vld [vmem:[%s504 + $0xf8] sm:$0xf]
      %v579 = vld [vmem:[%s504 + $0xfc] sm:$0xf]
      %v580 = vld [vmem:[%s504 + $0x100] sm:$0xf]
      %v581 = vld [vmem:[%s504 + $0x104] sm:$0xf]
      %v582 = vld [vmem:[%s504 + $0x108] sm:$0xf]
      %v583 = vld [vmem:[%s504 + $0x10c] sm:$0xf]
      %v584 = vld [vmem:[%s504 + $0x110] sm:$0xf]
      %v585 = vld [vmem:[%s504 + $0x114] sm:$0xf]
      %v586 = vld [vmem:[%s504 + $0x118] sm:$0xf]
      %v587 = vld [vmem:[%s504 + $0x11c] sm:$0xf]
      %v588 = vld [vmem:[%s1] sm:$0xff]
      %v589 = vld [vmem:[%s1 + $0x8] sm:$0x1]
      %v590 = vunpack.c.l.bf16 %v516
      %v591 = vunpack.c.l.bf16 %v517
      %v592 = vunpack.c.l.bf16 %v518
      %v593 = vunpack.c.l.bf16 %v519
      %v594 = vunpack.c.l.bf16 %v520
      %v595 = vunpack.c.l.bf16 %v521
      %v596 = vunpack.c.l.bf16 %v522
      %v597 = vunpack.c.l.bf16 %v523
      %v598 = vlaneseq
      %v599 = vshrl.u32 %v598, 7
      %v600 = vsub.s32 0, %v599
      %v601 = vrot.slane %v588, %v600
      %v602 = vmul.f32 %v590, %v601
      %v603 = vmul.f32 %v591, %v601
      %v604 = vmul.f32 %v592, %v601
      %v605 = vmul.f32 %v593, %v601
      %v606 = vmul.f32 %v594, %v601
      %v607 = vmul.f32 %v595, %v601
      %v608 = vmul.f32 %v596, %v601
      %v609 = vmul.f32 %v597, %v601
      %v610 = vunpack.c.l.bf16 %v524
      %v611 = vunpack.c.l.bf16 %v525
      %v612 = vunpack.c.l.bf16 %v526
      %v613 = vunpack.c.l.bf16 %v527
      %v614 = vunpack.c.l.bf16 %v528
      %v615 = vunpack.c.l.bf16 %v529
      %v616 = vunpack.c.l.bf16 %v530
      %v617 = vunpack.c.l.bf16 %v531
      %v618 = vlaneseq
      %v619 = vshrl.u32 %v618, 7
      %v620 = vsub.s32 1, %v619
      %v621 = vrot.slane %v588, %v620
      %v622 = vmul.f32 %v610, %v621
      %v623 = vmul.f32 %v611, %v621
      %v624 = vmul.f32 %v612, %v621
      %v625 = vmul.f32 %v613, %v621
      %v626 = vmul.f32 %v614, %v621
      %v627 = vmul.f32 %v615, %v621
      %v628 = vmul.f32 %v616, %v621
      %v629 = vmul.f32 %v617, %v621
      %v630 = vadd.f32 %v602, %v622
      %v631 = vadd.f32 %v603, %v623
      %v632 = vadd.f32 %v604, %v624
      %v633 = vadd.f32 %v605, %v625
      %v634 = vadd.f32 %v606, %v626
      %v635 = vadd.f32 %v607, %v627
      %v636 = vadd.f32 %v608, %v628
      %v637 = vadd.f32 %v609, %v629
      %v638 = vunpack.c.l.bf16 %v532
      %v639 = vunpack.c.l.bf16 %v533
      %v640 = vunpack.c.l.bf16 %v534
      %v641 = vunpack.c.l.bf16 %v535
      %v642 = vunpack.c.l.bf16 %v536
      %v643 = vunpack.c.l.bf16 %v537
      %v644 = vunpack.c.l.bf16 %v538
      %v645 = vunpack.c.l.bf16 %v539
      %v646 = vlaneseq
      %v647 = vshrl.u32 %v646, 7
      %v648 = vsub.s32 2, %v647
      %v649 = vrot.slane %v588, %v648
      %v650 = vmul.f32 %v638, %v649
      %v651 = vmul.f32 %v639, %v649
      %v652 = vmul.f32 %v640, %v649
      %v653 = vmul.f32 %v641, %v649
      %v654 = vmul.f32 %v642, %v649
      %v655 = vmul.f32 %v643, %v649
      %v656 = vmul.f32 %v644, %v649
      %v657 = vmul.f32 %v645, %v649
      %v658 = vadd.f32 %v630, %v650
      %v659 = vadd.f32 %v631, %v651
      %v660 = vadd.f32 %v632, %v652
      %v661 = vadd.f32 %v633, %v653
      %v662 = vadd.f32 %v634, %v654
      %v663 = vadd.f32 %v635, %v655
      %v664 = vadd.f32 %v636, %v656
      %v665 = vadd.f32 %v637, %v657
      %v666 = vunpack.c.l.bf16 %v540
      %v667 = vunpack.c.l.bf16 %v541
      %v668 = vunpack.c.l.bf16 %v542
      %v669 = vunpack.c.l.bf16 %v543
      %v670 = vunpack.c.l.bf16 %v544
      %v671 = vunpack.c.l.bf16 %v545
      %v672 = vunpack.c.l.bf16 %v546
      %v673 = vunpack.c.l.bf16 %v547
      %v674 = vlaneseq
      %v675 = vshrl.u32 %v674, 7
      %v676 = vsub.s32 3, %v675
      %v677 = vrot.slane %v588, %v676
      %v678 = vmul.f32 %v666, %v677
      %v679 = vmul.f32 %v667, %v677
      %v680 = vmul.f32 %v668, %v677
      %v681 = vmul.f32 %v669, %v677
      %v682 = vmul.f32 %v670, %v677
      %v683 = vmul.f32 %v671, %v677
      %v684 = vmul.f32 %v672, %v677
      %v685 = vmul.f32 %v673, %v677
      %v686 = vadd.f32 %v658, %v678
      %v687 = vadd.f32 %v659, %v679
      %v688 = vadd.f32 %v660, %v680
      %v689 = vadd.f32 %v661, %v681
      %v690 = vadd.f32 %v662, %v682
      %v691 = vadd.f32 %v663, %v683
      %v692 = vadd.f32 %v664, %v684
      %v693 = vadd.f32 %v665, %v685
      %v694 = vunpack.c.l.bf16 %v548
      %v695 = vunpack.c.l.bf16 %v549
      %v696 = vunpack.c.l.bf16 %v550
      %v697 = vunpack.c.l.bf16 %v551
      %v698 = vunpack.c.l.bf16 %v552
      %v699 = vunpack.c.l.bf16 %v553
      %v700 = vunpack.c.l.bf16 %v554
      %v701 = vunpack.c.l.bf16 %v555
      %v702 = vlaneseq
      %v703 = vshrl.u32 %v702, 7
      %v704 = vsub.s32 4, %v703
      %v705 = vrot.slane %v588, %v704
      %v706 = vmul.f32 %v694, %v705
      %v707 = vmul.f32 %v695, %v705
      %v708 = vmul.f32 %v696, %v705
      %v709 = vmul.f32 %v697, %v705
      %v710 = vmul.f32 %v698, %v705
      %v711 = vmul.f32 %v699, %v705
      %v712 = vmul.f32 %v700, %v705
      %v713 = vmul.f32 %v701, %v705
      %v714 = vadd.f32 %v686, %v706
      %v715 = vadd.f32 %v687, %v707
      %v716 = vadd.f32 %v688, %v708
      %v717 = vadd.f32 %v689, %v709
      %v718 = vadd.f32 %v690, %v710
      %v719 = vadd.f32 %v691, %v711
      %v720 = vadd.f32 %v692, %v712
      %v721 = vadd.f32 %v693, %v713
      %v722 = vunpack.c.l.bf16 %v556
      %v723 = vunpack.c.l.bf16 %v557
      %v724 = vunpack.c.l.bf16 %v558
      %v725 = vunpack.c.l.bf16 %v559
      %v726 = vunpack.c.l.bf16 %v560
      %v727 = vunpack.c.l.bf16 %v561
      %v728 = vunpack.c.l.bf16 %v562
      %v729 = vunpack.c.l.bf16 %v563
      %v730 = vlaneseq
      %v731 = vshrl.u32 %v730, 7
      %v732 = vsub.s32 5, %v731
      %v733 = vrot.slane %v588, %v732
      %v734 = vmul.f32 %v722, %v733
      %v735 = vmul.f32 %v723, %v733
      %v736 = vmul.f32 %v724, %v733
      %v737 = vmul.f32 %v725, %v733
      %v738 = vmul.f32 %v726, %v733
      %v739 = vmul.f32 %v727, %v733
      %v740 = vmul.f32 %v728, %v733
      %v741 = vmul.f32 %v729, %v733
      %v742 = vadd.f32 %v714, %v734
      %v743 = vadd.f32 %v715, %v735
      %v744 = vadd.f32 %v716, %v736
      %v745 = vadd.f32 %v717, %v737
      %v746 = vadd.f32 %v718, %v738
      %v747 = vadd.f32 %v719, %v739
      %v748 = vadd.f32 %v720, %v740
      %v749 = vadd.f32 %v721, %v741
      %v750 = vunpack.c.l.bf16 %v564
      %v751 = vunpack.c.l.bf16 %v565
      %v752 = vunpack.c.l.bf16 %v566
      %v753 = vunpack.c.l.bf16 %v567
      %v754 = vunpack.c.l.bf16 %v568
      %v755 = vunpack.c.l.bf16 %v569
      %v756 = vunpack.c.l.bf16 %v570
      %v757 = vunpack.c.l.bf16 %v571
      %v758 = vlaneseq
      %v759 = vshrl.u32 %v758, 7
      %v760 = vsub.s32 6, %v759
      %v761 = vrot.slane %v588, %v760
      %v762 = vmul.f32 %v750, %v761
      %v763 = vmul.f32 %v751, %v761
      %v764 = vmul.f32 %v752, %v761
      %v765 = vmul.f32 %v753, %v761
      %v766 = vmul.f32 %v754, %v761
      %v767 = vmul.f32 %v755, %v761
      %v768 = vmul.f32 %v756, %v761
      %v769 = vmul.f32 %v757, %v761
      %v770 = vadd.f32 %v742, %v762
      %v771 = vadd.f32 %v743, %v763
      %v772 = vadd.f32 %v744, %v764
      %v773 = vadd.f32 %v745, %v765
      %v774 = vadd.f32 %v746, %v766
      %v775 = vadd.f32 %v747, %v767
      %v776 = vadd.f32 %v748, %v768
      %v777 = vadd.f32 %v749, %v769
      %v778 = vunpack.c.l.bf16 %v572
      %v779 = vunpack.c.l.bf16 %v573
      %v780 = vunpack.c.l.bf16 %v574
      %v781 = vunpack.c.l.bf16 %v575
      %v782 = vunpack.c.l.bf16 %v576
      %v783 = vunpack.c.l.bf16 %v577
      %v784 = vunpack.c.l.bf16 %v578
      %v785 = vunpack.c.l.bf16 %v579
      %v786 = vlaneseq
      %v787 = vshrl.u32 %v786, 7
      %v788 = vsub.s32 7, %v787
      %v789 = vrot.slane %v588, %v788
      %v790 = vmul.f32 %v778, %v789
      %v791 = vmul.f32 %v779, %v789
      %v792 = vmul.f32 %v780, %v789
      %v793 = vmul.f32 %v781, %v789
      %v794 = vmul.f32 %v782, %v789
      %v795 = vmul.f32 %v783, %v789
      %v796 = vmul.f32 %v784, %v789
      %v797 = vmul.f32 %v785, %v789
      %v798 = vadd.f32 %v770, %v790
      %v799 = vadd.f32 %v771, %v791
      %v800 = vadd.f32 %v772, %v792
      %v801 = vadd.f32 %v773, %v793
      %v802 = vadd.f32 %v774, %v794
      %v803 = vadd.f32 %v775, %v795
      %v804 = vadd.f32 %v776, %v796
      %v805 = vadd.f32 %v777, %v797
      %v806 = vunpack.c.l.bf16 %v580
      %v807 = vunpack.c.l.bf16 %v581
      %v808 = vunpack.c.l.bf16 %v582
      %v809 = vunpack.c.l.bf16 %v583
      %v810 = vunpack.c.l.bf16 %v584
      %v811 = vunpack.c.l.bf16 %v585
      %v812 = vunpack.c.l.bf16 %v586
      %v813 = vunpack.c.l.bf16 %v587
      %v814 = vlaneseq
      %v815 = vshrl.u32 %v814, 7
      %v816 = vsub.s32 0, %v815
      %v817 = vrot.slane %v589, %v816
      %v818 = vmul.f32 %v806, %v817
      %v819 = vmul.f32 %v807, %v817
      %v820 = vmul.f32 %v808, %v817
      %v821 = vmul.f32 %v809, %v817
      %v822 = vmul.f32 %v810, %v817
      %v823 = vmul.f32 %v811, %v817
      %v824 = vmul.f32 %v812, %v817
      %v825 = vmul.f32 %v813, %v817
      %v826 = vadd.f32 %v798, %v818
      %v827 = vadd.f32 %v799, %v819
      %v828 = vadd.f32 %v800, %v820
      %v829 = vadd.f32 %v801, %v821
      %v830 = vadd.f32 %v802, %v822
      %v831 = vadd.f32 %v803, %v823
      %v832 = vadd.f32 %v804, %v824
      %v833 = vadd.f32 %v805, %v825
      %v834 = vld [vmem:[%s2] sm:$0x1]
      %v836 = vlaneseq
      %v837 = vshrl.u32 %v836, 7
      %v838 = vsub.s32 0, %v837
      %v839 = vrot.slane %v834, %v838
      %v841 = vmul.f32 %v826, %v839
      %v842 = vmul.f32 %v827, %v839
      %v843 = vmul.f32 %v828, %v839
      %v844 = vmul.f32 %v829, %v839
      %v845 = vmul.f32 %v830, %v839
      %v846 = vmul.f32 %v831, %v839
      %v847 = vmul.f32 %v832, %v839
      %v848 = vmul.f32 %v833, %v839
      %v849 = vld [vmem:[%s3] sm:$0x1]
      %v851 = vlaneseq
      %v852 = vshrl.u32 %v851, 7
      %v853 = vsub.s32 0, %v852
      %v854 = vrot.slane %v849, %v853
      %v856 = vadd.f32 %v841, %v854
      %v857 = vadd.f32 %v842, %v854
      %v858 = vadd.f32 %v843, %v854
      %v859 = vadd.f32 %v844, %v854
      %v860 = vadd.f32 %v845, %v854
      %v861 = vadd.f32 %v846, %v854
      %v862 = vadd.f32 %v847, %v854
      %v863 = vadd.f32 %v848, %v854
      %v864 = vsub.f32 0.0, %v856
      %v865 = vsub.f32 0.0, %v857
      %v866 = vsub.f32 0.0, %v858
      %v867 = vsub.f32 0.0, %v859
      %v868 = vsub.f32 0.0, %v860
      %v869 = vsub.f32 0.0, %v861
      %v870 = vsub.f32 0.0, %v862
      %v871 = vsub.f32 0.0, %v863
      %v872 = vmul.f32 %v864, 1.442695
      %v873 = vpow.pop %v872
      %v874 = vmul.f32 %v865, 1.442695
      %v875 = vpow.pop %v874
      %v876 = vmul.f32 %v866, 1.442695
      %v877 = vpow.pop %v876
      %v878 = vmul.f32 %v867, 1.442695
      %v879 = vpow.pop %v878
      %v880 = vmul.f32 %v868, 1.442695
      %v881 = vpow.pop %v880
      %v882 = vmul.f32 %v869, 1.442695
      %v883 = vpow.pop %v882
      %v884 = vmul.f32 %v870, 1.442695
      %v885 = vpow.pop %v884
      %v886 = vmul.f32 %v871, 1.442695
      %v887 = vpow.pop %v886
      %v888 = vadd.f32 %v873, 1.0
      %v889 = vadd.f32 %v875, 1.0
      %v890 = vadd.f32 %v877, 1.0
      %v891 = vadd.f32 %v879, 1.0
      %v892 = vadd.f32 %v881, 1.0
      %v893 = vadd.f32 %v883, 1.0
      %v894 = vadd.f32 %v885, 1.0
      %v895 = vadd.f32 %v887, 1.0
      %v896 = vrcp.pop %v888
      %v897 = vrcp.pop %v889
      %v898 = vrcp.pop %v890
      %v899 = vrcp.pop %v891
      %v900 = vrcp.pop %v892
      %v901 = vrcp.pop %v893
      %v902 = vrcp.pop %v894
      %v903 = vrcp.pop %v895
      %v904 = vmul.f32 %v856, %v896
      %v905 = vmul.f32 %v857, %v897
      %v906 = vmul.f32 %v858, %v898
      %v907 = vmul.f32 %v859, %v899
      %v908 = vmul.f32 %v860, %v900
      %v909 = vmul.f32 %v861, %v901
      %v910 = vmul.f32 %v862, %v902
      %v911 = vmul.f32 %v863, %v903
      %vm912 = vcmask 130048
      %v913 = vsel %vm912, %v904, 0.0
      %v914 = vsel %vm912, %v905, 0.0
      %v915 = vadd.f32 %v913, %v914
      %v916 = vsel %vm912, %v906, 0.0
      %v917 = vadd.f32 %v915, %v916
      %v918 = vsel %vm912, %v907, 0.0
      %v919 = vadd.f32 %v917, %v918
      %v920 = vsel %vm912, %v908, 0.0
      %v921 = vadd.f32 %v919, %v920
      %v922 = vsel %vm912, %v909, 0.0
      %v923 = vadd.f32 %v921, %v922
      %v924 = vsel %vm912, %v910, 0.0
      %v925 = vadd.f32 %v923, %v924
      %v926 = vsel %vm912, %v911, 0.0
      %v927 = vadd.f32 %v925, %v926
      %v928 = vrot.slane %v927, 4
      %v929 = vadd.f32 %v927, %v928
      %v930 = vrot.slane %v929, 2
      %v931 = vadd.f32 %v929, %v930
      %v932 = vrot.slane %v931, 1
      %v933 = vadd.f32 %v931, %v932
      %v934 = vrcp.pop 64.0
      %v935 = vmul.f32 %v933, %v934
      %v936 = vpack.c.bf16 %v935, %v935
      %v937 = vld [vmem:[%s4] sm:$0xf]
      %v938 = vld [vmem:[%s4 + $0x4] sm:$0xf]
      %v939 = vld [vmem:[%s5] sm:$0x1]
      %v942 = vunpack.c.l.b16 %v937
      %v943 = vunpack.c.l.b16 %v938
      %v944 = vpack.c.b16 %v943, %v942
      %v947 = vsel %vm912, %v936, 0
      %949 = vmatprep.subr.bf16.mxu0 0
      %950 = vmatpush1.bf16.msra.mxu0 %v944
      %951 = vmatprep.subr.bf16.mxu0 0
      %952 = vmatpush1.bf16.msra.mxu0 0
      %953 = vmatprep.subr.bf16.mxu0 0
      %954 = vmatpush1.bf16.msra.mxu0 0
      %955 = vmatprep.subr.bf16.mxu0 0
      %956 = vmatpush1.bf16.msra.mxu0 0
      %957 = vmatprep.subr.bf16.mxu0 0
      %958 = vmatpush1.bf16.msra.mxu0 0
      %959 = vmatprep.subr.bf16.mxu0 0
      %960 = vmatpush1.bf16.msra.mxu0 0
      %961 = vmatprep.subr.bf16.mxu0 0
      %962 = vmatpush1.bf16.msra.mxu0 0
      %963 = vmatprep.subr.bf16.mxu0 0
      %964 = vmatpush1.bf16.msra.mxu0 0
      %965 = vmatprep.subr.bf16.mxu0 0
      %966 = vmatpush1.bf16.msra.mxu0 0
      %967 = vmatprep.subr.bf16.mxu0 0
      %968 = vmatpush1.bf16.msra.mxu0 0
      %969 = vmatprep.subr.bf16.mxu0 0
      %970 = vmatpush1.bf16.msra.mxu0 0
      %971 = vmatprep.subr.bf16.mxu0 0
      %972 = vmatpush1.bf16.msra.mxu0 0
      %973 = vmatprep.subr.bf16.mxu0 0
      %974 = vmatpush1.bf16.msra.mxu0 0
      %975 = vmatprep.subr.bf16.mxu0 0
      %976 = vmatpush1.bf16.msra.mxu0 0
      %977 = vmatprep.subr.bf16.mxu0 0
      %978 = vmatpush1.bf16.msra.mxu0 0
      %979 = vmatprep.subr.bf16.mxu0 0
      %980 = vmatpush1.bf16.msra.mxu0 0
      %981 = vmatprep.mubr.bf16.mxu0 0
      %982 = vmatmul.mubr.bf16.gmra.mrb[0].mxu0 %v947
      %v983 = vpop.f32.mrb[0].mxu0
      %v984 = vadd.f32 %v939, %v983
      %v985 = vpop.f32.mrb[0].mxu0
      %v986 = vpop.f32.mrb[0].mxu0
      %v987 = vpop.f32.mrb[0].mxu0
      %988 = vdwg.mxu0
      %v989 = vsub.f32 0.0, %v984
      %v990 = vmul.f32 %v989, 1.442695
      %v991 = vpow.pop %v990
      %v992 = vadd.f32 %v991, 1.0
      %v993 = vrcp.pop %v992
      %v994 = vmul.f32 %v984, %v993
      %v995 = vpack.c.bf16 %v994, %v994
      %v996 = vld [vmem:[%s6] sm:$0x1]
      %v997 = vld [vmem:[%s7] sm:$0x1]
      %vm998 = vcmask 15360
      %v1000 = vsel %vm998, %v995, 0
      %vm1002 = vcmask 1040384
      %v1004 = vsel %vm1002, %v996, 0
      %1006 = vmatprep.subr.bf16.mxu0 0
      %1007 = vmatpush1.bf16.msra.mxu0 %v1004
      %1008 = vmatprep.subr.bf16.mxu0 0
      %1009 = vmatpush1.bf16.msra.mxu0 0
      %1010 = vmatprep.subr.bf16.mxu0 0
      %1011 = vmatpush1.bf16.msra.mxu0 0
      %1012 = vmatprep.subr.bf16.mxu0 0
      %1013 = vmatpush1.bf16.msra.mxu0 0
      %1014 = vmatprep.subr.bf16.mxu0 0
      %1015 = vmatpush1.bf16.msra.mxu0 0
      %1016 = vmatprep.subr.bf16.mxu0 0
      %1017 = vmatpush1.bf16.msra.mxu0 0
      %1018 = vmatprep.subr.bf16.mxu0 0
      %1019 = vmatpush1.bf16.msra.mxu0 0
      %1020 = vmatprep.subr.bf16.mxu0 0
      %1021 = vmatpush1.bf16.msra.mxu0 0
      %1022 = vmatprep.subr.bf16.mxu0 0
      %1023 = vmatpush1.bf16.msra.mxu0 0
      %1024 = vmatprep.subr.bf16.mxu0 0
      %1025 = vmatpush1.bf16.msra.mxu0 0
      %1026 = vmatprep.subr.bf16.mxu0 0
      %1027 = vmatpush1.bf16.msra.mxu0 0
      %1028 = vmatprep.subr.bf16.mxu0 0
      %1029 = vmatpush1.bf16.msra.mxu0 0
      %1030 = vmatprep.subr.bf16.mxu0 0
      %1031 = vmatpush1.bf16.msra.mxu0 0
      %1032 = vmatprep.subr.bf16.mxu0 0
      %1033 = vmatpush1.bf16.msra.mxu0 0
      %1034 = vmatprep.subr.bf16.mxu0 0
      %1035 = vmatpush1.bf16.msra.mxu0 0
      %1036 = vmatprep.subr.bf16.mxu0 0
      %1037 = vmatpush1.bf16.msra.mxu0 0
      %1038 = vmatprep.mubr.bf16.mxu0 0
      %1039 = vmatmul.mubr.bf16.gmra.mrb[0].mxu0 %v1000
      %v1040 = vpop.f32.mrb[0].mxu0
      %v1041 = vadd.f32 %v997, %v1040
      %v1042 = vpop.f32.mrb[0].mxu0
      %v1043 = vpop.f32.mrb[0].mxu0
      %v1044 = vpop.f32.mrb[0].mxu0
      %1045 = vdwg.mxu0
      %v1046 = vsub.f32 0.0, %v1041
      %v1047 = vmul.f32 %v1046, 1.442695
      %v1048 = vpow.pop %v1047
      %v1049 = vadd.f32 %v1048, 1.0
      %v1050 = vrcp.pop %v1049
      %v1051 = vlaneseq
      %v1052 = vshrl.u32 %v1051, 7
      %v1053 = vsub.s32 0, %v1052
      %v1054 = vrot.slane %v1050, %v1053
      %v1055 = vmul.f32 %v904, %v1054
      %v1056 = vmul.f32 %v905, %v1054
      %v1057 = vmul.f32 %v906, %v1054
      %v1058 = vmul.f32 %v907, %v1054
      %v1059 = vmul.f32 %v908, %v1054
      %v1060 = vmul.f32 %v909, %v1054
      %v1061 = vmul.f32 %v910, %v1054
      %v1062 = vmul.f32 %v911, %v1054
      %v1063 = vpack.c.bf16 %v1056, %v1055
      %v1064 = vpack.c.bf16 %v1058, %v1057
      %v1065 = vpack.c.bf16 %v1060, %v1059
      %v1066 = vpack.c.bf16 %v1062, %v1061
      %v1067 = vld [vmem:[%s8] sm:$0xf]
      %v1068 = vld [vmem:[%s8 + $0x4] sm:$0xf]
      %v1071 = vunpack.c.l.b16 %v1067
      %v1072 = vunpack.c.l.b16 %v1068
      %v1073 = vpack.c.b16 %v1072, %v1071
      %v1076 = vsel %vm912, %v1063, 0
      %v1079 = vsel %vm912, %v1064, 0
      %v1082 = vsel %vm912, %v1065, 0
      %v1085 = vsel %vm912, %v1066, 0
      %1087 = vmatprep.subr.bf16.mxu0 0
      %1088 = vmatpush1.bf16.msra.mxu0 %v1073
      %1089 = vmatprep.subr.bf16.mxu0 0
      %1090 = vmatpush1.bf16.msra.mxu0 0
      %1091 = vmatprep.subr.bf16.mxu0 0
      %1092 = vmatpush1.bf16.msra.mxu0 0
      %1093 = vmatprep.subr.bf16.mxu0 0
      %1094 = vmatpush1.bf16.msra.mxu0 0
      %1095 = vmatprep.subr.bf16.mxu0 0
      %1096 = vmatpush1.bf16.msra.mxu0 0
      %1097 = vmatprep.subr.bf16.mxu0 0
      %1098 = vmatpush1.bf16.msra.mxu0 0
      %1099 = vmatprep.subr.bf16.mxu0 0
      %1100 = vmatpush1.bf16.msra.mxu0 0
      %1101 = vmatprep.subr.bf16.mxu0 0
      %1102 = vmatpush1.bf16.msra.mxu0 0
      %1103 = vmatprep.subr.bf16.mxu0 0
      %1104 = vmatpush1.bf16.msra.mxu0 0
      %1105 = vmatprep.subr.bf16.mxu0 0
      %1106 = vmatpush1.bf16.msra.mxu0 0
      %1107 = vmatprep.subr.bf16.mxu0 0
      %1108 = vmatpush1.bf16.msra.mxu0 0
      %1109 = vmatprep.subr.bf16.mxu0 0
      %1110 = vmatpush1.bf16.msra.mxu0 0
      %1111 = vmatprep.subr.bf16.mxu0 0
      %1112 = vmatpush1.bf16.msra.mxu0 0
      %1113 = vmatprep.subr.bf16.mxu0 0
      %1114 = vmatpush1.bf16.msra.mxu0 0
      %1115 = vmatprep.subr.bf16.mxu0 0
      %1116 = vmatpush1.bf16.msra.mxu0 0
      %1117 = vmatprep.subr.bf16.mxu0 0
      %1118 = vmatpush1.bf16.msra.mxu0 0
      %1119 = vmatprep.mubr.bf16.mxu0 0
      %1120 = vmatmul.mubr.bf16.gmra.mrb[0].mxu0 %v1076
      %v1121 = vpop.f32.mrb[0].mxu0
      %v1122 = vadd.f32 0.0, %v1121
      %v1123 = vpop.f32.mrb[0].mxu0
      %v1124 = vpop.f32.mrb[0].mxu0
      %v1125 = vadd.f32 0.0, %v1124
      %v1126 = vpop.f32.mrb[0].mxu0
      %1127 = vmatprep.mubr.bf16.mxu0 0
      %1128 = vmatmul.mubr.bf16.gmra.mrb[0].mxu0 %v1079
      %v1129 = vpop.f32.mrb[0].mxu0
      %v1130 = vadd.f32 0.0, %v1129
      %v1131 = vpop.f32.mrb[0].mxu0
      %v1132 = vpop.f32.mrb[0].mxu0
      %v1133 = vadd.f32 0.0, %v1132
      %v1134 = vpop.f32.mrb[0].mxu0
      %1135 = vmatprep.mubr.bf16.mxu0 0
      %1136 = vmatmul.mubr.bf16.gmra.mrb[0].mxu0 %v1082
      %v1137 = vpop.f32.mrb[0].mxu0
      %v1138 = vadd.f32 0.0, %v1137
      %v1139 = vpop.f32.mrb[0].mxu0
      %v1140 = vpop.f32.mrb[0].mxu0
      %v1141 = vadd.f32 0.0, %v1140
      %v1142 = vpop.f32.mrb[0].mxu0
      %1143 = vmatprep.mubr.bf16.mxu0 0
      %1144 = vmatmul.mubr.bf16.gmra.mrb[0].mxu0 %v1085
      %v1145 = vpop.f32.mrb[0].mxu0
      %v1146 = vadd.f32 0.0, %v1145
      %v1147 = vpop.f32.mrb[0].mxu0
      %v1148 = vpop.f32.mrb[0].mxu0
      %v1149 = vadd.f32 0.0, %v1148
      %v1150 = vpop.f32.mrb[0].mxu0
      %1151 = vdwg.mxu0
      %v1152 = vld [vmem:[%s9] sm:$0x1]
      %v1154 = vlaneseq
      %v1155 = vshrl.u32 %v1154, 7
      %v1156 = vsub.s32 0, %v1155
      %v1157 = vrot.slane %v1152, %v1156
      %v1159 = vmul.f32 %v1122, %v1157
      %v1160 = vmul.f32 %v1125, %v1157
      %v1161 = vmul.f32 %v1130, %v1157
      %v1162 = vmul.f32 %v1133, %v1157
      %v1163 = vmul.f32 %v1138, %v1157
      %v1164 = vmul.f32 %v1141, %v1157
      %v1165 = vmul.f32 %v1146, %v1157
      %v1166 = vmul.f32 %v1149, %v1157
      %v1167 = vld [vmem:[%s10] sm:$0x1]
      %v1169 = vlaneseq
      %v1170 = vshrl.u32 %v1169, 7
      %v1171 = vsub.s32 0, %v1170
      %v1172 = vrot.slane %v1167, %v1171
      %v1174 = vadd.f32 %v1159, %v1172
      %v1175 = vadd.f32 %v1160, %v1172
      %v1176 = vadd.f32 %v1161, %v1172
      %v1177 = vadd.f32 %v1162, %v1172
      %v1178 = vadd.f32 %v1163, %v1172
      %v1179 = vadd.f32 %v1164, %v1172
      %v1180 = vadd.f32 %v1165, %v1172
      %v1181 = vadd.f32 %v1166, %v1172
      %v1182 = vld [vmem:[%s509] sm:$0xf]
      %v1183 = vld [vmem:[%s509 + $0x4] sm:$0xf]
      %v1184 = vld [vmem:[%s509 + $0x8] sm:$0xf]
      %v1185 = vld [vmem:[%s509 + $0xc] sm:$0xf]
      %v1186 = vld [vmem:[%s509 + $0x10] sm:$0xf]
      %v1187 = vld [vmem:[%s509 + $0x14] sm:$0xf]
      %v1188 = vld [vmem:[%s509 + $0x18] sm:$0xf]
      %v1189 = vld [vmem:[%s509 + $0x1c] sm:$0xf]
      %v1190 = vunpack.c.l.bf16 %v1182
      %v1191 = vunpack.c.l.bf16 %v1183
      %v1192 = vunpack.c.l.bf16 %v1184
      %v1193 = vunpack.c.l.bf16 %v1185
      %v1194 = vunpack.c.l.bf16 %v1186
      %v1195 = vunpack.c.l.bf16 %v1187
      %v1196 = vunpack.c.l.bf16 %v1188
      %v1197 = vunpack.c.l.bf16 %v1189
      %v1198 = vadd.f32 %v1174, %v1190
      %v1199 = vadd.f32 %v1175, %v1191
      %v1200 = vadd.f32 %v1176, %v1192
      %v1201 = vadd.f32 %v1177, %v1193
      %v1202 = vadd.f32 %v1178, %v1194
      %v1203 = vadd.f32 %v1179, %v1195
      %v1204 = vadd.f32 %v1180, %v1196
      %v1205 = vadd.f32 %v1181, %v1197
      %v1206 = vpack.c.bf16 %v1199, %v1198
      %v1207 = vpack.c.bf16 %v1201, %v1200
      %v1208 = vpack.c.bf16 %v1203, %v1202
      %v1209 = vpack.c.bf16 %v1205, %v1204
      %v1210 = vld [vmem:[%s12] sm:$0xf]
      %vm1211 = vcmask 64512
      %v1213 = vsel %vm1211, %v1206, 0
      %v1216 = vsel %vm1211, %v1207, 0
      %v1219 = vsel %vm1211, %v1208, 0
      %v1222 = vsel %vm1211, %v1209, 0
      %vm1224 = vcmask 1043456
      %v1226 = vsel %vm1224, %v1210, 0
      %1228 = vmatprep.subr.bf16.mxu0 0
      %1229 = vmatpush1.bf16.msra.mxu0 %v1226
      %1230 = vmatprep.subr.bf16.mxu0 0
      %1231 = vmatpush1.bf16.msra.mxu0 0
      %1232 = vmatprep.subr.bf16.mxu0 0
      %1233 = vmatpush1.bf16.msra.mxu0 0
      %1234 = vmatprep.subr.bf16.mxu0 0
      %1235 = vmatpush1.bf16.msra.mxu0 0
      %1236 = vmatprep.subr.bf16.mxu0 0
      %1237 = vmatpush1.bf16.msra.mxu0 0
      %1238 = vmatprep.subr.bf16.mxu0 0
      %1239 = vmatpush1.bf16.msra.mxu0 0
      %1240 = vmatprep.subr.bf16.mxu0 0
      %1241 = vmatpush1.bf16.msra.mxu0 0
      %1242 = vmatprep.subr.bf16.mxu0 0
      %1243 = vmatpush1.bf16.msra.mxu0 0
      %1244 = vmatprep.subr.bf16.mxu0 0
      %1245 = vmatpush1.bf16.msra.mxu0 0
      %1246 = vmatprep.subr.bf16.mxu0 0
      %1247 = vmatpush1.bf16.msra.mxu0 0
      %1248 = vmatprep.subr.bf16.mxu0 0
      %1249 = vmatpush1.bf16.msra.mxu0 0
      %1250 = vmatprep.subr.bf16.mxu0 0
      %1251 = vmatpush1.bf16.msra.mxu0 0
      %1252 = vmatprep.subr.bf16.mxu0 0
      %1253 = vmatpush1.bf16.msra.mxu0 0
      %1254 = vmatprep.subr.bf16.mxu0 0
      %1255 = vmatpush1.bf16.msra.mxu0 0
      %1256 = vmatprep.subr.bf16.mxu0 0
      %1257 = vmatpush1.bf16.msra.mxu0 0
      %1258 = vmatprep.subr.bf16.mxu0 0
      %1259 = vmatpush1.bf16.msra.mxu0 0
      %1260 = vmatprep.mubr.bf16.mxu0 0
      %1261 = vmatmul.mubr.bf16.gmra.mrb[0].mxu0 %v1213
      %v1262 = vpop.f32.mrb[0].mxu0
      %v1263 = vadd.f32 0.0, %v1262
      %v1264 = vpop.f32.mrb[0].mxu0
      %v1265 = vpop.f32.mrb[0].mxu0
      %v1266 = vadd.f32 0.0, %v1265
      %v1267 = vpop.f32.mrb[0].mxu0
      %1268 = vmatprep.mubr.bf16.mxu0 0
      %1269 = vmatmul.mubr.bf16.gmra.mrb[0].mxu0 %v1216
      %v1270 = vpop.f32.mrb[0].mxu0
      %v1271 = vadd.f32 0.0, %v1270
      %v1272 = vpop.f32.mrb[0].mxu0
      %v1273 = vpop.f32.mrb[0].mxu0
      %v1274 = vadd.f32 0.0, %v1273
      %v1275 = vpop.f32.mrb[0].mxu0
      %1276 = vmatprep.mubr.bf16.mxu0 0
      %1277 = vmatmul.mubr.bf16.gmra.mrb[0].mxu0 %v1219
      %v1278 = vpop.f32.mrb[0].mxu0
      %v1279 = vadd.f32 0.0, %v1278
      %v1280 = vpop.f32.mrb[0].mxu0
      %v1281 = vpop.f32.mrb[0].mxu0
      %v1282 = vadd.f32 0.0, %v1281
      %v1283 = vpop.f32.mrb[0].mxu0
      %1284 = vmatprep.mubr.bf16.mxu0 0
      %1285 = vmatmul.mubr.bf16.gmra.mrb[0].mxu0 %v1222
      %v1286 = vpop.f32.mrb[0].mxu0
      %v1287 = vadd.f32 0.0, %v1286
      %v1288 = vpop.f32.mrb[0].mxu0
      %v1289 = vpop.f32.mrb[0].mxu0
      %v1290 = vadd.f32 0.0, %v1289
      %v1291 = vpop.f32.mrb[0].mxu0
      %1292 = vdwg.mxu0
      %v1293 = vld [vmem:[%s13] sm:$0x1]
      %v1295 = vlaneseq
      %v1296 = vshrl.u32 %v1295, 7
      %v1297 = vsub.s32 0, %v1296
      %v1298 = vrot.slane %v1293, %v1297
      %v1300 = vmul.f32 %v1263, %v1298
      %v1301 = vmul.f32 %v1266, %v1298
      %v1302 = vmul.f32 %v1271, %v1298
      %v1303 = vmul.f32 %v1274, %v1298
      %v1304 = vmul.f32 %v1279, %v1298
      %v1305 = vmul.f32 %v1282, %v1298
      %v1306 = vmul.f32 %v1287, %v1298
      %v1307 = vmul.f32 %v1290, %v1298
      %v1308 = vld [vmem:[%s14] sm:$0x1]
      %v1310 = vlaneseq
      %v1311 = vshrl.u32 %v1310, 7
      %v1312 = vsub.s32 0, %v1311
      %v1313 = vrot.slane %v1308, %v1312
      %v1315 = vadd.f32 %v1300, %v1313
      %v1316 = vadd.f32 %v1301, %v1313
      %v1317 = vadd.f32 %v1302, %v1313
      %v1318 = vadd.f32 %v1303, %v1313
      %v1319 = vadd.f32 %v1304, %v1313
      %v1320 = vadd.f32 %v1305, %v1313
      %v1321 = vadd.f32 %v1306, %v1313
      %v1322 = vadd.f32 %v1307, %v1313
      %v1323 = vsub.f32 0.0, %v1315
      %v1324 = vsub.f32 0.0, %v1316
      %v1325 = vsub.f32 0.0, %v1317
      %v1326 = vsub.f32 0.0, %v1318
      %v1327 = vsub.f32 0.0, %v1319
      %v1328 = vsub.f32 0.0, %v1320
      %v1329 = vsub.f32 0.0, %v1321
      %v1330 = vsub.f32 0.0, %v1322
      %v1331 = vmul.f32 %v1323, 1.442695
      %v1332 = vpow.pop %v1331
      %v1333 = vmul.f32 %v1324, 1.442695
      %v1334 = vpow.pop %v1333
      %v1335 = vmul.f32 %v1325, 1.442695
      %v1336 = vpow.pop %v1335
      %v1337 = vmul.f32 %v1326, 1.442695
      %v1338 = vpow.pop %v1337
      %v1339 = vmul.f32 %v1327, 1.442695
      %v1340 = vpow.pop %v1339
      %v1341 = vmul.f32 %v1328, 1.442695
      %v1342 = vpow.pop %v1341
      %v1343 = vmul.f32 %v1329, 1.442695
      %v1344 = vpow.pop %v1343
      %v1345 = vmul.f32 %v1330, 1.442695
      %v1346 = vpow.pop %v1345
      %v1347 = vadd.f32 %v1332, 1.0
      %v1348 = vadd.f32 %v1334, 1.0
      %v1349 = vadd.f32 %v1336, 1.0
      %v1350 = vadd.f32 %v1338, 1.0
      %v1351 = vadd.f32 %v1340, 1.0
      %v1352 = vadd.f32 %v1342, 1.0
      %v1353 = vadd.f32 %v1344, 1.0
      %v1354 = vadd.f32 %v1346, 1.0
      %v1355 = vrcp.pop %v1347
      %v1356 = vrcp.pop %v1348
      %v1357 = vrcp.pop %v1349
      %v1358 = vrcp.pop %v1350
      %v1359 = vrcp.pop %v1351
      %v1360 = vrcp.pop %v1352
      %v1361 = vrcp.pop %v1353
      %v1362 = vrcp.pop %v1354
      %v1363 = vmul.f32 %v1315, %v1355
      %v1364 = vmul.f32 %v1316, %v1356
      %v1365 = vmul.f32 %v1317, %v1357
      %v1366 = vmul.f32 %v1318, %v1358
      %v1367 = vmul.f32 %v1319, %v1359
      %v1368 = vmul.f32 %v1320, %v1360
      %v1369 = vmul.f32 %v1321, %v1361
      %v1370 = vmul.f32 %v1322, %v1362
      %v1371 = vpack.c.bf16 %v1364, %v1363
      %v1372 = vpack.c.bf16 %v1366, %v1365
      %v1373 = vpack.c.bf16 %v1368, %v1367
      %v1374 = vpack.c.bf16 %v1370, %v1369
      %v1379 = vunpack.c.l.b16 %v1371
      %v1380 = vunpack.c.h.b16 %v1371
      %v1381 = vunpack.c.l.b16 %v1372
      %v1382 = vunpack.c.h.b16 %v1372
      %v1383 = vunpack.c.l.b16 %v1373
      %v1384 = vunpack.c.h.b16 %v1373
      %v1385 = vunpack.c.l.b16 %v1374
      %v1386 = vunpack.c.h.b16 %v1374
      %v1387 = vpack.c.b16 %v1379, %v1379
      %v1388 = vpack.c.b16 %v1380, %v1380
      %v1389 = vpack.c.b16 %v1381, %v1381
      %v1390 = vpack.c.b16 %v1382, %v1382
      %v1391 = vpack.c.b16 %v1383, %v1383
      %v1392 = vpack.c.b16 %v1384, %v1384
      %v1393 = vpack.c.b16 %v1385, %v1385
      %v1394 = vpack.c.b16 %v1386, %v1386
      %vm1403 = vcmask 125952
      %1404 = vst.msk [vmem:[%s514] sm:$0xf] %vm1403, %v1387
      %1405 = vst.msk [vmem:[%s514 + $0x4] sm:$0xf] %vm1403, %v1388
      %1406 = vst.msk [vmem:[%s514 + $0x8] sm:$0xf] %vm1403, %v1389
      %1407 = vst.msk [vmem:[%s514 + $0xc] sm:$0xf] %vm1403, %v1390
      %1408 = vst.msk [vmem:[%s514 + $0x10] sm:$0xf] %vm1403, %v1391
      %1409 = vst.msk [vmem:[%s514 + $0x14] sm:$0xf] %vm1403, %v1392
      %1410 = vst.msk [vmem:[%s514 + $0x18] sm:$0xf] %vm1403, %v1393
      %1411 = vst.msk [vmem:[%s514 + $0x1c] sm:$0xf] %vm1403, %v1394
      %p1412 = scmp.lt.s32.totalorder %s26, 1
      %s1413 = scalar_select %p1412, %s26, 1
      %s1414 = smul.addr %s1413, 8
      %s1415 = smul.addr %s1414, 4
      %s1416 = scalar_lea.vmem %s15, %s1415
      // Predicated region
      $region81: #{gen_odin_forward.4} parent=79 // pred_check
        %p1417 = pneg %p369
      $region82: #{gen_odin_forward.4} parent=79 // pred_check_branch
        %1419 = sbr.rel (%p1417) target = $region84
      $region83: #{gen_odin_forward.4} parent=79 // pred_region
        _
      $region84: #{gen_odin_forward.4} parent=79 // pred_fallthru
        _
    $region80: #{gen_odin_forward.4} parent=5 // pred_fallthru
      _
    %p1420 = scmp.le.s32.totalorder 2, %s21
    // Predicated region
    $region85: #{gen_odin_forward.4} parent=5 // pred_check
      %p1421 = pneg %p1420
    $region86: #{gen_odin_forward.4} parent=5 // pred_check_branch
      %1423 = sbr.rel (%p1421) target = $region88
    $region87: #{gen_odin_forward.4} parent=5 // pred_region
      %s1424 = ssub.s32 %s21, 2
      // Predicated region
      $region89: #{gen_odin_forward.4} parent=87 // pred_check
        %p1425 = pneg %p375
      $region90: #{gen_odin_forward.4} parent=87 // pred_check_branch
        %1427 = sbr.rel (%p1425) target = $region92
      $region91: #{gen_odin_forward.4} parent=87 // pred_region
        %p1428 = scmp.lt.s32.totalorder %s27, 1
        %s1429 = scalar_select %p1428, %s27, 1
        %s1430 = smul.addr %s1429, 8
        %s1431 = smul.addr %s1430, 4
        %s1432 = scalar_lea.vmem %s15, %s1431
      $region92: #{gen_odin_forward.4} parent=87 // pred_fallthru
        _
    $region88: #{gen_odin_forward.4} parent=5 // pred_fallthru
      _
  $region6: #{gen_odin_forward.4} parent=0 // loop_footer
    %s25 = sadd.s32 1, %s21
  $region7: #{gen_odin_forward.4} parent=0 // loop_footer_branch
    %20 = sbr.rel target = $region3
  $region8: #{gen_odin_forward.4} parent=0 // loop_exit
    _

// kernel: gen_odin_forward.5
$region0: #{gen_odin_forward.5}
  #allocation0 [shape = 'u32[]', space=smem, size = 0x4, offset = 0x4, fixed_abs, tag = 'smem constant byte address 0x4 - core index']
  #allocation1 [shape = 'u32[144,128]{1,0:T(1,128)}', space=vmem, size = 0x12000, scoped, tag = 'internal scratch']
  %s0 = inlined_call_operand.vmem [shape: bf16[2,9,16,16], index: 0, kind: input, shape index: {}]
  %s1 = inlined_call_operand.vmem [shape: f32[9,16], index: 1, kind: input, shape index: {}]
  %s2 = inlined_call_operand.vmem [shape: f32[1,16], index: 2, kind: input, shape index: {}]
  %s3 = inlined_call_operand.vmem [shape: f32[1,16], index: 3, kind: input, shape index: {}]
  %s4 = inlined_call_operand.vmem [shape: bf16[16,2], index: 4, kind: input, shape index: {}]
  %s5 = inlined_call_operand.vmem [shape: f32[1,2], index: 5, kind: input, shape index: {}]
  %s6 = inlined_call_operand.vmem [shape: bf16[2,16], index: 6, kind: input, shape index: {}]
  %s7 = inlined_call_operand.vmem [shape: f32[1,16], index: 7, kind: input, shape index: {}]
  %s8 = inlined_call_operand.vmem [shape: bf16[16,16], index: 8, kind: input, shape index: {}]
  %s9 = inlined_call_operand.vmem [shape: f32[1,16], index: 9, kind: input, shape index: {}]
  %s10 = inlined_call_operand.vmem [shape: f32[1,16], index: 10, kind: input, shape index: {}]
  %s11 = inlined_call_operand.vmem [shape: bf16[16,32], index: 11, kind: input, shape index: {}]
  %s12 = inlined_call_operand.vmem [shape: f32[1,32], index: 12, kind: input, shape index: {}]
  %s13 = inlined_call_operand.vmem [shape: f32[1,32], index: 13, kind: input, shape index: {}]
  %s14 = inlined_call_operand.vmem [shape: bf16[32,11], index: 14, kind: input, shape index: {}]
  %s15 = inlined_call_operand.vmem [shape: f32[1,11], index: 15, kind: input, shape index: {}]
  %s16 = inlined_call_operand.vmem [shape: f32[1,11], index: 16, kind: input, shape index: {}]
  %s17 = inlined_call_operand.vmem [shape: f32[1,11], index: 17, kind: input, shape index: {}]
  %s18 = inlined_call_operand.hbm [shape: f32[2,1,10], index: 18, kind: output, shape index: {0}]
  %s19 = inlined_call_operand.hbm [shape: f32[2,1,10], index: 19, kind: output, shape index: {1}]
  %s20 = inlined_call_operand.vmem [shape: f32[2,1,1], index: 20, kind: output, shape index: {2}]
  %21 = xla_tuple %s18, %s19, %s20
  %s22 = sld [smem:[#allocation0]]
  $region121: #{gen_odin_forward.5} parent=0
    _
  %s24 = ssub.s32 1, %s22
  %s25 = scalar_select 0, %s24, %s22
  $region1: #{gen_odin_forward.5} parent=0
    #allocation2 [shape = 'u8[1024]{0}', space=vmem, size = 0x400, scoped, tag = 'output window, operand 0']
    #allocation3 [shape = 's32[2]{0}', space=sflag, size = 0x8, scoped, tag = 'scoped memory for gen_odin_forward.5']
    #allocation4 [shape = 'u8[1024]{0}', space=vmem, size = 0x400, scoped, tag = 'output window, operand 1']
    #allocation5 [shape = 's32[2]{0}', space=sflag, size = 0x8, scoped, tag = 'scoped memory for gen_odin_forward.5']
    %26 = vsyncpa [#allocation3], 0
    %s27 = scalar_lea.sflag [#allocation3], 1
    %28 = vsyncpa %s27, 0
    %29 = vsyncpa [#allocation5], 0
    %s30 = scalar_lea.sflag [#allocation5], 1
    %31 = vsyncpa %s30, 0
    loop: start=0, step=1, limit=4
    $region2: #{gen_odin_forward.5} parent=1 // loop_pre_header
      _
    $region3: #{gen_odin_forward.5} parent=1 // loop_header
      %s33 = sphi 0, %s37
      %p34 = scmp.ge.s32.totalorder %s33, 4
      %s43 = sphi 0, %s45
      %s46 = sphi 0, %s43
      %s47 = sphi 0, %s46
      %s63 = sphi 0, %s47
      %s67 = sphi 0, %s67
      %s69 = sphi 0, %s67
      %s70 = sphi 0, %s69
      %s84 = sphi 0, %s70
      %s88 = sphi 0, %s88
      %s90 = sphi 0, %s88
      %s91 = sphi 0, %s90
      %s105 = sphi 0, %s91
      %s109 = sphi 0, %s109
      %s111 = sphi 0, %s109
      %s112 = sphi 0, %s111
      %s126 = sphi 0, %s112
      %s130 = sphi 0, %s130
      %s132 = sphi 0, %s130
      %s133 = sphi 0, %s132
      %s147 = sphi 0, %s133
      %s151 = sphi 0, %s151
      %s153 = sphi 0, %s151
      %s154 = sphi 0, %s153
      %s168 = sphi 0, %s154
      %s172 = sphi 0, %s172
      %s174 = sphi 0, %s172
      %s175 = sphi 0, %s174
      %s189 = sphi 0, %s175
      %s193 = sphi 0, %s193
      %s195 = sphi 0, %s193
      %s196 = sphi 0, %s195
      %s210 = sphi 0, %s196
      %s214 = sphi 0, %s214
      %s216 = sphi 0, %s214
      %s217 = sphi 0, %s216
      %s231 = sphi 0, %s217
      %s235 = sphi 0, %s235
      %s237 = sphi 0, %s235
      %s238 = sphi 0, %s237
      %s252 = sphi 0, %s238
      %s256 = sphi 0, %s256
      %s258 = sphi 0, %s256
      %s259 = sphi 0, %s258
      %s273 = sphi 0, %s259
      %s277 = sphi 0, %s277
      %s279 = sphi 0, %s277
      %s280 = sphi 0, %s279
      %s294 = sphi 0, %s280
      %s298 = sphi 0, %s298
      %s300 = sphi 0, %s298
      %s301 = sphi 0, %s300
      %s315 = sphi 0, %s301
      %s319 = sphi 0, %s319
      %s321 = sphi 0, %s319
      %s322 = sphi 0, %s321
      %s336 = sphi 0, %s322
      %s340 = sphi 0, %s340
      %s342 = sphi 0, %s340
      %s343 = sphi 0, %s342
      %s357 = sphi 0, %s343
      %s361 = sphi 0, %s361
      %s363 = sphi 0, %s361
      %s364 = sphi 0, %s363
      %s378 = sphi 0, %s364
      %s382 = sphi 0, %s382
      %s384 = sphi 0, %s382
      %s385 = sphi 0, %s384
      %s399 = sphi 0, %s385
      %s403 = sphi 0, %s403
      %s405 = sphi 0, %s403
      %s406 = sphi 0, %s405
      %s420 = sphi 0, %s406
      %s426 = sphi 0, %s428
      %s429 = sphi 0, %s426
      %s430 = sphi 0, %s429
      %s446 = sphi 0, %s430
      %s452 = sphi 0, %s454
      %s455 = sphi 0, %s452
      %s456 = sphi 0, %s455
      %s472 = sphi 0, %s456
      %s478 = sphi 0, %s480
      %s481 = sphi 0, %s478
      %s482 = sphi 0, %s481
      %s498 = sphi 0, %s482
    $region4: #{gen_odin_forward.5} parent=1 // loop_header_branch
      %36 = sbr.rel (%p34) target = $region8
    $region5: #{gen_odin_forward.5} parent=1 // loop_body
      %s38 = ssub.s32 %s33, 1
      %s39 = ssub.s32 %s33, 2
      %s40 = sadd.s32 %s33, 1
      %s41 = ssub.s32 %s33, %s40
      %p42 = scmp.eq.s32.totalorder %s41, 0
      %s44 = sadd.s32 %s43, 1
      %s45 = scalar_select %p42, %s43, %s44
      %p48 = pneg %p42
      %p49 = scmp.eq.s32.totalorder %s33, 1
      %p50 = por %p48, %p49
      %p51 = scmp.ne.s32.totalorder %s43, %s46
      %p52 = scmp.eq.s32.totalorder %s33, 0
      %p53 = por %p51, %p52
      %p54 = scmp.ne.s32.totalorder %s43, %s46
      %p55 = scmp.eq.s32.totalorder %s38, 1
      %p56 = por %p54, %p55
      %p57 = scmp.ne.s32.totalorder %s46, %s47
      %p58 = scmp.eq.s32.totalorder %s38, 0
      %p59 = por %p57, %p58
      %p60 = scmp.ne.s32.totalorder %s46, %s47
      %p61 = scmp.eq.s32.totalorder %s39, 1
      %p62 = por %p60, %p61
      %p64 = scmp.ne.s32.totalorder %s47, %s63
      %p65 = scmp.eq.s32.totalorder %s39, 0
      %p66 = por %p64, %p65
      %s68 = sadd.s32 %s67, 1
      %p71 = scmp.eq.s32.totalorder %s33, 1
      %p72 = scmp.ne.s32.totalorder %s67, %s69
      %p73 = scmp.eq.s32.totalorder %s33, 0
      %p74 = por %p72, %p73
      %p75 = scmp.ne.s32.totalorder %s67, %s69
      %p76 = scmp.eq.s32.totalorder %s38, 1
      %p77 = por %p75, %p76
      %p78 = scmp.ne.s32.totalorder %s69, %s70
      %p79 = scmp.eq.s32.totalorder %s38, 0
      %p80 = por %p78, %p79
      %p81 = scmp.ne.s32.totalorder %s69, %s70
      %p82 = scmp.eq.s32.totalorder %s39, 1
      %p83 = por %p81, %p82
      %p85 = scmp.ne.s32.totalorder %s70, %s84
      %p86 = scmp.eq.s32.totalorder %s39, 0
      %p87 = por %p85, %p86
      %s89 = sadd.s32 %s88, 1
      %p92 = scmp.eq.s32.totalorder %s33, 1
      %p93 = scmp.ne.s32.totalorder %s88, %s90
      %p94 = scmp.eq.s32.totalorder %s33, 0
      %p95 = por %p93, %p94
      %p96 = scmp.ne.s32.totalorder %s88, %s90
      %p97 = scmp.eq.s32.totalorder %s38, 1
      %p98 = por %p96, %p97
      %p99 = scmp.ne.s32.totalorder %s90, %s91
      %p100 = scmp.eq.s32.totalorder %s38, 0
      %p101 = por %p99, %p100
      %p102 = scmp.ne.s32.totalorder %s90, %s91
      %p103 = scmp.eq.s32.totalorder %s39, 1
      %p104 = por %p102, %p103
      %p106 = scmp.ne.s32.totalorder %s91, %s105
      %p107 = scmp.eq.s32.totalorder %s39, 0
      %p108 = por %p106, %p107
      %s110 = sadd.s32 %s109, 1
      %p113 = scmp.eq.s32.totalorder %s33, 1
      %p114 = scmp.ne.s32.totalorder %s109, %s111
      %p115 = scmp.eq.s32.totalorder %s33, 0
      %p116 = por %p114, %p115
      %p117 = scmp.ne.s32.totalorder %s109, %s111
      %p118 = scmp.eq.s32.totalorder %s38, 1
      %p119 = por %p117, %p118
      %p120 = scmp.ne.s32.totalorder %s111, %s112
      %p121 = scmp.eq.s32.totalorder %s38, 0
      %p122 = por %p120, %p121
      %p123 = scmp.ne.s32.totalorder %s111, %s112
      %p124 = scmp.eq.s32.totalorder %s39, 1
      %p125 = por %p123, %p124
      %p127 = scmp.ne.s32.totalorder %s112, %s126
      %p128 = scmp.eq.s32.totalorder %s39, 0
      %p129 = por %p127, %p128
      %s131 = sadd.s32 %s130, 1
      %p134 = scmp.eq.s32.totalorder %s33, 1
      %p135 = scmp.ne.s32.totalorder %s130, %s132
      %p136 = scmp.eq.s32.totalorder %s33, 0
      %p137 = por %p135, %p136
      %p138 = scmp.ne.s32.totalorder %s130, %s132
      %p139 = scmp.eq.s32.totalorder %s38, 1
      %p140 = por %p138, %p139
      %p141 = scmp.ne.s32.totalorder %s132, %s133
      %p142 = scmp.eq.s32.totalorder %s38, 0
      %p143 = por %p141, %p142
      %p144 = scmp.ne.s32.totalorder %s132, %s133
      %p145 = scmp.eq.s32.totalorder %s39, 1
      %p146 = por %p144, %p145
      %p148 = scmp.ne.s32.totalorder %s133, %s147
      %p149 = scmp.eq.s32.totalorder %s39, 0
      %p150 = por %p148, %p149
      %s152 = sadd.s32 %s151, 1
      %p155 = scmp.eq.s32.totalorder %s33, 1
      %p156 = scmp.ne.s32.totalorder %s151, %s153
      %p157 = scmp.eq.s32.totalorder %s33, 0
      %p158 = por %p156, %p157
      %p159 = scmp.ne.s32.totalorder %s151, %s153
      %p160 = scmp.eq.s32.totalorder %s38, 1
      %p161 = por %p159, %p160
      %p162 = scmp.ne.s32.totalorder %s153, %s154
      %p163 = scmp.eq.s32.totalorder %s38, 0
      %p164 = por %p162, %p163
      %p165 = scmp.ne.s32.totalorder %s153, %s154
      %p166 = scmp.eq.s32.totalorder %s39, 1
      %p167 = por %p165, %p166
      %p169 = scmp.ne.s32.totalorder %s154, %s168
      %p170 = scmp.eq.s32.totalorder %s39, 0
      %p171 = por %p169, %p170
      %s173 = sadd.s32 %s172, 1
      %p176 = scmp.eq.s32.totalorder %s33, 1
      %p177 = scmp.ne.s32.totalorder %s172, %s174
      %p178 = scmp.eq.s32.totalorder %s33, 0
      %p179 = por %p177, %p178
      %p180 = scmp.ne.s32.totalorder %s172, %s174
      %p181 = scmp.eq.s32.totalorder %s38, 1
      %p182 = por %p180, %p181
      %p183 = scmp.ne.s32.totalorder %s174, %s175
      %p184 = scmp.eq.s32.totalorder %s38, 0
      %p185 = por %p183, %p184
      %p186 = scmp.ne.s32.totalorder %s174, %s175
      %p187 = scmp.eq.s32.totalorder %s39, 1
      %p188 = por %p186, %p187
      %p190 = scmp.ne.s32.totalorder %s175, %s189
      %p191 = scmp.eq.s32.totalorder %s39, 0
      %p192 = por %p190, %p191
      %s194 = sadd.s32 %s193, 1
      %p197 = scmp.eq.s32.totalorder %s33, 1
      %p198 = scmp.ne.s32.totalorder %s193, %s195
      %p199 = scmp.eq.s32.totalorder %s33, 0
      %p200 = por %p198, %p199
      %p201 = scmp.ne.s32.totalorder %s193, %s195
      %p202 = scmp.eq.s32.totalorder %s38, 1
      %p203 = por %p201, %p202
      %p204 = scmp.ne.s32.totalorder %s195, %s196
      %p205 = scmp.eq.s32.totalorder %s38, 0
      %p206 = por %p204, %p205
      %p207 = scmp.ne.s32.totalorder %s195, %s196
      %p208 = scmp.eq.s32.totalorder %s39, 1
      %p209 = por %p207, %p208
      %p211 = scmp.ne.s32.totalorder %s196, %s210
      %p212 = scmp.eq.s32.totalorder %s39, 0
      %p213 = por %p211, %p212
      %s215 = sadd.s32 %s214, 1
      %p218 = scmp.eq.s32.totalorder %s33, 1
      %p219 = scmp.ne.s32.totalorder %s214, %s216
      %p220 = scmp.eq.s32.totalorder %s33, 0
      %p221 = por %p219, %p220
      %p222 = scmp.ne.s32.totalorder %s214, %s216
      %p223 = scmp.eq.s32.totalorder %s38, 1
      %p224 = por %p222, %p223
      %p225 = scmp.ne.s32.totalorder %s216, %s217
      %p226 = scmp.eq.s32.totalorder %s38, 0
      %p227 = por %p225, %p226
      %p228 = scmp.ne.s32.totalorder %s216, %s217
      %p229 = scmp.eq.s32.totalorder %s39, 1
      %p230 = por %p228, %p229
      %p232 = scmp.ne.s32.totalorder %s217, %s231
      %p233 = scmp.eq.s32.totalorder %s39, 0
      %p234 = por %p232, %p233
      %s236 = sadd.s32 %s235, 1
      %p239 = scmp.eq.s32.totalorder %s33, 1
      %p240 = scmp.ne.s32.totalorder %s235, %s237
      %p241 = scmp.eq.s32.totalorder %s33, 0
      %p242 = por %p240, %p241
      %p243 = scmp.ne.s32.totalorder %s235, %s237
      %p244 = scmp.eq.s32.totalorder %s38, 1
      %p245 = por %p243, %p244
      %p246 = scmp.ne.s32.totalorder %s237, %s238
      %p247 = scmp.eq.s32.totalorder %s38, 0
      %p248 = por %p246, %p247
      %p249 = scmp.ne.s32.totalorder %s237, %s238
      %p250 = scmp.eq.s32.totalorder %s39, 1
      %p251 = por %p249, %p250
      %p253 = scmp.ne.s32.totalorder %s238, %s252
      %p254 = scmp.eq.s32.totalorder %s39, 0
      %p255 = por %p253, %p254
      %s257 = sadd.s32 %s256, 1
      %p260 = scmp.eq.s32.totalorder %s33, 1
      %p261 = scmp.ne.s32.totalorder %s256, %s258
      %p262 = scmp.eq.s32.totalorder %s33, 0
      %p263 = por %p261, %p262
      %p264 = scmp.ne.s32.totalorder %s256, %s258
      %p265 = scmp.eq.s32.totalorder %s38, 1
      %p266 = por %p264, %p265
      %p267 = scmp.ne.s32.totalorder %s258, %s259
      %p268 = scmp.eq.s32.totalorder %s38, 0
      %p269 = por %p267, %p268
      %p270 = scmp.ne.s32.totalorder %s258, %s259
      %p271 = scmp.eq.s32.totalorder %s39, 1
      %p272 = por %p270, %p271
      %p274 = scmp.ne.s32.totalorder %s259, %s273
      %p275 = scmp.eq.s32.totalorder %s39, 0
      %p276 = por %p274, %p275
      %s278 = sadd.s32 %s277, 1
      %p281 = scmp.eq.s32.totalorder %s33, 1
      %p282 = scmp.ne.s32.totalorder %s277, %s279
      %p283 = scmp.eq.s32.totalorder %s33, 0
      %p284 = por %p282, %p283
      %p285 = scmp.ne.s32.totalorder %s277, %s279
      %p286 = scmp.eq.s32.totalorder %s38, 1
      %p287 = por %p285, %p286
      %p288 = scmp.ne.s32.totalorder %s279, %s280
      %p289 = scmp.eq.s32.totalorder %s38, 0
      %p290 = por %p288, %p289
      %p291 = scmp.ne.s32.totalorder %s279, %s280
      %p292 = scmp.eq.s32.totalorder %s39, 1
      %p293 = por %p291, %p292
      %p295 = scmp.ne.s32.totalorder %s280, %s294
      %p296 = scmp.eq.s32.totalorder %s39, 0
      %p297 = por %p295, %p296
      %s299 = sadd.s32 %s298, 1
      %p302 = scmp.eq.s32.totalorder %s33, 1
      %p303 = scmp.ne.s32.totalorder %s298, %s300
      %p304 = scmp.eq.s32.totalorder %s33, 0
      %p305 = por %p303, %p304
      %p306 = scmp.ne.s32.totalorder %s298, %s300
      %p307 = scmp.eq.s32.totalorder %s38, 1
      %p308 = por %p306, %p307
      %p309 = scmp.ne.s32.totalorder %s300, %s301
      %p310 = scmp.eq.s32.totalorder %s38, 0
      %p311 = por %p309, %p310
      %p312 = scmp.ne.s32.totalorder %s300, %s301
      %p313 = scmp.eq.s32.totalorder %s39, 1
      %p314 = por %p312, %p313
      %p316 = scmp.ne.s32.totalorder %s301, %s315
      %p317 = scmp.eq.s32.totalorder %s39, 0
      %p318 = por %p316, %p317
      %s320 = sadd.s32 %s319, 1
      %p323 = scmp.eq.s32.totalorder %s33, 1
      %p324 = scmp.ne.s32.totalorder %s319, %s321
      %p325 = scmp.eq.s32.totalorder %s33, 0
      %p326 = por %p324, %p325
      %p327 = scmp.ne.s32.totalorder %s319, %s321
      %p328 = scmp.eq.s32.totalorder %s38, 1
      %p329 = por %p327, %p328
      %p330 = scmp.ne.s32.totalorder %s321, %s322
      %p331 = scmp.eq.s32.totalorder %s38, 0
      %p332 = por %p330, %p331
      %p333 = scmp.ne.s32.totalorder %s321, %s322
      %p334 = scmp.eq.s32.totalorder %s39, 1
      %p335 = por %p333, %p334
      %p337 = scmp.ne.s32.totalorder %s322, %s336
      %p338 = scmp.eq.s32.totalorder %s39, 0
      %p339 = por %p337, %p338
      %s341 = sadd.s32 %s340, 1
      %p344 = scmp.eq.s32.totalorder %s33, 1
      %p345 = scmp.ne.s32.totalorder %s340, %s342
      %p346 = scmp.eq.s32.totalorder %s33, 0
      %p347 = por %p345, %p346
      %p348 = scmp.ne.s32.totalorder %s340, %s342
      %p349 = scmp.eq.s32.totalorder %s38, 1
      %p350 = por %p348, %p349
      %p351 = scmp.ne.s32.totalorder %s342, %s343
      %p352 = scmp.eq.s32.totalorder %s38, 0
      %p353 = por %p351, %p352
      %p354 = scmp.ne.s32.totalorder %s342, %s343
      %p355 = scmp.eq.s32.totalorder %s39, 1
      %p356 = por %p354, %p355
      %p358 = scmp.ne.s32.totalorder %s343, %s357
      %p359 = scmp.eq.s32.totalorder %s39, 0
      %p360 = por %p358, %p359
      %s362 = sadd.s32 %s361, 1
      %p365 = scmp.eq.s32.totalorder %s33, 1
      %p366 = scmp.ne.s32.totalorder %s361, %s363
      %p367 = scmp.eq.s32.totalorder %s33, 0
      %p368 = por %p366, %p367
      %p369 = scmp.ne.s32.totalorder %s361, %s363
      %p370 = scmp.eq.s32.totalorder %s38, 1
      %p371 = por %p369, %p370
      %p372 = scmp.ne.s32.totalorder %s363, %s364
      %p373 = scmp.eq.s32.totalorder %s38, 0
      %p374 = por %p372, %p373
      %p375 = scmp.ne.s32.totalorder %s363, %s364
      %p376 = scmp.eq.s32.totalorder %s39, 1
      %p377 = por %p375, %p376
      %p379 = scmp.ne.s32.totalorder %s364, %s378
      %p380 = scmp.eq.s32.totalorder %s39, 0
      %p381 = por %p379, %p380
      %s383 = sadd.s32 %s382, 1
      %p386 = scmp.eq.s32.totalorder %s33, 1
      %p387 = scmp.ne.s32.totalorder %s382, %s384
      %p388 = scmp.eq.s32.totalorder %s33, 0
      %p389 = por %p387, %p388
      %p390 = scmp.ne.s32.totalorder %s382, %s384
      %p391 = scmp.eq.s32.totalorder %s38, 1
      %p392 = por %p390, %p391
      %p393 = scmp.ne.s32.totalorder %s384, %s385
      %p394 = scmp.eq.s32.totalorder %s38, 0
      %p395 = por %p393, %p394
      %p396 = scmp.ne.s32.totalorder %s384, %s385
      %p397 = scmp.eq.s32.totalorder %s39, 1
      %p398 = por %p396, %p397
      %p400 = scmp.ne.s32.totalorder %s385, %s399
      %p401 = scmp.eq.s32.totalorder %s39, 0
      %p402 = por %p400, %p401
      %s404 = sadd.s32 %s403, 1
      %p407 = scmp.eq.s32.totalorder %s33, 1
      %p408 = scmp.ne.s32.totalorder %s403, %s405
      %p409 = scmp.eq.s32.totalorder %s33, 0
      %p410 = por %p408, %p409
      %p411 = scmp.ne.s32.totalorder %s403, %s405
      %p412 = scmp.eq.s32.totalorder %s38, 1
      %p413 = por %p411, %p412
      %p414 = scmp.ne.s32.totalorder %s405, %s406
      %p415 = scmp.eq.s32.totalorder %s38, 0
      %p416 = por %p414, %p415
      %p417 = scmp.ne.s32.totalorder %s405, %s406
      %p418 = scmp.eq.s32.totalorder %s39, 1
      %p419 = por %p417, %p418
      %p421 = scmp.ne.s32.totalorder %s406, %s420
      %p422 = scmp.eq.s32.totalorder %s39, 0
      %p423 = por %p421, %p422
      %s424 = ssub.s32 %s33, %s40
      %p425 = scmp.eq.s32.totalorder %s424, 0
      %s427 = sadd.s32 %s426, 1
      %s428 = scalar_select %p425, %s426, %s427
      %p431 = pneg %p425
      %p432 = scmp.eq.s32.totalorder %s33, 1
      %p433 = por %p431, %p432
      %p434 = scmp.ne.s32.totalorder %s426, %s429
      %p435 = scmp.eq.s32.totalorder %s33, 0
      %p436 = por %p434, %p435
      %p437 = scmp.ne.s32.totalorder %s426, %s429
      %p438 = scmp.eq.s32.totalorder %s38, 1
      %p439 = por %p437, %p438
      %p440 = scmp.ne.s32.totalorder %s429, %s430
      %p441 = scmp.eq.s32.totalorder %s38, 0
      %p442 = por %p440, %p441
      %p443 = scmp.ne.s32.totalorder %s429, %s430
      %p444 = scmp.eq.s32.totalorder %s39, 1
      %p445 = por %p443, %p444
      %p447 = scmp.ne.s32.totalorder %s430, %s446
      %p448 = scmp.eq.s32.totalorder %s39, 0
      %p449 = por %p447, %p448
      %s450 = ssub.s32 %s33, %s40
      %p451 = scmp.eq.s32.totalorder %s450, 0
      %s453 = sadd.s32 %s452, 1
      %s454 = scalar_select %p451, %s452, %s453
      %p457 = pneg %p451
      %p458 = scmp.eq.s32.totalorder %s33, 1
      %p459 = por %p457, %p458
      %p460 = scmp.ne.s32.totalorder %s452, %s455
      %p461 = scmp.eq.s32.totalorder %s33, 0
      %p462 = por %p460, %p461
      %p463 = scmp.ne.s32.totalorder %s452, %s455
      %p464 = scmp.eq.s32.totalorder %s38, 1
      %p465 = por %p463, %p464
      %p466 = scmp.ne.s32.totalorder %s455, %s456
      %p467 = scmp.eq.s32.totalorder %s38, 0
      %p468 = por %p466, %p467
      %p469 = scmp.ne.s32.totalorder %s455, %s456
      %p470 = scmp.eq.s32.totalorder %s39, 1
      %p471 = por %p469, %p470
      %p473 = scmp.ne.s32.totalorder %s456, %s472
      %p474 = scmp.eq.s32.totalorder %s39, 0
      %p475 = por %p473, %p474
      %s476 = ssub.s32 %s33, %s40
      %p477 = scmp.eq.s32.totalorder %s476, 0
      %s479 = sadd.s32 %s478, 1
      %s480 = scalar_select %p477, %s478, %s479
      %p483 = pneg %p477
      %p484 = scmp.eq.s32.totalorder %s33, 1
      %p485 = por %p483, %p484
      %p486 = scmp.ne.s32.totalorder %s478, %s481
      %p487 = scmp.eq.s32.totalorder %s33, 0
      %p488 = por %p486, %p487
      %p489 = scmp.ne.s32.totalorder %s478, %s481
      %p490 = scmp.eq.s32.totalorder %s38, 1
      %p491 = por %p489, %p490
      %p492 = scmp.ne.s32.totalorder %s481, %s482
      %p493 = scmp.eq.s32.totalorder %s38, 0
      %p494 = por %p492, %p493
      %p495 = scmp.ne.s32.totalorder %s481, %s482
      %p496 = scmp.eq.s32.totalorder %s39, 1
      %p497 = por %p495, %p496
      %p499 = scmp.ne.s32.totalorder %s482, %s498
      %p500 = scmp.eq.s32.totalorder %s39, 0
      %p501 = por %p499, %p500
      %p502 = scmp.le.s32.totalorder 1, %s33
      %p503 = scmp.lt.s32.totalorder %s33, 3
      %p504 = pnand %p502, %p503
      %p505 = pneg %p504
      // Predicated region
      $region9: #{gen_odin_forward.5} parent=5 // pred_check
        _
      $region10: #{gen_odin_forward.5} parent=5 // pred_check_branch
        %507 = sbr.rel (%p504) target = $region12
      $region11: #{gen_odin_forward.5} parent=5 // pred_region
        %s508 = ssub.s32 %s33, 1
        // Predicated region
        $region13: #{gen_odin_forward.5} parent=11 // pred_check
          %p509 = pneg %p80
        $region14: #{gen_odin_forward.5} parent=11 // pred_check_branch
          %511 = sbr.rel (%p509) target = $region16
        $region15: #{gen_odin_forward.5} parent=11 // pred_region
          _
        $region16: #{gen_odin_forward.5} parent=11 // pred_fallthru
          _
        // Predicated region
        $region17: #{gen_odin_forward.5} parent=11 // pred_check
          %p512 = pneg %p101
        $region18: #{gen_odin_forward.5} parent=11 // pred_check_branch
          %514 = sbr.rel (%p512) target = $region20
        $region19: #{gen_odin_forward.5} parent=11 // pred_region
          _
        $region20: #{gen_odin_forward.5} parent=11 // pred_fallthru
          _
        // Predicated region
        $region21: #{gen_odin_forward.5} parent=11 // pred_check
          %p515 = pneg %p122
        $region22: #{gen_odin_forward.5} parent=11 // pred_check_branch
          %517 = sbr.rel (%p515) target = $region24
        $region23: #{gen_odin_forward.5} parent=11 // pred_region
          _
        $region24: #{gen_odin_forward.5} parent=11 // pred_fallthru
          _
        // Predicated region
        $region25: #{gen_odin_forward.5} parent=11 // pred_check
          %p518 = pneg %p143
        $region26: #{gen_odin_forward.5} parent=11 // pred_check_branch
          %520 = sbr.rel (%p518) target = $region28
        $region27: #{gen_odin_forward.5} parent=11 // pred_region
          _
        $region28: #{gen_odin_forward.5} parent=11 // pred_fallthru
          _
        // Predicated region
        $region29: #{gen_odin_forward.5} parent=11 // pred_check
          %p521 = pneg %p164
        $region30: #{gen_odin_forward.5} parent=11 // pred_check_branch
          %523 = sbr.rel (%p521) target = $region32
        $region31: #{gen_odin_forward.5} parent=11 // pred_region
          _
        $region32: #{gen_odin_forward.5} parent=11 // pred_fallthru
          _
        // Predicated region
        $region33: #{gen_odin_forward.5} parent=11 // pred_check
          %p524 = pneg %p185
        $region34: #{gen_odin_forward.5} parent=11 // pred_check_branch
          %526 = sbr.rel (%p524) target = $region36
        $region35: #{gen_odin_forward.5} parent=11 // pred_region
          _
        $region36: #{gen_odin_forward.5} parent=11 // pred_fallthru
          _
        // Predicated region
        $region37: #{gen_odin_forward.5} parent=11 // pred_check
          %p527 = pneg %p206
        $region38: #{gen_odin_forward.5} parent=11 // pred_check_branch
          %529 = sbr.rel (%p527) target = $region40
        $region39: #{gen_odin_forward.5} parent=11 // pred_region
          _
        $region40: #{gen_odin_forward.5} parent=11 // pred_fallthru
          _
        // Predicated region
        $region41: #{gen_odin_forward.5} parent=11 // pred_check
          %p530 = pneg %p227
        $region42: #{gen_odin_forward.5} parent=11 // pred_check_branch
          %532 = sbr.rel (%p530) target = $region44
        $region43: #{gen_odin_forward.5} parent=11 // pred_region
          _
        $region44: #{gen_odin_forward.5} parent=11 // pred_fallthru
          _
        // Predicated region
        $region45: #{gen_odin_forward.5} parent=11 // pred_check
          %p533 = pneg %p248
        $region46: #{gen_odin_forward.5} parent=11 // pred_check_branch
          %535 = sbr.rel (%p533) target = $region48
        $region47: #{gen_odin_forward.5} parent=11 // pred_region
          _
        $region48: #{gen_odin_forward.5} parent=11 // pred_fallthru
          _
        // Predicated region
        $region49: #{gen_odin_forward.5} parent=11 // pred_check
          %p536 = pneg %p269
        $region50: #{gen_odin_forward.5} parent=11 // pred_check_branch
          %538 = sbr.rel (%p536) target = $region52
        $region51: #{gen_odin_forward.5} parent=11 // pred_region
          _
        $region52: #{gen_odin_forward.5} parent=11 // pred_fallthru
          _
        // Predicated region
        $region53: #{gen_odin_forward.5} parent=11 // pred_check
          %p539 = pneg %p290
        $region54: #{gen_odin_forward.5} parent=11 // pred_check_branch
          %541 = sbr.rel (%p539) target = $region56
        $region55: #{gen_odin_forward.5} parent=11 // pred_region
          _
        $region56: #{gen_odin_forward.5} parent=11 // pred_fallthru
          _
        // Predicated region
        $region57: #{gen_odin_forward.5} parent=11 // pred_check
          %p542 = pneg %p311
        $region58: #{gen_odin_forward.5} parent=11 // pred_check_branch
          %544 = sbr.rel (%p542) target = $region60
        $region59: #{gen_odin_forward.5} parent=11 // pred_region
          _
        $region60: #{gen_odin_forward.5} parent=11 // pred_fallthru
          _
        // Predicated region
        $region61: #{gen_odin_forward.5} parent=11 // pred_check
          %p545 = pneg %p332
        $region62: #{gen_odin_forward.5} parent=11 // pred_check_branch
          %547 = sbr.rel (%p545) target = $region64
        $region63: #{gen_odin_forward.5} parent=11 // pred_region
          _
        $region64: #{gen_odin_forward.5} parent=11 // pred_fallthru
          _
        // Predicated region
        $region65: #{gen_odin_forward.5} parent=11 // pred_check
          %p548 = pneg %p353
        $region66: #{gen_odin_forward.5} parent=11 // pred_check_branch
          %550 = sbr.rel (%p548) target = $region68
        $region67: #{gen_odin_forward.5} parent=11 // pred_region
          _
        $region68: #{gen_odin_forward.5} parent=11 // pred_fallthru
          _
        // Predicated region
        $region69: #{gen_odin_forward.5} parent=11 // pred_check
          %p551 = pneg %p374
        $region70: #{gen_odin_forward.5} parent=11 // pred_check_branch
          %553 = sbr.rel (%p551) target = $region72
        $region71: #{gen_odin_forward.5} parent=11 // pred_region
          _
        $region72: #{gen_odin_forward.5} parent=11 // pred_fallthru
          _
        // Predicated region
        $region73: #{gen_odin_forward.5} parent=11 // pred_check
          %p554 = pneg %p395
        $region74: #{gen_odin_forward.5} parent=11 // pred_check_branch
          %556 = sbr.rel (%p554) target = $region76
        $region75: #{gen_odin_forward.5} parent=11 // pred_region
          _
        $region76: #{gen_odin_forward.5} parent=11 // pred_fallthru
          _
        // Predicated region
        $region77: #{gen_odin_forward.5} parent=11 // pred_check
          %p557 = pneg %p416
        $region78: #{gen_odin_forward.5} parent=11 // pred_check_branch
          %559 = sbr.rel (%p557) target = $region80
        $region79: #{gen_odin_forward.5} parent=11 // pred_region
          _
        $region80: #{gen_odin_forward.5} parent=11 // pred_fallthru
          _
      $region12: #{gen_odin_forward.5} parent=5 // pred_fallthru
        _
      %p560 = scmp.lt.s32.totalorder %s33, 2
      // Predicated region
      $region81: #{gen_odin_forward.5} parent=5 // pred_check
        %p561 = pneg %p560
      $region82: #{gen_odin_forward.5} parent=5 // pred_check_branch
        %563 = sbr.rel (%p561) target = $region84
      $region83: #{gen_odin_forward.5} parent=5 // pred_region
        // Predicated region
        $region85: #{gen_odin_forward.5} parent=83 // pred_check
          %p564 = pneg %p53
        $region86: #{gen_odin_forward.5} parent=83 // pred_check_branch
          %566 = sbr.rel (%p564) target = $region88
        $region87: #{gen_odin_forward.5} parent=83 // pred_region
          %p567 = scmp.lt.s32.totalorder %s33, 1
          %s568 = scalar_select %p567, %s33, 1
          %s569 = smul.addr %s568, 18
          %s570 = smul.addr %s569, 4
          %s571 = scalar_lea.vmem %s0, %s570
        $region88: #{gen_odin_forward.5} parent=83 // pred_fallthru
          _
      $region84: #{gen_odin_forward.5} parent=5 // pred_fallthru
        _
      %p572 = scmp.le.s32.totalorder 1, %s33
      %p573 = scmp.lt.s32.totalorder %s33, 3
      %p574 = pnand %p572, %p573
      %p575 = pneg %p574
      // Predicated region
      $region89: #{gen_odin_forward.5} parent=5 // pred_check
        _
      $region90: #{gen_odin_forward.5} parent=5 // pred_check_branch
        %577 = sbr.rel (%p574) target = $region92
      $region91: #{gen_odin_forward.5} parent=5 // pred_region
        %s578 = ssub.s32 %s33, 1
        %p579 = scmp.lt.s32.totalorder %s38, 1
        %s580 = scalar_select %p579, %s38, 1
        %s581 = smul.addr %s580, 18
        %s582 = smul.addr %s581, 4
        %s583 = scalar_lea.vmem %s0, %s582
        %p584 = pneg %p59
        %p585 = pneg %p56
        %p586 = pneg %p80
        %p587 = pneg %p77
        %p588 = pneg %p101
        %p589 = pneg %p98
        %p590 = pneg %p122
        %p591 = pneg %p119
        %p592 = pneg %p143
        %p593 = pneg %p140
        %p594 = pneg %p164
        %p595 = pneg %p161
        %p596 = pneg %p185
        %p597 = pneg %p182
        %p598 = pneg %p206
        %p599 = pneg %p203
        %p600 = pneg %p227
        %p601 = pneg %p224
        %p602 = pneg %p248
        %p603 = pneg %p245
        %p604 = pneg %p269
        %p605 = pneg %p266
        %p606 = pneg %p290
        %p607 = pneg %p287
        %p608 = pneg %p311
        %p609 = pneg %p308
        %p610 = pneg %p332
        %p611 = pneg %p329
        %p612 = pneg %p353
        %p613 = pneg %p350
        %p614 = pneg %p374
        %p615 = pneg %p371
        %p616 = pneg %p395
        %p617 = pneg %p392
        %p618 = pneg %p416
        %p619 = pneg %p413
        %p620 = pneg %p442
        %p621 = pneg %p439
        %s622 = sand.u32 %s429, 1
        %s623 = scalar_lea.sflag [#allocation3], %s622
        %s624 = sand.u32 %s429, 1
        %s625 = scalar_lea.vmem [#allocation2], %s624
        %p626 = pneg %p468
        %p627 = pneg %p465
        %s628 = sand.u32 %s455, 1
        %s629 = scalar_lea.sflag [#allocation5], %s628
        %s630 = sand.u32 %s455, 1
        %s631 = scalar_lea.vmem [#allocation4], %s630
        %p632 = pneg %p494
        %p633 = pneg %p491
        %p634 = scmp.lt.s32.totalorder %s38, 1
        %s635 = scalar_select %p634, %s38, 1
        %s636 = scalar_lea.vmem %s20, %s635
        %p637 = scmp.lt.s32.totalorder %s38, 1
        %s638 = scalar_select %p637, %s38, 1
        %s639 = smul.addr %s638, 18
        %s640 = smul.addr %s639, 4
        %s641 = scalar_lea.vmem %s0, %s640
        %p642 = scmp.lt.s32.totalorder %s38, 1
        %s643 = scalar_select %p642, %s38, 1
        %s644 = scalar_lea.vmem %s20, %s643
        %v646 = vld [vmem:[%s641] sm:$0xf]
        %v647 = vld [vmem:[%s641 + $0x4] sm:$0xf]
        %v648 = vld [vmem:[%s641 + $0x8] sm:$0xf]
        %v649 = vld [vmem:[%s641 + $0xc] sm:$0xf]
        %v650 = vld [vmem:[%s641 + $0x10] sm:$0xf]
        %v651 = vld [vmem:[%s641 + $0x14] sm:$0xf]
        %v652 = vld [vmem:[%s641 + $0x18] sm:$0xf]
        %v653 = vld [vmem:[%s641 + $0x1c] sm:$0xf]
        %v654 = vld [vmem:[%s641 + $0x20] sm:$0xf]
        %v655 = vld [vmem:[%s641 + $0x24] sm:$0xf]
        %v656 = vld [vmem:[%s641 + $0x28] sm:$0xf]
        %v657 = vld [vmem:[%s641 + $0x2c] sm:$0xf]
        %v658 = vld [vmem:[%s641 + $0x30] sm:$0xf]
        %v659 = vld [vmem:[%s641 + $0x34] sm:$0xf]
        %v660 = vld [vmem:[%s641 + $0x38] sm:$0xf]
        %v661 = vld [vmem:[%s641 + $0x3c] sm:$0xf]
        %v662 = vld [vmem:[%s641 + $0x40] sm:$0xf]
        %v663 = vld [vmem:[%s641 + $0x44] sm:$0xf]
        %v664 = vld [vmem:[%s1] sm:$0xff]
        %v665 = vld [vmem:[%s1 + $0x8] sm:$0x1]
        %v666 = vunpack.c.l.bf16 %v646
        %v667 = vunpack.c.l.bf16 %v647
        %v668 = vlaneseq
        %v669 = vshrl.u32 %v668, 7
        %v670 = vsub.s32 0, %v669
        %v671 = vrot.slane %v664, %v670
        %v672 = vmul.f32 %v666, %v671
        %v673 = vmul.f32 %v667, %v671
        %v674 = vunpack.c.l.bf16 %v648
        %v675 = vunpack.c.l.bf16 %v649
        %v676 = vlaneseq
        %v677 = vshrl.u32 %v676, 7
        %v678 = vsub.s32 1, %v677
        %v679 = vrot.slane %v664, %v678
        %v680 = vmul.f32 %v674, %v679
        %v681 = vmul.f32 %v675, %v679
        %v682 = vadd.f32 %v672, %v680
        %v683 = vadd.f32 %v673, %v681
        %v684 = vunpack.c.l.bf16 %v650
        %v685 = vunpack.c.l.bf16 %v651
        %v686 = vlaneseq
        %v687 = vshrl.u32 %v686, 7
        %v688 = vsub.s32 2, %v687
        %v689 = vrot.slane %v664, %v688
        %v690 = vmul.f32 %v684, %v689
        %v691 = vmul.f32 %v685, %v689
        %v692 = vadd.f32 %v682, %v690
        %v693 = vadd.f32 %v683, %v691
        %v694 = vunpack.c.l.bf16 %v652
        %v695 = vunpack.c.l.bf16 %v653
        %v696 = vlaneseq
        %v697 = vshrl.u32 %v696, 7
        %v698 = vsub.s32 3, %v697
        %v699 = vrot.slane %v664, %v698
        %v700 = vmul.f32 %v694, %v699
        %v701 = vmul.f32 %v695, %v699
        %v702 = vadd.f32 %v692, %v700
        %v703 = vadd.f32 %v693, %v701
        %v704 = vunpack.c.l.bf16 %v654
        %v705 = vunpack.c.l.bf16 %v655
        %v706 = vlaneseq
        %v707 = vshrl.u32 %v706, 7
        %v708 = vsub.s32 4, %v707
        %v709 = vrot.slane %v664, %v708
        %v710 = vmul.f32 %v704, %v709
        %v711 = vmul.f32 %v705, %v709
        %v712 = vadd.f32 %v702, %v710
        %v713 = vadd.f32 %v703, %v711
        %v714 = vunpack.c.l.bf16 %v656
        %v715 = vunpack.c.l.bf16 %v657
        %v716 = vlaneseq
        %v717 = vshrl.u32 %v716, 7
        %v718 = vsub.s32 5, %v717
        %v719 = vrot.slane %v664, %v718
        %v720 = vmul.f32 %v714, %v719
        %v721 = vmul.f32 %v715, %v719
        %v722 = vadd.f32 %v712, %v720
        %v723 = vadd.f32 %v713, %v721
        %v724 = vunpack.c.l.bf16 %v658
        %v725 = vunpack.c.l.bf16 %v659
        %v726 = vlaneseq
        %v727 = vshrl.u32 %v726, 7
        %v728 = vsub.s32 6, %v727
        %v729 = vrot.slane %v664, %v728
        %v730 = vmul.f32 %v724, %v729
        %v731 = vmul.f32 %v725, %v729
        %v732 = vadd.f32 %v722, %v730
        %v733 = vadd.f32 %v723, %v731
        %v734 = vunpack.c.l.bf16 %v660
        %v735 = vunpack.c.l.bf16 %v661
        %v736 = vlaneseq
        %v737 = vshrl.u32 %v736, 7
        %v738 = vsub.s32 7, %v737
        %v739 = vrot.slane %v664, %v738
        %v740 = vmul.f32 %v734, %v739
        %v741 = vmul.f32 %v735, %v739
        %v742 = vadd.f32 %v732, %v740
        %v743 = vadd.f32 %v733, %v741
        %v744 = vunpack.c.l.bf16 %v662
        %v745 = vunpack.c.l.bf16 %v663
        %v746 = vlaneseq
        %v747 = vshrl.u32 %v746, 7
        %v748 = vsub.s32 0, %v747
        %v749 = vrot.slane %v665, %v748
        %v750 = vmul.f32 %v744, %v749
        %v751 = vmul.f32 %v745, %v749
        %v752 = vadd.f32 %v742, %v750
        %v753 = vadd.f32 %v743, %v751
        %v754 = vld [vmem:[%s2] sm:$0x1]
        %v756 = vlaneseq
        %v757 = vshrl.u32 %v756, 7
        %v758 = vsub.s32 0, %v757
        %v759 = vrot.slane %v754, %v758
        %v761 = vmul.f32 %v752, %v759
        %v762 = vmul.f32 %v753, %v759
        %v763 = vld [vmem:[%s3] sm:$0x1]
        %v765 = vlaneseq
        %v766 = vshrl.u32 %v765, 7
        %v767 = vsub.s32 0, %v766
        %v768 = vrot.slane %v763, %v767
        %v770 = vadd.f32 %v761, %v768
        %v771 = vadd.f32 %v762, %v768
        %v772 = vsub.f32 0.0, %v770
        %v773 = vsub.f32 0.0, %v771
        %v774 = vmul.f32 %v772, 1.442695
        %v775 = vpow.pop %v774
        %v776 = vmul.f32 %v773, 1.442695
        %v777 = vpow.pop %v776
        %v778 = vadd.f32 %v775, 1.0
        %v779 = vadd.f32 %v777, 1.0
        %v780 = vrcp.pop %v778
        %v781 = vrcp.pop %v779
        %v782 = vmul.f32 %v770, %v780
        %v783 = vmul.f32 %v771, %v781
        %vm784 = vcmask 130048
        %v785 = vsel %vm784, %v782, 0.0
        %v786 = vsel %vm784, %v783, 0.0
        %v787 = vadd.f32 %v785, %v786
        %v788 = vrot.slane %v787, 4
        %v789 = vadd.f32 %v787, %v788
        %v790 = vrot.slane %v789, 2
        %v791 = vadd.f32 %v789, %v790
        %v792 = vrot.slane %v791, 1
        %v793 = vadd.f32 %v791, %v792
        %v794 = vrcp.pop 16.0
        %v795 = vmul.f32 %v793, %v794
        %v796 = vpack.c.bf16 %v795, %v795
        %v797 = vld [vmem:[%s4] sm:$0xf]
        %v798 = vld [vmem:[%s4 + $0x4] sm:$0xf]
        %v799 = vld [vmem:[%s5] sm:$0x1]
        %v802 = vunpack.c.l.b16 %v797
        %v803 = vunpack.c.l.b16 %v798
        %v804 = vpack.c.b16 %v803, %v802
        %v807 = vsel %vm784, %v796, 0
        %809 = vmatprep.subr.bf16.mxu0 0
        %810 = vmatpush1.bf16.msra.mxu0 %v804
        %811 = vmatprep.subr.bf16.mxu0 0
        %812 = vmatpush1.bf16.msra.mxu0 0
        %813 = vmatprep.subr.bf16.mxu0 0
        %814 = vmatpush1.bf16.msra.mxu0 0
        %815 = vmatprep.subr.bf16.mxu0 0
        %816 = vmatpush1.bf16.msra.mxu0 0
        %817 = vmatprep.subr.bf16.mxu0 0
        %818 = vmatpush1.bf16.msra.mxu0 0
        %819 = vmatprep.subr.bf16.mxu0 0
        %820 = vmatpush1.bf16.msra.mxu0 0
        %821 = vmatprep.subr.bf16.mxu0 0
        %822 = vmatpush1.bf16.msra.mxu0 0
        %823 = vmatprep.subr.bf16.mxu0 0
        %824 = vmatpush1.bf16.msra.mxu0 0
        %825 = vmatprep.subr.bf16.mxu0 0
        %826 = vmatpush1.bf16.msra.mxu0 0
        %827 = vmatprep.subr.bf16.mxu0 0
        %828 = vmatpush1.bf16.msra.mxu0 0
        %829 = vmatprep.subr.bf16.mxu0 0
        %830 = vmatpush1.bf16.msra.mxu0 0
        %831 = vmatprep.subr.bf16.mxu0 0
        %832 = vmatpush1.bf16.msra.mxu0 0
        %833 = vmatprep.subr.bf16.mxu0 0
        %834 = vmatpush1.bf16.msra.mxu0 0
        %835 = vmatprep.subr.bf16.mxu0 0
        %836 = vmatpush1.bf16.msra.mxu0 0
        %837 = vmatprep.subr.bf16.mxu0 0
        %838 = vmatpush1.bf16.msra.mxu0 0
        %839 = vmatprep.subr.bf16.mxu0 0
        %840 = vmatpush1.bf16.msra.mxu0 0
        %841 = vmatprep.mubr.bf16.mxu0 0
        %842 = vmatmul.mubr.bf16.gmra.mrb[0].mxu0 %v807
        %v843 = vpop.f32.mrb[0].mxu0
        %v844 = vadd.f32 %v799, %v843
        %v845 = vpop.f32.mrb[0].mxu0
        %v846 = vpop.f32.mrb[0].mxu0
        %v847 = vpop.f32.mrb[0].mxu0
        %848 = vdwg.mxu0
        %v849 = vsub.f32 0.0, %v844
        %v850 = vmul.f32 %v849, 1.442695
        %v851 = vpow.pop %v850
        %v852 = vadd.f32 %v851, 1.0
        %v853 = vrcp.pop %v852
        %v854 = vmul.f32 %v844, %v853
        %v855 = vpack.c.bf16 %v854, %v854
        %v856 = vld [vmem:[%s6] sm:$0x1]
        %v857 = vld [vmem:[%s7] sm:$0x1]
        %vm858 = vcmask 15360
        %v860 = vsel %vm858, %v855, 0
        %vm862 = vcmask 1040384
        %v864 = vsel %vm862, %v856, 0
        %866 = vmatprep.subr.bf16.mxu0 0
        %867 = vmatpush1.bf16.msra.mxu0 %v864
        %868 = vmatprep.subr.bf16.mxu0 0
        %869 = vmatpush1.bf16.msra.mxu0 0
        %870 = vmatprep.subr.bf16.mxu0 0
        %871 = vmatpush1.bf16.msra.mxu0 0
        %872 = vmatprep.subr.bf16.mxu0 0
        %873 = vmatpush1.bf16.msra.mxu0 0
        %874 = vmatprep.subr.bf16.mxu0 0
        %875 = vmatpush1.bf16.msra.mxu0 0
        %876 = vmatprep.subr.bf16.mxu0 0
        %877 = vmatpush1.bf16.msra.mxu0 0
        %878 = vmatprep.subr.bf16.mxu0 0
        %879 = vmatpush1.bf16.msra.mxu0 0
        %880 = vmatprep.subr.bf16.mxu0 0
        %881 = vmatpush1.bf16.msra.mxu0 0
        %882 = vmatprep.subr.bf16.mxu0 0
        %883 = vmatpush1.bf16.msra.mxu0 0
        %884 = vmatprep.subr.bf16.mxu0 0
        %885 = vmatpush1.bf16.msra.mxu0 0
        %886 = vmatprep.subr.bf16.mxu0 0
        %887 = vmatpush1.bf16.msra.mxu0 0
        %888 = vmatprep.subr.bf16.mxu0 0
        %889 = vmatpush1.bf16.msra.mxu0 0
        %890 = vmatprep.subr.bf16.mxu0 0
        %891 = vmatpush1.bf16.msra.mxu0 0
        %892 = vmatprep.subr.bf16.mxu0 0
        %893 = vmatpush1.bf16.msra.mxu0 0
        %894 = vmatprep.subr.bf16.mxu0 0
        %895 = vmatpush1.bf16.msra.mxu0 0
        %896 = vmatprep.subr.bf16.mxu0 0
        %897 = vmatpush1.bf16.msra.mxu0 0
        %898 = vmatprep.mubr.bf16.mxu0 0
        %899 = vmatmul.mubr.bf16.gmra.mrb[0].mxu0 %v860
        %v900 = vpop.f32.mrb[0].mxu0
        %v901 = vadd.f32 %v857, %v900
        %v902 = vpop.f32.mrb[0].mxu0
        %v903 = vpop.f32.mrb[0].mxu0
        %v904 = vpop.f32.mrb[0].mxu0
        %905 = vdwg.mxu0
        %v906 = vsub.f32 0.0, %v901
        %v907 = vmul.f32 %v906, 1.442695
        %v908 = vpow.pop %v907
        %v909 = vadd.f32 %v908, 1.0
        %v910 = vrcp.pop %v909
        %v911 = vlaneseq
        %v912 = vshrl.u32 %v911, 7
        %v913 = vsub.s32 0, %v912
        %v914 = vrot.slane %v910, %v913
        %v915 = vmul.f32 %v782, %v914
        %v916 = vmul.f32 %v783, %v914
        %v917 = vpack.c.bf16 %v916, %v915
        %v918 = vld [vmem:[%s8] sm:$0xf]
        %v919 = vld [vmem:[%s8 + $0x4] sm:$0xf]
        %v922 = vunpack.c.l.b16 %v918
        %v923 = vunpack.c.l.b16 %v919
        %v924 = vpack.c.b16 %v923, %v922
        %v927 = vsel %vm784, %v917, 0
        %929 = vmatprep.subr.bf16.mxu0 0
        %930 = vmatpush1.bf16.msra.mxu0 %v924
        %931 = vmatprep.subr.bf16.mxu0 0
        %932 = vmatpush1.bf16.msra.mxu0 0
        %933 = vmatprep.subr.bf16.mxu0 0
        %934 = vmatpush1.bf16.msra.mxu0 0
        %935 = vmatprep.subr.bf16.mxu0 0
        %936 = vmatpush1.bf16.msra.mxu0 0
        %937 = vmatprep.subr.bf16.mxu0 0
        %938 = vmatpush1.bf16.msra.mxu0 0
        %939 = vmatprep.subr.bf16.mxu0 0
        %940 = vmatpush1.bf16.msra.mxu0 0
        %941 = vmatprep.subr.bf16.mxu0 0
        %942 = vmatpush1.bf16.msra.mxu0 0
        %943 = vmatprep.subr.bf16.mxu0 0
        %944 = vmatpush1.bf16.msra.mxu0 0
        %945 = vmatprep.subr.bf16.mxu0 0
        %946 = vmatpush1.bf16.msra.mxu0 0
        %947 = vmatprep.subr.bf16.mxu0 0
        %948 = vmatpush1.bf16.msra.mxu0 0
        %949 = vmatprep.subr.bf16.mxu0 0
        %950 = vmatpush1.bf16.msra.mxu0 0
        %951 = vmatprep.subr.bf16.mxu0 0
        %952 = vmatpush1.bf16.msra.mxu0 0
        %953 = vmatprep.subr.bf16.mxu0 0
        %954 = vmatpush1.bf16.msra.mxu0 0
        %955 = vmatprep.subr.bf16.mxu0 0
        %956 = vmatpush1.bf16.msra.mxu0 0
        %957 = vmatprep.subr.bf16.mxu0 0
        %958 = vmatpush1.bf16.msra.mxu0 0
        %959 = vmatprep.subr.bf16.mxu0 0
        %960 = vmatpush1.bf16.msra.mxu0 0
        %961 = vmatprep.mubr.bf16.mxu0 0
        %962 = vmatmul.mubr.bf16.gmra.mrb[0].mxu0 %v927
        %v963 = vpop.f32.mrb[0].mxu0
        %v964 = vadd.f32 0.0, %v963
        %v965 = vpop.f32.mrb[0].mxu0
        %v966 = vpop.f32.mrb[0].mxu0
        %v967 = vadd.f32 0.0, %v966
        %v968 = vpop.f32.mrb[0].mxu0
        %969 = vdwg.mxu0
        %v970 = vld [vmem:[%s9] sm:$0x1]
        %v972 = vlaneseq
        %v973 = vshrl.u32 %v972, 7
        %v974 = vsub.s32 0, %v973
        %v975 = vrot.slane %v970, %v974
        %v977 = vmul.f32 %v964, %v975
        %v978 = vmul.f32 %v967, %v975
        %v979 = vld [vmem:[%s10] sm:$0x1]
        %v981 = vlaneseq
        %v982 = vshrl.u32 %v981, 7
        %v983 = vsub.s32 0, %v982
        %v984 = vrot.slane %v979, %v983
        %v986 = vadd.f32 %v977, %v984
        %v987 = vadd.f32 %v978, %v984
        %v988 = vpack.c.bf16 %v987, %v986
        %v989 = vld [vmem:[%s11] sm:$0xf]
        %v990 = vld [vmem:[%s11 + $0x4] sm:$0xf]
        %v993 = vunpack.c.l.b16 %v989
        %v994 = vunpack.c.l.b16 %v990
        %v995 = vpack.c.b16 %v994, %v993
        %v998 = vsel %vm784, %v988, 0
        %1000 = vmatprep.subr.bf16.mxu0 0
        %1001 = vmatpush1.bf16.msra.mxu0 %v995
        %1002 = vmatprep.subr.bf16.mxu0 0
        %1003 = vmatpush1.bf16.msra.mxu0 0
        %1004 = vmatprep.subr.bf16.mxu0 0
        %1005 = vmatpush1.bf16.msra.mxu0 0
        %1006 = vmatprep.subr.bf16.mxu0 0
        %1007 = vmatpush1.bf16.msra.mxu0 0
        %1008 = vmatprep.subr.bf16.mxu0 0
        %1009 = vmatpush1.bf16.msra.mxu0 0
        %1010 = vmatprep.subr.bf16.mxu0 0
        %1011 = vmatpush1.bf16.msra.mxu0 0
        %1012 = vmatprep.subr.bf16.mxu0 0
        %1013 = vmatpush1.bf16.msra.mxu0 0
        %1014 = vmatprep.subr.bf16.mxu0 0
        %1015 = vmatpush1.bf16.msra.mxu0 0
        %1016 = vmatprep.subr.bf16.mxu0 0
        %1017 = vmatpush1.bf16.msra.mxu0 0
        %1018 = vmatprep.subr.bf16.mxu0 0
        %1019 = vmatpush1.bf16.msra.mxu0 0
        %1020 = vmatprep.subr.bf16.mxu0 0
        %1021 = vmatpush1.bf16.msra.mxu0 0
        %1022 = vmatprep.subr.bf16.mxu0 0
        %1023 = vmatpush1.bf16.msra.mxu0 0
        %1024 = vmatprep.subr.bf16.mxu0 0
        %1025 = vmatpush1.bf16.msra.mxu0 0
        %1026 = vmatprep.subr.bf16.mxu0 0
        %1027 = vmatpush1.bf16.msra.mxu0 0
        %1028 = vmatprep.subr.bf16.mxu0 0
        %1029 = vmatpush1.bf16.msra.mxu0 0
        %1030 = vmatprep.subr.bf16.mxu0 0
        %1031 = vmatpush1.bf16.msra.mxu0 0
        %1032 = vmatprep.mubr.bf16.mxu0 0
        %1033 = vmatmul.mubr.bf16.gmra.mrb[0].mxu0 %v998
        %v1034 = vpop.f32.mrb[0].mxu0
        %v1035 = vadd.f32 0.0, %v1034
        %v1036 = vpop.f32.mrb[0].mxu0
        %v1037 = vpop.f32.mrb[0].mxu0
        %v1038 = vadd.f32 0.0, %v1037
        %v1039 = vpop.f32.mrb[0].mxu0
        %1040 = vdwg.mxu0
        %v1041 = vld [vmem:[%s12] sm:$0x1]
        %v1043 = vlaneseq
        %v1044 = vshrl.u32 %v1043, 7
        %v1045 = vsub.s32 0, %v1044
        %v1046 = vrot.slane %v1041, %v1045
        %v1048 = vmul.f32 %v1035, %v1046
        %v1049 = vmul.f32 %v1038, %v1046
        %v1050 = vld [vmem:[%s13] sm:$0x1]
        %v1052 = vlaneseq
        %v1053 = vshrl.u32 %v1052, 7
        %v1054 = vsub.s32 0, %v1053
        %v1055 = vrot.slane %v1050, %v1054
        %v1057 = vadd.f32 %v1048, %v1055
        %v1058 = vadd.f32 %v1049, %v1055
        %v1059 = vsub.f32 0.0, %v1057
        %v1060 = vsub.f32 0.0, %v1058
        %v1061 = vmul.f32 %v1059, 1.442695
        %v1062 = vpow.pop %v1061
        %v1063 = vmul.f32 %v1060, 1.442695
        %v1064 = vpow.pop %v1063
        %v1065 = vadd.f32 %v1062, 1.0
        %v1066 = vadd.f32 %v1064, 1.0
        %v1067 = vrcp.pop %v1065
        %v1068 = vrcp.pop %v1066
        %v1069 = vmul.f32 %v1057, %v1067
        %v1070 = vmul.f32 %v1058, %v1068
        %vm1071 = vcmask 261120
        %v1072 = vsel %vm1071, %v1069, 0.0
        %v1073 = vsel %vm1071, %v1070, 0.0
        %v1074 = vadd.f32 %v1072, %v1073
        %v1075 = vrot.slane %v1074, 4
        %v1076 = vadd.f32 %v1074, %v1075
        %v1077 = vrot.slane %v1076, 2
        %v1078 = vadd.f32 %v1076, %v1077
        %v1079 = vrot.slane %v1078, 1
        %v1080 = vadd.f32 %v1078, %v1079
        %v1081 = vmul.f32 %v1080, %v794
        %v1082 = vpack.c.bf16 %v1081, %v1081
        %v1083 = vld [vmem:[%s14] sm:$0xf]
        %v1084 = vld [vmem:[%s14 + $0x4] sm:$0xf]
        %v1085 = vld [vmem:[%s14 + $0x8] sm:$0xf]
        %v1086 = vld [vmem:[%s14 + $0xc] sm:$0xf]
        %v1087 = vld [vmem:[%s15] sm:$0x1]
        %v1092 = vunpack.c.l.b16 %v1083
        %v1093 = vunpack.c.l.b16 %v1084
        %v1094 = vunpack.c.l.b16 %v1085
        %v1095 = vunpack.c.l.b16 %v1086
        %v1096 = vpack.c.b16 %v1093, %v1092
        %v1097 = vpack.c.b16 %v1095, %v1094
        %v1101 = vsel %vm1071, %v1082, 0
        %1103 = vmatprep.subr.bf16.mxu0 0
        %1104 = vmatpush1.bf16.msra.mxu0 %v1096
        %1105 = vmatprep.subr.bf16.mxu0 0
        %1106 = vmatpush1.bf16.msra.mxu0 %v1097
        %1107 = vmatprep.subr.bf16.mxu0 0
        %1108 = vmatpush1.bf16.msra.mxu0 0
        %1109 = vmatprep.subr.bf16.mxu0 0
        %1110 = vmatpush1.bf16.msra.mxu0 0
        %1111 = vmatprep.subr.bf16.mxu0 0
        %1112 = vmatpush1.bf16.msra.mxu0 0
        %1113 = vmatprep.subr.bf16.mxu0 0
        %1114 = vmatpush1.bf16.msra.mxu0 0
        %1115 = vmatprep.subr.bf16.mxu0 0
        %1116 = vmatpush1.bf16.msra.mxu0 0
        %1117 = vmatprep.subr.bf16.mxu0 0
        %1118 = vmatpush1.bf16.msra.mxu0 0
        %1119 = vmatprep.subr.bf16.mxu0 0
        %1120 = vmatpush1.bf16.msra.mxu0 0
        %1121 = vmatprep.subr.bf16.mxu0 0
        %1122 = vmatpush1.bf16.msra.mxu0 0
        %1123 = vmatprep.subr.bf16.mxu0 0
        %1124 = vmatpush1.bf16.msra.mxu0 0
        %1125 = vmatprep.subr.bf16.mxu0 0
        %1126 = vmatpush1.bf16.msra.mxu0 0
        %1127 = vmatprep.subr.bf16.mxu0 0
        %1128 = vmatpush1.bf16.msra.mxu0 0
        %1129 = vmatprep.subr.bf16.mxu0 0
        %1130 = vmatpush1.bf16.msra.mxu0 0
        %1131 = vmatprep.subr.bf16.mxu0 0
        %1132 = vmatpush1.bf16.msra.mxu0 0
        %1133 = vmatprep.subr.bf16.mxu0 0
        %1134 = vmatpush1.bf16.msra.mxu0 0
        %1135 = vmatprep.mubr.bf16.mxu0 0
        %1136 = vmatmul.mubr.bf16.gmra.mrb[0].mxu0 %v1101
        %v1137 = vpop.f32.mrb[0].mxu0
        %v1138 = vadd.f32 %v1087, %v1137
        %v1139 = vpop.f32.mrb[0].mxu0
        %v1140 = vpop.f32.mrb[0].mxu0
        %v1141 = vpop.f32.mrb[0].mxu0
        %1142 = vdwg.mxu0
        %v1143 = vld [vmem:[%s16] sm:$0x1]
        %v1144 = vmul.f32 %v1138, %v1143
        %v1145 = vld [vmem:[%s17] sm:$0x1]
        %v1146 = vadd.f32 %v1144, %v1145
        %v1147 = vsub.f32 0.0, %v1146
        %v1148 = vmul.f32 %v1147, 1.442695
        %v1149 = vpow.pop %v1148
        %v1150 = vadd.f32 %v1149, 1.0
        %1152 = vset.pattern.permute.xlu0 10
        %1153 = vperm.xlu0 %1152, %v1150
        %v1154 = vpop.permute.xlu0 %1153
        %v1156 = vmul.f32 %v1146, %v1154
        %vm1157 = vcmask 73728
        %1158 = vst.msk [vmem:[%s625] sm:$0x1] %vm1157, %v1156
        %1159 = vst.msk [vmem:[%s631] sm:$0x1] %vm1157, %v1146
        %v1160 = vrcp.pop %v1150
        %1162 = vrot.lane.b32.xlu0 %v1160, 118
        %v1163 = vpop.permute.xlu0 %1162
        %vm1165 = vcmask 0
        %1166 = vst.msk [vmem:[%s644] sm:$0x1] %vm1165, %v1163
        %s1167 = sand.u32 %s429, 1
        %s1168 = scalar_lea.sflag [#allocation3], %s1167
        %s1169 = sand.u32 %s429, 1
        %s1170 = scalar_lea.vmem [#allocation2], %s1169
        %s1171 = sand.u32 %s455, 1
        %s1172 = scalar_lea.sflag [#allocation5], %s1171
        %s1173 = sand.u32 %s455, 1
        %s1174 = scalar_lea.vmem [#allocation4], %s1173
        %p1175 = scmp.lt.s32.totalorder %s38, 1
        %s1176 = scalar_select %p1175, %s38, 1
        %s1177 = scalar_lea.vmem %s20, %s1176
        // Predicated region
        $region93: #{gen_odin_forward.5} parent=91 // pred_check
          %p1178 = pneg %p439
        $region94: #{gen_odin_forward.5} parent=91 // pred_check_branch
          %1180 = sbr.rel (%p1178) target = $region96
        $region95: #{gen_odin_forward.5} parent=91 // pred_region
          %s1182 = ssub.s32 16, 16
          %1183 = vsyncadd %s1168, %s1182
          %s1184 = smul.addr %s38, 16
          %s1185 = scalar_lea.hbm %s18, %s1184
          %s1187 = sshll.u32 %s1170, 4
          %s1188 = int_to_ptr.vmem [resolvable:$true] %s1187
          %1190 = dma.vmem_to_hbm [thread:$0]  %s1188, 16, %s1185, %s1168
        $region96: #{gen_odin_forward.5} parent=91 // pred_fallthru
          _
        // Predicated region
        $region97: #{gen_odin_forward.5} parent=91 // pred_check
          %p1191 = pneg %p465
        $region98: #{gen_odin_forward.5} parent=91 // pred_check_branch
          %1193 = sbr.rel (%p1191) target = $region100
        $region99: #{gen_odin_forward.5} parent=91 // pred_region
          %s1195 = ssub.s32 16, 16
          %1196 = vsyncadd %s1172, %s1195
          %s1197 = smul.addr %s38, 16
          %s1198 = scalar_lea.hbm %s19, %s1197
          %s1200 = sshll.u32 %s1174, 4
          %s1201 = int_to_ptr.vmem [resolvable:$true] %s1200
          %1203 = dma.vmem_to_hbm [thread:$0]  %s1201, 16, %s1198, %s1172
        $region100: #{gen_odin_forward.5} parent=91 // pred_fallthru
          _
        // Predicated region
        $region101: #{gen_odin_forward.5} parent=91 // pred_check
          %p1204 = pneg %p491
        $region102: #{gen_odin_forward.5} parent=91 // pred_check_branch
          %1206 = sbr.rel (%p1204) target = $region104
        $region103: #{gen_odin_forward.5} parent=91 // pred_region
          _
        $region104: #{gen_odin_forward.5} parent=91 // pred_fallthru
          _
      $region92: #{gen_odin_forward.5} parent=5 // pred_fallthru
        _
      %p1207 = scmp.le.s32.totalorder 2, %s33
      // Predicated region
      $region105: #{gen_odin_forward.5} parent=5 // pred_check
        %p1208 = pneg %p1207
      $region106: #{gen_odin_forward.5} parent=5 // pred_check_branch
        %1210 = sbr.rel (%p1208) target = $region108
      $region107: #{gen_odin_forward.5} parent=5 // pred_region
        %s1211 = ssub.s32 %s33, 2
        // Predicated region
        $region109: #{gen_odin_forward.5} parent=107 // pred_check
          %p1212 = pneg %p445
        $region110: #{gen_odin_forward.5} parent=107 // pred_check_branch
          %1214 = sbr.rel (%p1212) target = $region112
        $region111: #{gen_odin_forward.5} parent=107 // pred_region
          %s1215 = sand.u32 %s430, 1
          %s1216 = scalar_lea.sflag [#allocation3], %s1215
          %s1217 = sand.u32 %s430, 1
          %s1218 = scalar_lea.vmem [#allocation2], %s1217
          %1219 = dma.done %s1216, 16
        $region112: #{gen_odin_forward.5} parent=107 // pred_fallthru
          _
        // Predicated region
        $region113: #{gen_odin_forward.5} parent=107 // pred_check
          %p1220 = pneg %p471
        $region114: #{gen_odin_forward.5} parent=107 // pred_check_branch
          %1222 = sbr.rel (%p1220) target = $region116
        $region115: #{gen_odin_forward.5} parent=107 // pred_region
          %s1223 = sand.u32 %s456, 1
          %s1224 = scalar_lea.sflag [#allocation5], %s1223
          %s1225 = sand.u32 %s456, 1
          %s1226 = scalar_lea.vmem [#allocation4], %s1225
          %1227 = dma.done %s1224, 16
        $region116: #{gen_odin_forward.5} parent=107 // pred_fallthru
          _
        // Predicated region
        $region117: #{gen_odin_forward.5} parent=107 // pred_check
          %p1228 = pneg %p497
        $region118: #{gen_odin_forward.5} parent=107 // pred_check_branch
          %1230 = sbr.rel (%p1228) target = $region120
        $region119: #{gen_odin_forward.5} parent=107 // pred_region
          %p1231 = scmp.lt.s32.totalorder %s39, 1
          %s1232 = scalar_select %p1231, %s39, 1
          %s1233 = scalar_lea.vmem %s20, %s1232
        $region120: #{gen_odin_forward.5} parent=107 // pred_fallthru
          _
      $region108: #{gen_odin_forward.5} parent=5 // pred_fallthru
        _
    $region6: #{gen_odin_forward.5} parent=1 // loop_footer
      %s37 = sadd.s32 1, %s33
    $region7: #{gen_odin_forward.5} parent=1 // loop_footer_branch
      %32 = sbr.rel target = $region3
    $region8: #{gen_odin_forward.5} parent=1 // loop_exit
      _
    %1234 = vsyncpa [#allocation3], 1
    %s1235 = scalar_lea.sflag [#allocation3], 1
    %1236 = vsyncpa %s1235, 1
    %1237 = vsyncpa [#allocation5], 1
    %s1238 = scalar_lea.sflag [#allocation5], 1
    %1239 = vsyncpa %s1238, 1

</llo_original>
